<compile_context>
chip_gen: v7x
topology: tpu7x:2x2x1
jax: 0.10.0
libtpu: 0.0.40
codegen_flags: <defaults>
</compile_context>

<pallas_src>
import jax
import jax.numpy as jnp
from jax.experimental import pallas as pl
from jax.experimental.pallas import tpu as pltpu

LEAKY_SLOPE = 0.2
LATENT_DIM = 128
FEAT_DIM = 128          # 32 channels * 2 * 2 spatial
IMG = 16                # input image is [B, 1, 16, 16]


# ----------------------------------------------------------------------------
# The single fused Pallas kernel (one batch tile per grid step)
# ----------------------------------------------------------------------------
def _teacher_kernel(
    x_ref, eps_ref,
    e1w, e1b, e2w, e2b, e3w, e3b, mlw, mlb,
    dfw, dfb,
    r1w, r1b, r2w, r2b, r3w, r3b,
    c1w, c1b, c2w, c2b, c3w, c3b,
    t1w, t1b, t2w, t2b,
    feat_o, mu_o, lv_o, z_o, rimg_o, cimg_o, ctr_o,
):
    def lin(x, w_ref, b_ref):
        # bf16 operands on the MXU, f32 accumulation, f32 bias.
        return jnp.dot(x.astype(jnp.bfloat16), w_ref[...],
                       preferred_element_type=jnp.float32) + b_ref[...]

    def lrelu(v):
        return jnp.maximum(v, LEAKY_SLOPE * v)

    def sigm(v):
        # EUP exp + approx reciprocal (free slot next to the matmuls).
        return pl.reciprocal(1.0 + jnp.exp(-v), approx=True)

    # ---------------- ImageEncoder (3 stride-2 convs as dense matmuls) ----------------
    x = x_ref[...]                                   # [TB, 256]  (16x16x1, NHWC flat)
    h = lrelu(lin(x, e1w, e1b))                      # [TB, 512]  (8x8x8)
    h = lrelu(lin(h, e2w, e2b))                      # [TB, 256]  (4x4x16)
    feat = lrelu(lin(h, e3w, e3b))                   # [TB, 128]  (2x2x32)
    feat_o[...] = feat

    # fused mu || logvar projection, then reparameterization in-kernel
    mulv = lin(feat, mlw, mlb)                       # [TB, 256]
    mu = mulv[:, :LATENT_DIM]                        # 128-lane aligned slices
    logvar = mulv[:, LATENT_DIM:]
    mu_o[...] = mu
    lv_o[...] = logvar
    z = mu + jnp.exp(0.5 * logvar) * eps_ref[...]
    z_o[...] = z

    # ---------------- two ImageDecoders (shared-input fc fused) ----------------
    dfeat = lrelu(lin(z, dfw, dfb))                  # [TB, 256] = rde_feat || cde_feat
    rz = dfeat[:, :FEAT_DIM]
    cz = dfeat[:, FEAT_DIM:]

    hr = lrelu(lin(rz, r1w, r1b))                    # [TB, 256]  (4x4x16)
    hr = lrelu(lin(hr, r2w, r2b))                    # [TB, 512]  (8x8x8)
    rimg_o[...] = sigm(lin(hr, r3w, r3b))            # [TB, 256]  (16x16x1)

    hc = lrelu(lin(cz, c1w, c1b))
    hc = lrelu(lin(hc, c2w, c2b))
    cimg_o[...] = sigm(lin(hc, c3w, c3b))            # [TB, 256]

    # ---------------- CenterDecoder (128-lane padded slabs) ----------------
    hk = lrelu(lin(feat, t1w, t1b))                  # [TB, 128] (only first 64 real)
    ctr_o[...] = sigm(lin(hk, t2w, t2b))             # [TB, 128] (only first 3 real)


# ----------------------------------------------------------------------------
# Init-time weight packing: convs (+folded nearest-2x upsample) -> dense matrices
# ----------------------------------------------------------------------------
def _winit(key, shape, scale=0.05):
    return scale * jax.random.normal(key, shape, dtype=jnp.float32)


def _conv_dense(w_oihw, h, w, stride, pad=1, upsample=False):
    """Exact dense matrix of (optional nearest-2x upsample) + 3x3 conv, NHWC flat I/O."""
    oc, ic, kh, kw = w_oihw.shape
    w_hwio = jnp.transpose(w_oihw, (2, 3, 1, 0))
    d_in = h * w * ic
    basis = jnp.eye(d_in, dtype=jnp.float32).reshape(d_in, h, w, ic)
    if upsample:
        basis = jnp.repeat(jnp.repeat(basis, 2, axis=1), 2, axis=2)
    y = jax.lax.conv_general_dilated(
        basis, w_hwio, window_strides=(stride, stride),
        padding=[(pad, pad), (pad, pad)],
        dimension_numbers=("NHWC", "HWIO", "NHWC"))
    oh, ow = y.shape[1], y.shape[2]
    return y.reshape(d_in, oh * ow * oc), oh, ow


def _conv_bias_flat(b, oh, ow):
    return jnp.tile(b, oh * ow).reshape(1, -1).astype(jnp.float32)


_PARAM_ORDER = (
    "e1_w", "e1_b", "e2_w", "e2_b", "e3_w", "e3_b", "ml_w", "ml_b",
    "dfc_w", "dfc_b",
    "r1_w", "r1_b", "r2_w", "r2_b", "r3_w", "r3_b",
    "c1_w", "c1_b", "c2_w", "c2_b", "c3_w", "c3_b",
    "t1_w", "t1_b", "t2_w", "t2_b",
)


def init_teacher_params(key):
    ks = iter(jax.random.split(key, 32))
    p = {}

    # --- ImageEncoder: 1->8->16->32 stride-2 3x3 convs ---
    e1 = _winit(next(ks), (8, 1, 3, 3))
    e2 = _winit(next(ks), (16, 8, 3, 3))
    e3 = _winit(next(ks), (32, 16, 3, 3))
    p["e1_w"], oh, ow = _conv_dense(e1, 16, 16, stride=2)          # [256, 512]
    p["e1_b"] = _conv_bias_flat(jnp.zeros((8,), jnp.float32), oh, ow)
    p["e2_w"], oh, ow = _conv_dense(e2, 8, 8, stride=2)            # [512, 256]
    p["e2_b"] = _conv_bias_flat(jnp.zeros((16,), jnp.float32), oh, ow)
    p["e3_w"], oh, ow = _conv_dense(e3, 4, 4, stride=2)            # [256, 128]
    p["e3_b"] = _conv_bias_flat(jnp.zeros((32,), jnp.float32), oh, ow)

    # --- fused mu || logvar heads: [128, 256] ---
    p["ml_w"] = jnp.concatenate(
        [_winit(next(ks), (FEAT_DIM, LATENT_DIM)),
         _winit(next(ks), (FEAT_DIM, LATENT_DIM))], axis=1)
    p["ml_b"] = jnp.zeros((1, 2 * LATENT_DIM), jnp.float32)

    # --- two ImageDecoders: shared-input fc fused, conv stacks as dense matrices ---
    p["dfc_w"] = jnp.concatenate(
        [_winit(next(ks), (LATENT_DIM, FEAT_DIM)),
         _winit(next(ks), (LATENT_DIM, FEAT_DIM))], axis=1)        # [128, 256]
    p["dfc_b"] = jnp.zeros((1, 2 * FEAT_DIM), jnp.float32)
    for name in ("r", "c"):
        d1 = _winit(next(ks), (16, 32, 3, 3))
        d2 = _winit(next(ks), (8, 16, 3, 3))
        d3 = _winit(next(ks), (1, 8, 3, 3))
        p[f"{name}1_w"], oh, ow = _conv_dense(d1, 2, 2, stride=1, upsample=True)   # [128, 256]
        p[f"{name}1_b"] = _conv_bias_flat(jnp.zeros((16,), jnp.float32), oh, ow)
        p[f"{name}2_w"], oh, ow = _conv_dense(d2, 4, 4, stride=1, upsample=True)   # [256, 512]
        p[f"{name}2_b"] = _conv_bias_flat(jnp.zeros((8,), jnp.float32), oh, ow)
        p[f"{name}3_w"], oh, ow = _conv_dense(d3, 8, 8, stride=1, upsample=True)   # [512, 256]
        p[f"{name}3_b"] = _conv_bias_flat(jnp.zeros((1,), jnp.float32), oh, ow)

    # --- CenterDecoder: 128 -> 64 -> 3, padded to 128-lane slabs (zero pad weights) ---
    w1 = _winit(next(ks), (FEAT_DIM, 64))
    w2 = _winit(next(ks), (64, 3))
    p["t1_w"] = jnp.pad(w1, ((0, 0), (0, 128 - 64)))
    p["t1_b"] = jnp.zeros((1, 128), jnp.float32)
    p["t2_w"] = jnp.pad(w2, ((0, 128 - 64), (0, 128 - 3)))
    p["t2_b"] = jnp.zeros((1, 128), jnp.float32)

    # bf16 weight storage (halves HBM weight DMA); biases stay f32 for exact adds.
    for k in list(p.keys()):
        if k.endswith("_w"):
            p[k] = p[k].astype(jnp.bfloat16)
    return p


# ----------------------------------------------------------------------------
# Forward wrapper: one pallas_call, batch grid axis, weights pinned to block (0,0)
# ----------------------------------------------------------------------------
def teacher_forward(params, rimg, eps, *, batch_tile=8):
    B = rimg.shape[0]
    n_tiles = max(1, -(-B // batch_tile))
    B_pad = n_tiles * batch_tile

    x_flat = rimg.reshape(B, IMG * IMG)              # C=1 -> NHWC flat == NCHW flat
    if B_pad != B:
        x_flat = jnp.pad(x_flat, ((0, B_pad - B), (0, 0)))
        eps_p = jnp.pad(eps, ((0, B_pad - B), (0, 0)))
    else:
        eps_p = eps

    args = [x_flat, eps_p] + [params[k] for k in _PARAM_ORDER]

    def act_spec(cols):
        # batch-tiled activation / output block
        return pl.BlockSpec((batch_tile, cols), lambda b: (b, 0))

    def w_spec(arr):
        # full weight block, same block for every batch tile (stays VMEM-resident)
        return pl.BlockSpec(arr.shape, lambda b: (0, 0))

    in_specs = ([act_spec(IMG * IMG), act_spec(LATENT_DIM)]
                + [w_spec(params[k]) for k in _PARAM_ORDER])

    out_shape = (
        jax.ShapeDtypeStruct((B_pad, FEAT_DIM), jnp.float32),     # feature
        jax.ShapeDtypeStruct((B_pad, LATENT_DIM), jnp.float32),   # mu
        jax.ShapeDtypeStruct((B_pad, LATENT_DIM), jnp.float32),   # logvar
        jax.ShapeDtypeStruct((B_pad, LATENT_DIM), jnp.float32),   # z
        jax.ShapeDtypeStruct((B_pad, IMG * IMG), jnp.float32),    # rimage (flat)
        jax.ShapeDtypeStruct((B_pad, IMG * IMG), jnp.float32),    # cimage (flat)
        jax.ShapeDtypeStruct((B_pad, 128), jnp.float32),          # center/depth slab
    )
    out_specs = (
        act_spec(FEAT_DIM), act_spec(LATENT_DIM), act_spec(LATENT_DIM),
        act_spec(LATENT_DIM), act_spec(IMG * IMG), act_spec(IMG * IMG),
        act_spec(128),
    )

    feat, mu, logvar, z, rflat, cflat, ctr = pl.pallas_call(
        _teacher_kernel,
        out_shape=out_shape,
        grid=(n_tiles,),
        in_specs=in_specs,
        out_specs=out_specs,
        compiler_params=pltpu.CompilerParams(
            dimension_semantics=("parallel",),        # shard batch tiles across v7x TCs
            vmem_limit_bytes=32 * 1024 * 1024,        # ~1.9 MB bf16 weights + tiles fit easily
        ),
    )(*args)

    r_recon = rflat[:B].reshape(B, 1, IMG, IMG)
    c_recon = cflat[:B].reshape(B, 1, IMG, IMG)
    return {
        "z": z[:B], "mu": mu[:B], "logvar": logvar[:B], "feature": feat[:B],
        "rimage": r_recon, "cimage": c_recon,
        "center": ctr[:B, 0:2], "depth": ctr[:B, 2:3],
    }


# ----------------------------------------------------------------------------
if __name__ == "__main__":
    key = jax.random.PRNGKey(0)
    k_param, k_img, k_eps = jax.random.split(key, 3)

    params = init_teacher_params(k_param)

    B = 2
    rimg = jax.random.uniform(k_img, (B, 1, IMG, IMG), dtype=jnp.float32)   # NCHW
    eps = jax.random.normal(k_eps, (B, LATENT_DIM), dtype=jnp.float32)

    out = jax.jit(teacher_forward)(params, rimg, eps)
    jax.block_until_ready(out)

    assert out["z"].shape == (B, LATENT_DIM)
    assert out["mu"].shape == (B, LATENT_DIM)
    assert out["logvar"].shape == (B, LATENT_DIM)
    assert out["feature"].shape == (B, FEAT_DIM)
    assert out["rimage"].shape == (B, 1, IMG, IMG)
    assert out["cimage"].shape == (B, 1, IMG, IMG)
    assert out["center"].shape == (B, 2)
    assert out["depth"].shape == (B, 1)
    assert bool(jnp.all(jnp.isfinite(out["rimage"])))
    assert bool(jnp.all(jnp.isfinite(out["cimage"])))
    assert bool(jnp.all(jnp.isfinite(out["z"])))
    assert bool(jnp.all(jnp.isfinite(out["center"])))

    print("KERNEL_OK")
</pallas_src>

<mosaic_0001>
module attributes {stable_mosaic.version = 11 : i64} {
  func.func @_teacher_kernel(%arg0: i32, %arg1: memref<8x256xf32, #tpu.memory_space<vmem>>, %arg2: memref<8x128xf32, #tpu.memory_space<vmem>>, %arg3: memref<256x512xbf16, #tpu.memory_space<vmem>>, %arg4: memref<1x512xf32, #tpu.memory_space<vmem>>, %arg5: memref<512x256xbf16, #tpu.memory_space<vmem>>, %arg6: memref<1x256xf32, #tpu.memory_space<vmem>>, %arg7: memref<256x128xbf16, #tpu.memory_space<vmem>>, %arg8: memref<1x128xf32, #tpu.memory_space<vmem>>, %arg9: memref<128x256xbf16, #tpu.memory_space<vmem>>, %arg10: memref<1x256xf32, #tpu.memory_space<vmem>>, %arg11: memref<128x256xbf16, #tpu.memory_space<vmem>>, %arg12: memref<1x256xf32, #tpu.memory_space<vmem>>, %arg13: memref<128x256xbf16, #tpu.memory_space<vmem>>, %arg14: memref<1x256xf32, #tpu.memory_space<vmem>>, %arg15: memref<256x512xbf16, #tpu.memory_space<vmem>>, %arg16: memref<1x512xf32, #tpu.memory_space<vmem>>, %arg17: memref<512x256xbf16, #tpu.memory_space<vmem>>, %arg18: memref<1x256xf32, #tpu.memory_space<vmem>>, %arg19: memref<128x256xbf16, #tpu.memory_space<vmem>>, %arg20: memref<1x256xf32, #tpu.memory_space<vmem>>, %arg21: memref<256x512xbf16, #tpu.memory_space<vmem>>, %arg22: memref<1x512xf32, #tpu.memory_space<vmem>>, %arg23: memref<512x256xbf16, #tpu.memory_space<vmem>>, %arg24: memref<1x256xf32, #tpu.memory_space<vmem>>, %arg25: memref<128x128xbf16, #tpu.memory_space<vmem>>, %arg26: memref<1x128xf32, #tpu.memory_space<vmem>>, %arg27: memref<128x128xbf16, #tpu.memory_space<vmem>>, %arg28: memref<1x128xf32, #tpu.memory_space<vmem>>, %arg29: memref<8x128xf32, #tpu.memory_space<vmem>>, %arg30: memref<8x128xf32, #tpu.memory_space<vmem>>, %arg31: memref<8x128xf32, #tpu.memory_space<vmem>>, %arg32: memref<8x128xf32, #tpu.memory_space<vmem>>, %arg33: memref<8x256xf32, #tpu.memory_space<vmem>>, %arg34: memref<8x256xf32, #tpu.memory_space<vmem>>, %arg35: memref<8x128xf32, #tpu.memory_space<vmem>>) attributes {dimension_semantics = [#tpu.dimension_semantics<parallel>], iteration_bounds = array<i64: 1>, scalar_prefetch = 0 : i64, scratch_operands = 0 : i64, tpu.core_type = #tpu.core_type<tc>, window_params = [{transform_indices = @transform_0, window_bounds = array<i64: 8, 256>}, {transform_indices = @transform_1, window_bounds = array<i64: 8, 128>}, {pipeline_mode = #tpu.pipeline_mode<synchronous>, transform_indices = @transform_2, window_bounds = array<i64: 256, 512>}, {pipeline_mode = #tpu.pipeline_mode<synchronous>, transform_indices = @transform_3, window_bounds = array<i64: 1, 512>}, {pipeline_mode = #tpu.pipeline_mode<synchronous>, transform_indices = @transform_4, window_bounds = array<i64: 512, 256>}, {pipeline_mode = #tpu.pipeline_mode<synchronous>, transform_indices = @transform_5, window_bounds = array<i64: 1, 256>}, {pipeline_mode = #tpu.pipeline_mode<synchronous>, transform_indices = @transform_6, window_bounds = array<i64: 256, 128>}, {pipeline_mode = #tpu.pipeline_mode<synchronous>, transform_indices = @transform_7, window_bounds = array<i64: 1, 128>}, {pipeline_mode = #tpu.pipeline_mode<synchronous>, transform_indices = @transform_8, window_bounds = array<i64: 128, 256>}, {pipeline_mode = #tpu.pipeline_mode<synchronous>, transform_indices = @transform_9, window_bounds = array<i64: 1, 256>}, {pipeline_mode = #tpu.pipeline_mode<synchronous>, transform_indices = @transform_10, window_bounds = array<i64: 128, 256>}, {pipeline_mode = #tpu.pipeline_mode<synchronous>, transform_indices = @transform_11, window_bounds = array<i64: 1, 256>}, {pipeline_mode = #tpu.pipeline_mode<synchronous>, transform_indices = @transform_12, window_bounds = array<i64: 128, 256>}, {pipeline_mode = #tpu.pipeline_mode<synchronous>, transform_indices = @transform_13, window_bounds = array<i64: 1, 256>}, {pipeline_mode = #tpu.pipeline_mode<synchronous>, transform_indices = @transform_14, window_bounds = array<i64: 256, 512>}, {pipeline_mode = #tpu.pipeline_mode<synchronous>, transform_indices = @transform_15, window_bounds = array<i64: 1, 512>}, {pipeline_mode = #tpu.pipeline_mode<synchronous>, transform_indices = @transform_16, window_bounds = array<i64: 512, 256>}, {pipeline_mode = #tpu.pipeline_mode<synchronous>, transform_indices = @transform_17, window_bounds = array<i64: 1, 256>}, {pipeline_mode = #tpu.pipeline_mode<synchronous>, transform_indices = @transform_18, window_bounds = array<i64: 128, 256>}, {pipeline_mode = #tpu.pipeline_mode<synchronous>, transform_indices = @transform_19, window_bounds = array<i64: 1, 256>}, {pipeline_mode = #tpu.pipeline_mode<synchronous>, transform_indices = @transform_20, window_bounds = array<i64: 256, 512>}, {pipeline_mode = #tpu.pipeline_mode<synchronous>, transform_indices = @transform_21, window_bounds = array<i64: 1, 512>}, {pipeline_mode = #tpu.pipeline_mode<synchronous>, transform_indices = @transform_22, window_bounds = array<i64: 512, 256>}, {pipeline_mode = #tpu.pipeline_mode<synchronous>, transform_indices = @transform_23, window_bounds = array<i64: 1, 256>}, {pipeline_mode = #tpu.pipeline_mode<synchronous>, transform_indices = @transform_24, window_bounds = array<i64: 128, 128>}, {pipeline_mode = #tpu.pipeline_mode<synchronous>, transform_indices = @transform_25, window_bounds = array<i64: 1, 128>}, {pipeline_mode = #tpu.pipeline_mode<synchronous>, transform_indices = @transform_26, window_bounds = array<i64: 128, 128>}, {pipeline_mode = #tpu.pipeline_mode<synchronous>, transform_indices = @transform_27, window_bounds = array<i64: 1, 128>}, {transform_indices = @transform_28, window_bounds = array<i64: 8, 128>}, {transform_indices = @transform_29, window_bounds = array<i64: 8, 128>}, {transform_indices = @transform_30, window_bounds = array<i64: 8, 128>}, {transform_indices = @transform_31, window_bounds = array<i64: 8, 128>}, {transform_indices = @transform_32, window_bounds = array<i64: 8, 256>}, {transform_indices = @transform_33, window_bounds = array<i64: 8, 256>}, {transform_indices = @transform_34, window_bounds = array<i64: 8, 128>}]} {
    %c0 = arith.constant 0 : index
    %c0_0 = arith.constant 0 : index
    %0 = vector.load %arg1[%c0, %c0_0] : memref<8x256xf32, #tpu.memory_space<vmem>>, vector<8x256xf32>
    %1 = arith.truncf %0 : vector<8x256xf32> to vector<8x256xbf16>
    %c0_1 = arith.constant 0 : index
    %c0_2 = arith.constant 0 : index
    %2 = vector.load %arg3[%c0_1, %c0_2] : memref<256x512xbf16, #tpu.memory_space<vmem>>, vector<256x512xbf16>
    %cst = arith.constant dense<0.000000e+00> : vector<8x512xf32>
    %3 = tpu.matmul %1, %2, %cst {dimension_numbers = #tpu.dot_dimension_numbers<[1], [0], [0], [1], [0, 0, 1, 1], [], []>} : vector<8x256xbf16>, vector<256x512xbf16>, vector<8x512xf32> -> vector<8x512xf32>
    %c0_3 = arith.constant 0 : index
    %c0_4 = arith.constant 0 : index
    %4 = vector.load %arg4[%c0_3, %c0_4] : memref<1x512xf32, #tpu.memory_space<vmem>>, vector<1x512xf32>
    %5 = vector.broadcast %4 : vector<1x512xf32> to vector<8x512xf32>
    %6 = arith.addf %3, %5 : vector<8x512xf32>
    %cst_5 = arith.constant 2.000000e-01 : f32
    %7 = vector.broadcast %cst_5 : f32 to vector<8x512xf32>
    %8 = arith.mulf %7, %6 : vector<8x512xf32>
    %9 = arith.maximumf %6, %8 : vector<8x512xf32>
    %10 = arith.truncf %9 : vector<8x512xf32> to vector<8x512xbf16>
    %c0_6 = arith.constant 0 : index
    %c0_7 = arith.constant 0 : index
    %11 = vector.load %arg5[%c0_6, %c0_7] : memref<512x256xbf16, #tpu.memory_space<vmem>>, vector<512x256xbf16>
    %cst_8 = arith.constant dense<0.000000e+00> : vector<8x256xf32>
    %12 = tpu.matmul %10, %11, %cst_8 {dimension_numbers = #tpu.dot_dimension_numbers<[1], [0], [0], [1], [0, 0, 1, 1], [], []>} : vector<8x512xbf16>, vector<512x256xbf16>, vector<8x256xf32> -> vector<8x256xf32>
    %c0_9 = arith.constant 0 : index
    %c0_10 = arith.constant 0 : index
    %13 = vector.load %arg6[%c0_9, %c0_10] : memref<1x256xf32, #tpu.memory_space<vmem>>, vector<1x256xf32>
    %14 = vector.broadcast %13 : vector<1x256xf32> to vector<8x256xf32>
    %15 = arith.addf %12, %14 : vector<8x256xf32>
    %cst_11 = arith.constant 2.000000e-01 : f32
    %16 = vector.broadcast %cst_11 : f32 to vector<8x256xf32>
    %17 = arith.mulf %16, %15 : vector<8x256xf32>
    %18 = arith.maximumf %15, %17 : vector<8x256xf32>
    %19 = arith.truncf %18 : vector<8x256xf32> to vector<8x256xbf16>
    %c0_12 = arith.constant 0 : index
    %c0_13 = arith.constant 0 : index
    %20 = vector.load %arg7[%c0_12, %c0_13] : memref<256x128xbf16, #tpu.memory_space<vmem>>, vector<256x128xbf16>
    %cst_14 = arith.constant dense<0.000000e+00> : vector<8x128xf32>
    %21 = tpu.matmul %19, %20, %cst_14 {dimension_numbers = #tpu.dot_dimension_numbers<[1], [0], [0], [1], [0, 0, 1, 1], [], []>} : vector<8x256xbf16>, vector<256x128xbf16>, vector<8x128xf32> -> vector<8x128xf32>
    %c0_15 = arith.constant 0 : index
    %c0_16 = arith.constant 0 : index
    %22 = vector.load %arg8[%c0_15, %c0_16] : memref<1x128xf32, #tpu.memory_space<vmem>>, vector<1x128xf32>
    %23 = vector.broadcast %22 : vector<1x128xf32> to vector<8x128xf32>
    %24 = arith.addf %21, %23 : vector<8x128xf32>
    %cst_17 = arith.constant 2.000000e-01 : f32
    %25 = vector.broadcast %cst_17 : f32 to vector<8x128xf32>
    %26 = arith.mulf %25, %24 : vector<8x128xf32>
    %27 = arith.maximumf %24, %26 : vector<8x128xf32>
    %c0_18 = arith.constant 0 : index
    %c0_19 = arith.constant 0 : index
    %28 = vector.load %arg29[%c0_18, %c0_19] : memref<8x128xf32, #tpu.memory_space<vmem>>, vector<8x128xf32>
    tpu.vector_store %arg29[%c0_18, %c0_19], %27 {strides = array<i32>} : memref<8x128xf32, #tpu.memory_space<vmem>>, vector<8x128xf32>,
    %29 = arith.truncf %27 : vector<8x128xf32> to vector<8x128xbf16>
    %c0_20 = arith.constant 0 : index
    %c0_21 = arith.constant 0 : index
    %30 = vector.load %arg9[%c0_20, %c0_21] : memref<128x256xbf16, #tpu.memory_space<vmem>>, vector<128x256xbf16>
    %cst_22 = arith.constant dense<0.000000e+00> : vector<8x256xf32>
    %31 = tpu.matmul %29, %30, %cst_22 {dimension_numbers = #tpu.dot_dimension_numbers<[1], [0], [0], [1], [0, 0, 1, 1], [], []>} : vector<8x128xbf16>, vector<128x256xbf16>, vector<8x256xf32> -> vector<8x256xf32>
    %c0_23 = arith.constant 0 : index
    %c0_24 = arith.constant 0 : index
    %32 = vector.load %arg10[%c0_23, %c0_24] : memref<1x256xf32, #tpu.memory_space<vmem>>, vector<1x256xf32>
    %33 = vector.broadcast %32 : vector<1x256xf32> to vector<8x256xf32>
    %34 = arith.addf %31, %33 : vector<8x256xf32>
    %35 = vector.extract_strided_slice %34 {offsets = [0, 0], sizes = [8, 128], strides = [1, 1]} : vector<8x256xf32> to vector<8x128xf32>
    %36 = vector.extract_strided_slice %34 {offsets = [0, 128], sizes = [8, 128], strides = [1, 1]} : vector<8x256xf32> to vector<8x128xf32>
    %c0_25 = arith.constant 0 : index
    %c0_26 = arith.constant 0 : index
    %37 = vector.load %arg30[%c0_25, %c0_26] : memref<8x128xf32, #tpu.memory_space<vmem>>, vector<8x128xf32>
    tpu.vector_store %arg30[%c0_25, %c0_26], %35 {strides = array<i32>} : memref<8x128xf32, #tpu.memory_space<vmem>>, vector<8x128xf32>,
    %c0_27 = arith.constant 0 : index
    %c0_28 = arith.constant 0 : index
    %38 = vector.load %arg31[%c0_27, %c0_28] : memref<8x128xf32, #tpu.memory_space<vmem>>, vector<8x128xf32>
    tpu.vector_store %arg31[%c0_27, %c0_28], %36 {strides = array<i32>} : memref<8x128xf32, #tpu.memory_space<vmem>>, vector<8x128xf32>,
    %cst_29 = arith.constant 5.000000e-01 : f32
    %39 = vector.broadcast %cst_29 : f32 to vector<8x128xf32>
    %40 = arith.mulf %39, %36 : vector<8x128xf32>
    %41 = math.exp %40 : vector<8x128xf32>
    %c0_30 = arith.constant 0 : index
    %c0_31 = arith.constant 0 : index
    %42 = vector.load %arg2[%c0_30, %c0_31] : memref<8x128xf32, #tpu.memory_space<vmem>>, vector<8x128xf32>
    %43 = arith.mulf %41, %42 : vector<8x128xf32>
    %44 = arith.addf %35, %43 : vector<8x128xf32>
    %c0_32 = arith.constant 0 : index
    %c0_33 = arith.constant 0 : index
    %45 = vector.load %arg32[%c0_32, %c0_33] : memref<8x128xf32, #tpu.memory_space<vmem>>, vector<8x128xf32>
    tpu.vector_store %arg32[%c0_32, %c0_33], %44 {strides = array<i32>} : memref<8x128xf32, #tpu.memory_space<vmem>>, vector<8x128xf32>,
    %46 = arith.truncf %44 : vector<8x128xf32> to vector<8x128xbf16>
    %c0_34 = arith.constant 0 : index
    %c0_35 = arith.constant 0 : index
    %47 = vector.load %arg11[%c0_34, %c0_35] : memref<128x256xbf16, #tpu.memory_space<vmem>>, vector<128x256xbf16>
    %cst_36 = arith.constant dense<0.000000e+00> : vector<8x256xf32>
    %48 = tpu.matmul %46, %47, %cst_36 {dimension_numbers = #tpu.dot_dimension_numbers<[1], [0], [0], [1], [0, 0, 1, 1], [], []>} : vector<8x128xbf16>, vector<128x256xbf16>, vector<8x256xf32> -> vector<8x256xf32>
    %c0_37 = arith.constant 0 : index
    %c0_38 = arith.constant 0 : index
    %49 = vector.load %arg12[%c0_37, %c0_38] : memref<1x256xf32, #tpu.memory_space<vmem>>, vector<1x256xf32>
    %50 = vector.broadcast %49 : vector<1x256xf32> to vector<8x256xf32>
    %51 = arith.addf %48, %50 : vector<8x256xf32>
    %cst_39 = arith.constant 2.000000e-01 : f32
    %52 = vector.broadcast %cst_39 : f32 to vector<8x256xf32>
    %53 = arith.mulf %52, %51 : vector<8x256xf32>
    %54 = arith.maximumf %51, %53 : vector<8x256xf32>
    %55 = vector.extract_strided_slice %54 {offsets = [0, 0], sizes = [8, 128], strides = [1, 1]} : vector<8x256xf32> to vector<8x128xf32>
    %56 = vector.extract_strided_slice %54 {offsets = [0, 128], sizes = [8, 128], strides = [1, 1]} : vector<8x256xf32> to vector<8x128xf32>
    %57 = arith.truncf %55 : vector<8x128xf32> to vector<8x128xbf16>
    %c0_40 = arith.constant 0 : index
    %c0_41 = arith.constant 0 : index
    %58 = vector.load %arg13[%c0_40, %c0_41] : memref<128x256xbf16, #tpu.memory_space<vmem>>, vector<128x256xbf16>
    %cst_42 = arith.constant dense<0.000000e+00> : vector<8x256xf32>
    %59 = tpu.matmul %57, %58, %cst_42 {dimension_numbers = #tpu.dot_dimension_numbers<[1], [0], [0], [1], [0, 0, 1, 1], [], []>} : vector<8x128xbf16>, vector<128x256xbf16>, vector<8x256xf32> -> vector<8x256xf32>
    %c0_43 = arith.constant 0 : index
    %c0_44 = arith.constant 0 : index
    %60 = vector.load %arg14[%c0_43, %c0_44] : memref<1x256xf32, #tpu.memory_space<vmem>>, vector<1x256xf32>
    %61 = vector.broadcast %60 : vector<1x256xf32> to vector<8x256xf32>
    %62 = arith.addf %59, %61 : vector<8x256xf32>
    %cst_45 = arith.constant 2.000000e-01 : f32
    %63 = vector.broadcast %cst_45 : f32 to vector<8x256xf32>
    %64 = arith.mulf %63, %62 : vector<8x256xf32>
    %65 = arith.maximumf %62, %64 : vector<8x256xf32>
    %66 = arith.truncf %65 : vector<8x256xf32> to vector<8x256xbf16>
    %c0_46 = arith.constant 0 : index
    %c0_47 = arith.constant 0 : index
    %67 = vector.load %arg15[%c0_46, %c0_47] : memref<256x512xbf16, #tpu.memory_space<vmem>>, vector<256x512xbf16>
    %cst_48 = arith.constant dense<0.000000e+00> : vector<8x512xf32>
    %68 = tpu.matmul %66, %67, %cst_48 {dimension_numbers = #tpu.dot_dimension_numbers<[1], [0], [0], [1], [0, 0, 1, 1], [], []>} : vector<8x256xbf16>, vector<256x512xbf16>, vector<8x512xf32> -> vector<8x512xf32>
    %c0_49 = arith.constant 0 : index
    %c0_50 = arith.constant 0 : index
    %69 = vector.load %arg16[%c0_49, %c0_50] : memref<1x512xf32, #tpu.memory_space<vmem>>, vector<1x512xf32>
    %70 = vector.broadcast %69 : vector<1x512xf32> to vector<8x512xf32>
    %71 = arith.addf %68, %70 : vector<8x512xf32>
    %cst_51 = arith.constant 2.000000e-01 : f32
    %72 = vector.broadcast %cst_51 : f32 to vector<8x512xf32>
    %73 = arith.mulf %72, %71 : vector<8x512xf32>
    %74 = arith.maximumf %71, %73 : vector<8x512xf32>
    %75 = arith.truncf %74 : vector<8x512xf32> to vector<8x512xbf16>
    %c0_52 = arith.constant 0 : index
    %c0_53 = arith.constant 0 : index
    %76 = vector.load %arg17[%c0_52, %c0_53] : memref<512x256xbf16, #tpu.memory_space<vmem>>, vector<512x256xbf16>
    %cst_54 = arith.constant dense<0.000000e+00> : vector<8x256xf32>
    %77 = tpu.matmul %75, %76, %cst_54 {dimension_numbers = #tpu.dot_dimension_numbers<[1], [0], [0], [1], [0, 0, 1, 1], [], []>} : vector<8x512xbf16>, vector<512x256xbf16>, vector<8x256xf32> -> vector<8x256xf32>
    %c0_55 = arith.constant 0 : index
    %c0_56 = arith.constant 0 : index
    %78 = vector.load %arg18[%c0_55, %c0_56] : memref<1x256xf32, #tpu.memory_space<vmem>>, vector<1x256xf32>
    %79 = vector.broadcast %78 : vector<1x256xf32> to vector<8x256xf32>
    %80 = arith.addf %77, %79 : vector<8x256xf32>
    %cst_57 = arith.constant 0.000000e+00 : f32
    %81 = vector.broadcast %cst_57 : f32 to vector<8x256xf32>
    %82 = arith.subf %81, %80 : vector<8x256xf32>
    %83 = math.exp %82 : vector<8x256xf32>
    %cst_58 = arith.constant 1.000000e+00 : f32
    %84 = vector.broadcast %cst_58 : f32 to vector<8x256xf32>
    %85 = arith.addf %84, %83 : vector<8x256xf32>
    %86 = tpu.reciprocal %85 {approx = true} : vector<8x256xf32> -> vector<8x256xf32>
    %c0_59 = arith.constant 0 : index
    %c0_60 = arith.constant 0 : index
    %87 = vector.load %arg33[%c0_59, %c0_60] : memref<8x256xf32, #tpu.memory_space<vmem>>, vector<8x256xf32>
    tpu.vector_store %arg33[%c0_59, %c0_60], %86 {strides = array<i32>} : memref<8x256xf32, #tpu.memory_space<vmem>>, vector<8x256xf32>,
    %88 = arith.truncf %56 : vector<8x128xf32> to vector<8x128xbf16>
    %c0_61 = arith.constant 0 : index
    %c0_62 = arith.constant 0 : index
    %89 = vector.load %arg19[%c0_61, %c0_62] : memref<128x256xbf16, #tpu.memory_space<vmem>>, vector<128x256xbf16>
    %cst_63 = arith.constant dense<0.000000e+00> : vector<8x256xf32>
    %90 = tpu.matmul %88, %89, %cst_63 {dimension_numbers = #tpu.dot_dimension_numbers<[1], [0], [0], [1], [0, 0, 1, 1], [], []>} : vector<8x128xbf16>, vector<128x256xbf16>, vector<8x256xf32> -> vector<8x256xf32>
    %c0_64 = arith.constant 0 : index
    %c0_65 = arith.constant 0 : index
    %91 = vector.load %arg20[%c0_64, %c0_65] : memref<1x256xf32, #tpu.memory_space<vmem>>, vector<1x256xf32>
    %92 = vector.broadcast %91 : vector<1x256xf32> to vector<8x256xf32>
    %93 = arith.addf %90, %92 : vector<8x256xf32>
    %cst_66 = arith.constant 2.000000e-01 : f32
    %94 = vector.broadcast %cst_66 : f32 to vector<8x256xf32>
    %95 = arith.mulf %94, %93 : vector<8x256xf32>
    %96 = arith.maximumf %93, %95 : vector<8x256xf32>
    %97 = arith.truncf %96 : vector<8x256xf32> to vector<8x256xbf16>
    %c0_67 = arith.constant 0 : index
    %c0_68 = arith.constant 0 : index
    %98 = vector.load %arg21[%c0_67, %c0_68] : memref<256x512xbf16, #tpu.memory_space<vmem>>, vector<256x512xbf16>
    %cst_69 = arith.constant dense<0.000000e+00> : vector<8x512xf32>
    %99 = tpu.matmul %97, %98, %cst_69 {dimension_numbers = #tpu.dot_dimension_numbers<[1], [0], [0], [1], [0, 0, 1, 1], [], []>} : vector<8x256xbf16>, vector<256x512xbf16>, vector<8x512xf32> -> vector<8x512xf32>
    %c0_70 = arith.constant 0 : index
    %c0_71 = arith.constant 0 : index
    %100 = vector.load %arg22[%c0_70, %c0_71] : memref<1x512xf32, #tpu.memory_space<vmem>>, vector<1x512xf32>
    %101 = vector.broadcast %100 : vector<1x512xf32> to vector<8x512xf32>
    %102 = arith.addf %99, %101 : vector<8x512xf32>
    %cst_72 = arith.constant 2.000000e-01 : f32
    %103 = vector.broadcast %cst_72 : f32 to vector<8x512xf32>
    %104 = arith.mulf %103, %102 : vector<8x512xf32>
    %105 = arith.maximumf %102, %104 : vector<8x512xf32>
    %106 = arith.truncf %105 : vector<8x512xf32> to vector<8x512xbf16>
    %c0_73 = arith.constant 0 : index
    %c0_74 = arith.constant 0 : index
    %107 = vector.load %arg23[%c0_73, %c0_74] : memref<512x256xbf16, #tpu.memory_space<vmem>>, vector<512x256xbf16>
    %cst_75 = arith.constant dense<0.000000e+00> : vector<8x256xf32>
    %108 = tpu.matmul %106, %107, %cst_75 {dimension_numbers = #tpu.dot_dimension_numbers<[1], [0], [0], [1], [0, 0, 1, 1], [], []>} : vector<8x512xbf16>, vector<512x256xbf16>, vector<8x256xf32> -> vector<8x256xf32>
    %c0_76 = arith.constant 0 : index
    %c0_77 = arith.constant 0 : index
    %109 = vector.load %arg24[%c0_76, %c0_77] : memref<1x256xf32, #tpu.memory_space<vmem>>, vector<1x256xf32>
    %110 = vector.broadcast %109 : vector<1x256xf32> to vector<8x256xf32>
    %111 = arith.addf %108, %110 : vector<8x256xf32>
    %cst_78 = arith.constant 0.000000e+00 : f32
    %112 = vector.broadcast %cst_78 : f32 to vector<8x256xf32>
    %113 = arith.subf %112, %111 : vector<8x256xf32>
    %114 = math.exp %113 : vector<8x256xf32>
    %cst_79 = arith.constant 1.000000e+00 : f32
    %115 = vector.broadcast %cst_79 : f32 to vector<8x256xf32>
    %116 = arith.addf %115, %114 : vector<8x256xf32>
    %117 = tpu.reciprocal %116 {approx = true} : vector<8x256xf32> -> vector<8x256xf32>
    %c0_80 = arith.constant 0 : index
    %c0_81 = arith.constant 0 : index
    %118 = vector.load %arg34[%c0_80, %c0_81] : memref<8x256xf32, #tpu.memory_space<vmem>>, vector<8x256xf32>
    tpu.vector_store %arg34[%c0_80, %c0_81], %117 {strides = array<i32>} : memref<8x256xf32, #tpu.memory_space<vmem>>, vector<8x256xf32>,
    %119 = arith.truncf %27 : vector<8x128xf32> to vector<8x128xbf16>
    %c0_82 = arith.constant 0 : index
    %c0_83 = arith.constant 0 : index
    %120 = vector.load %arg25[%c0_82, %c0_83] : memref<128x128xbf16, #tpu.memory_space<vmem>>, vector<128x128xbf16>
    %cst_84 = arith.constant dense<0.000000e+00> : vector<8x128xf32>
    %121 = tpu.matmul %119, %120, %cst_84 {dimension_numbers = #tpu.dot_dimension_numbers<[1], [0], [0], [1], [0, 0, 1, 1], [], []>} : vector<8x128xbf16>, vector<128x128xbf16>, vector<8x128xf32> -> vector<8x128xf32>
    %c0_85 = arith.constant 0 : index
    %c0_86 = arith.constant 0 : index
    %122 = vector.load %arg26[%c0_85, %c0_86] : memref<1x128xf32, #tpu.memory_space<vmem>>, vector<1x128xf32>
    %123 = vector.broadcast %122 : vector<1x128xf32> to vector<8x128xf32>
    %124 = arith.addf %121, %123 : vector<8x128xf32>
    %cst_87 = arith.constant 2.000000e-01 : f32
    %125 = vector.broadcast %cst_87 : f32 to vector<8x128xf32>
    %126 = arith.mulf %125, %124 : vector<8x128xf32>
    %127 = arith.maximumf %124, %126 : vector<8x128xf32>
    %128 = arith.truncf %127 : vector<8x128xf32> to vector<8x128xbf16>
    %c0_88 = arith.constant 0 : index
    %c0_89 = arith.constant 0 : index
    %129 = vector.load %arg27[%c0_88, %c0_89] : memref<128x128xbf16, #tpu.memory_space<vmem>>, vector<128x128xbf16>
    %cst_90 = arith.constant dense<0.000000e+00> : vector<8x128xf32>
    %130 = tpu.matmul %128, %129, %cst_90 {dimension_numbers = #tpu.dot_dimension_numbers<[1], [0], [0], [1], [0, 0, 1, 1], [], []>} : vector<8x128xbf16>, vector<128x128xbf16>, vector<8x128xf32> -> vector<8x128xf32>
    %c0_91 = arith.constant 0 : index
    %c0_92 = arith.constant 0 : index
    %131 = vector.load %arg28[%c0_91, %c0_92] : memref<1x128xf32, #tpu.memory_space<vmem>>, vector<1x128xf32>
    %132 = vector.broadcast %131 : vector<1x128xf32> to vector<8x128xf32>
    %133 = arith.addf %130, %132 : vector<8x128xf32>
    %cst_93 = arith.constant 0.000000e+00 : f32
    %134 = vector.broadcast %cst_93 : f32 to vector<8x128xf32>
    %135 = arith.subf %134, %133 : vector<8x128xf32>
    %136 = math.exp %135 : vector<8x128xf32>
    %cst_94 = arith.constant 1.000000e+00 : f32
    %137 = vector.broadcast %cst_94 : f32 to vector<8x128xf32>
    %138 = arith.addf %137, %136 : vector<8x128xf32>
    %139 = tpu.reciprocal %138 {approx = true} : vector<8x128xf32> -> vector<8x128xf32>
    %c0_95 = arith.constant 0 : index
    %c0_96 = arith.constant 0 : index
    %140 = vector.load %arg35[%c0_95, %c0_96] : memref<8x128xf32, #tpu.memory_space<vmem>>, vector<8x128xf32>
    tpu.vector_store %arg35[%c0_95, %c0_96], %139 {strides = array<i32>} : memref<8x128xf32, #tpu.memory_space<vmem>>, vector<8x128xf32>,
    return
  }
  func.func @transform_0(%arg0: i32) -> (i32, i32) {
    %c0_i32 = arith.constant 0 : i32
    %c0_i32_0 = arith.constant 0 : i32
    return %arg0, %c0_i32 : i32, i32
  }
  func.func @transform_1(%arg0: i32) -> (i32, i32) {
    %c0_i32 = arith.constant 0 : i32
    %c0_i32_0 = arith.constant 0 : i32
    return %arg0, %c0_i32 : i32, i32
  }
  func.func @transform_2(%arg0: i32) -> (i32, i32) {
    %c0_i32 = arith.constant 0 : i32
    %c0_i32_0 = arith.constant 0 : i32
    %c0_i32_1 = arith.constant 0 : i32
    return %c0_i32, %c0_i32_0 : i32, i32
  }
  func.func @transform_3(%arg0: i32) -> (i32, i32) {
    %c0_i32 = arith.constant 0 : i32
    %c0_i32_0 = arith.constant 0 : i32
    %c0_i32_1 = arith.constant 0 : i32
    return %c0_i32, %c0_i32_0 : i32, i32
  }
  func.func @transform_4(%arg0: i32) -> (i32, i32) {
    %c0_i32 = arith.constant 0 : i32
    %c0_i32_0 = arith.constant 0 : i32
    %c0_i32_1 = arith.constant 0 : i32
    return %c0_i32, %c0_i32_0 : i32, i32
  }
  func.func @transform_5(%arg0: i32) -> (i32, i32) {
    %c0_i32 = arith.constant 0 : i32
    %c0_i32_0 = arith.constant 0 : i32
    %c0_i32_1 = arith.constant 0 : i32
    return %c0_i32, %c0_i32_0 : i32, i32
  }
  func.func @transform_6(%arg0: i32) -> (i32, i32) {
    %c0_i32 = arith.constant 0 : i32
    %c0_i32_0 = arith.constant 0 : i32
    %c0_i32_1 = arith.constant 0 : i32
    return %c0_i32, %c0_i32_0 : i32, i32
  }
  func.func @transform_7(%arg0: i32) -> (i32, i32) {
    %c0_i32 = arith.constant 0 : i32
    %c0_i32_0 = arith.constant 0 : i32
    %c0_i32_1 = arith.constant 0 : i32
    return %c0_i32, %c0_i32_0 : i32, i32
  }
  func.func @transform_8(%arg0: i32) -> (i32, i32) {
    %c0_i32 = arith.constant 0 : i32
    %c0_i32_0 = arith.constant 0 : i32
    %c0_i32_1 = arith.constant 0 : i32
    return %c0_i32, %c0_i32_0 : i32, i32
  }
  func.func @transform_9(%arg0: i32) -> (i32, i32) {
    %c0_i32 = arith.constant 0 : i32
    %c0_i32_0 = arith.constant 0 : i32
    %c0_i32_1 = arith.constant 0 : i32
    return %c0_i32, %c0_i32_0 : i32, i32
  }
  func.func @transform_10(%arg0: i32) -> (i32, i32) {
    %c0_i32 = arith.constant 0 : i32
    %c0_i32_0 = arith.constant 0 : i32
    %c0_i32_1 = arith.constant 0 : i32
    return %c0_i32, %c0_i32_0 : i32, i32
  }
  func.func @transform_11(%arg0: i32) -> (i32, i32) {
    %c0_i32 = arith.constant 0 : i32
    %c0_i32_0 = arith.constant 0 : i32
    %c0_i32_1 = arith.constant 0 : i32
    return %c0_i32, %c0_i32_0 : i32, i32
  }
  func.func @transform_12(%arg0: i32) -> (i32, i32) {
    %c0_i32 = arith.constant 0 : i32
    %c0_i32_0 = arith.constant 0 : i32
    %c0_i32_1 = arith.constant 0 : i32
    return %c0_i32, %c0_i32_0 : i32, i32
  }
  func.func @transform_13(%arg0: i32) -> (i32, i32) {
    %c0_i32 = arith.constant 0 : i32
    %c0_i32_0 = arith.constant 0 : i32
    %c0_i32_1 = arith.constant 0 : i32
    return %c0_i32, %c0_i32_0 : i32, i32
  }
  func.func @transform_14(%arg0: i32) -> (i32, i32) {
    %c0_i32 = arith.constant 0 : i32
    %c0_i32_0 = arith.constant 0 : i32
    %c0_i32_1 = arith.constant 0 : i32
    return %c0_i32, %c0_i32_0 : i32, i32
  }
  func.func @transform_15(%arg0: i32) -> (i32, i32) {
    %c0_i32 = arith.constant 0 : i32
    %c0_i32_0 = arith.constant 0 : i32
    %c0_i32_1 = arith.constant 0 : i32
    return %c0_i32, %c0_i32_0 : i32, i32
  }
  func.func @transform_16(%arg0: i32) -> (i32, i32) {
    %c0_i32 = arith.constant 0 : i32
    %c0_i32_0 = arith.constant 0 : i32
    %c0_i32_1 = arith.constant 0 : i32
    return %c0_i32, %c0_i32_0 : i32, i32
  }
  func.func @transform_17(%arg0: i32) -> (i32, i32) {
    %c0_i32 = arith.constant 0 : i32
    %c0_i32_0 = arith.constant 0 : i32
    %c0_i32_1 = arith.constant 0 : i32
    return %c0_i32, %c0_i32_0 : i32, i32
  }
  func.func @transform_18(%arg0: i32) -> (i32, i32) {
    %c0_i32 = arith.constant 0 : i32
    %c0_i32_0 = arith.constant 0 : i32
    %c0_i32_1 = arith.constant 0 : i32
    return %c0_i32, %c0_i32_0 : i32, i32
  }
  func.func @transform_19(%arg0: i32) -> (i32, i32) {
    %c0_i32 = arith.constant 0 : i32
    %c0_i32_0 = arith.constant 0 : i32
    %c0_i32_1 = arith.constant 0 : i32
    return %c0_i32, %c0_i32_0 : i32, i32
  }
  func.func @transform_20(%arg0: i32) -> (i32, i32) {
    %c0_i32 = arith.constant 0 : i32
    %c0_i32_0 = arith.constant 0 : i32
    %c0_i32_1 = arith.constant 0 : i32
    return %c0_i32, %c0_i32_0 : i32, i32
  }
  func.func @transform_21(%arg0: i32) -> (i32, i32) {
    %c0_i32 = arith.constant 0 : i32
    %c0_i32_0 = arith.constant 0 : i32
    %c0_i32_1 = arith.constant 0 : i32
    return %c0_i32, %c0_i32_0 : i32, i32
  }
  func.func @transform_22(%arg0: i32) -> (i32, i32) {
    %c0_i32 = arith.constant 0 : i32
    %c0_i32_0 = arith.constant 0 : i32
    %c0_i32_1 = arith.constant 0 : i32
    return %c0_i32, %c0_i32_0 : i32, i32
  }
  func.func @transform_23(%arg0: i32) -> (i32, i32) {
    %c0_i32 = arith.constant 0 : i32
    %c0_i32_0 = arith.constant 0 : i32
    %c0_i32_1 = arith.constant 0 : i32
    return %c0_i32, %c0_i32_0 : i32, i32
  }
  func.func @transform_24(%arg0: i32) -> (i32, i32) {
    %c0_i32 = arith.constant 0 : i32
    %c0_i32_0 = arith.constant 0 : i32
    %c0_i32_1 = arith.constant 0 : i32
    return %c0_i32, %c0_i32_0 : i32, i32
  }
  func.func @transform_25(%arg0: i32) -> (i32, i32) {
    %c0_i32 = arith.constant 0 : i32
    %c0_i32_0 = arith.constant 0 : i32
    %c0_i32_1 = arith.constant 0 : i32
    return %c0_i32, %c0_i32_0 : i32, i32
  }
  func.func @transform_26(%arg0: i32) -> (i32, i32) {
    %c0_i32 = arith.constant 0 : i32
    %c0_i32_0 = arith.constant 0 : i32
    %c0_i32_1 = arith.constant 0 : i32
    return %c0_i32, %c0_i32_0 : i32, i32
  }
  func.func @transform_27(%arg0: i32) -> (i32, i32) {
    %c0_i32 = arith.constant 0 : i32
    %c0_i32_0 = arith.constant 0 : i32
    %c0_i32_1 = arith.constant 0 : i32
    return %c0_i32, %c0_i32_0 : i32, i32
  }
  func.func @transform_28(%arg0: i32) -> (i32, i32) {
    %c0_i32 = arith.constant 0 : i32
    %c0_i32_0 = arith.constant 0 : i32
    return %arg0, %c0_i32 : i32, i32
  }
  func.func @transform_29(%arg0: i32) -> (i32, i32) {
    %c0_i32 = arith.constant 0 : i32
    %c0_i32_0 = arith.constant 0 : i32
    return %arg0, %c0_i32 : i32, i32
  }
  func.func @transform_30(%arg0: i32) -> (i32, i32) {
    %c0_i32 = arith.constant 0 : i32
    %c0_i32_0 = arith.constant 0 : i32
    return %arg0, %c0_i32 : i32, i32
  }
  func.func @transform_31(%arg0: i32) -> (i32, i32) {
    %c0_i32 = arith.constant 0 : i32
    %c0_i32_0 = arith.constant 0 : i32
    return %arg0, %c0_i32 : i32, i32
  }
  func.func @transform_32(%arg0: i32) -> (i32, i32) {
    %c0_i32 = arith.constant 0 : i32
    %c0_i32_0 = arith.constant 0 : i32
    return %arg0, %c0_i32 : i32, i32
  }
  func.func @transform_33(%arg0: i32) -> (i32, i32) {
    %c0_i32 = arith.constant 0 : i32
    %c0_i32_0 = arith.constant 0 : i32
    return %arg0, %c0_i32 : i32, i32
  }
  func.func @transform_34(%arg0: i32) -> (i32, i32) {
    %c0_i32 = arith.constant 0 : i32
    %c0_i32_0 = arith.constant 0 : i32
    return %arg0, %c0_i32 : i32, i32
  }
}

</mosaic_0001>

<llo_original>
// kernel: teacher_forward.1
$region0: #{teacher_forward.1}
  #allocation0 [shape = 'u32[]', space=smem, size = 0x4, offset = 0x4, fixed_abs, tag = 'smem constant byte address 0x4 - core index']
  #allocation1 [shape = 'u32[144,128]{1,0:T(1,128)}', space=vmem, size = 0x12000, scoped, tag = 'internal scratch']
  %s0 = inlined_call_operand.smem [shape: u32[35], index: -1, kind: input, shape index: {}]
  %s1 = sld [smem:[%s0]]
  %s2 = scalar_lea.smem %s0, 1
  %s3 = sld [smem:[%s2]]
  %s4 = scalar_lea.smem %s0, 2
  %s5 = sld [smem:[%s4]]
  %s6 = scalar_lea.smem %s0, 3
  %s7 = sld [smem:[%s6]]
  %s8 = scalar_lea.smem %s0, 4
  %s9 = sld [smem:[%s8]]
  %s10 = scalar_lea.smem %s0, 5
  %s11 = sld [smem:[%s10]]
  %s12 = scalar_lea.smem %s0, 6
  %s13 = sld [smem:[%s12]]
  %s14 = scalar_lea.smem %s0, 7
  %s15 = sld [smem:[%s14]]
  %s16 = scalar_lea.smem %s0, 8
  %s17 = sld [smem:[%s16]]
  %s18 = scalar_lea.smem %s0, 9
  %s19 = sld [smem:[%s18]]
  %s20 = scalar_lea.smem %s0, 10
  %s21 = sld [smem:[%s20]]
  %s22 = scalar_lea.smem %s0, 11
  %s23 = sld [smem:[%s22]]
  %s24 = scalar_lea.smem %s0, 12
  %s25 = sld [smem:[%s24]]
  %s26 = scalar_lea.smem %s0, 13
  %s27 = sld [smem:[%s26]]
  %s28 = scalar_lea.smem %s0, 14
  %s29 = sld [smem:[%s28]]
  %s30 = scalar_lea.smem %s0, 15
  %s31 = sld [smem:[%s30]]
  %s32 = scalar_lea.smem %s0, 16
  %s33 = sld [smem:[%s32]]
  %s34 = scalar_lea.smem %s0, 17
  %s35 = sld [smem:[%s34]]
  %s36 = scalar_lea.smem %s0, 18
  %s37 = sld [smem:[%s36]]
  %s38 = scalar_lea.smem %s0, 19
  %s39 = sld [smem:[%s38]]
  %s40 = scalar_lea.smem %s0, 20
  %s41 = sld [smem:[%s40]]
  %s42 = scalar_lea.smem %s0, 21
  %s43 = sld [smem:[%s42]]
  %s44 = scalar_lea.smem %s0, 22
  %s45 = sld [smem:[%s44]]
  %s46 = scalar_lea.smem %s0, 23
  %s47 = sld [smem:[%s46]]
  %s48 = scalar_lea.smem %s0, 24
  %s49 = sld [smem:[%s48]]
  %s50 = scalar_lea.smem %s0, 25
  %s51 = sld [smem:[%s50]]
  %s52 = scalar_lea.smem %s0, 26
  %s53 = sld [smem:[%s52]]
  %s54 = scalar_lea.smem %s0, 27
  %s55 = sld [smem:[%s54]]
  %s56 = scalar_lea.smem %s0, 28
  %s57 = sld [smem:[%s56]]
  %s58 = scalar_lea.smem %s0, 29
  %s59 = sld [smem:[%s58]]
  %s60 = scalar_lea.smem %s0, 30
  %s61 = sld [smem:[%s60]]
  %s62 = scalar_lea.smem %s0, 31
  %s63 = sld [smem:[%s62]]
  %s64 = scalar_lea.smem %s0, 32
  %s65 = sld [smem:[%s64]]
  %s66 = scalar_lea.smem %s0, 33
  %s67 = sld [smem:[%s66]]
  %s68 = scalar_lea.smem %s0, 34
  %s69 = sld [smem:[%s68]]
  %70 = xla_tuple %s57, %s59, %s61, %s63, %s65, %s67, %s69
  %s71 = sld [smem:[#allocation0]]
  $region266: #{teacher_forward.1} parent=0
    _
  %s73 = ssub.s32 1, %s71
  %s74 = scalar_select 0, %s73, %s71
  $region1: #{teacher_forward.1} parent=0
    #allocation2 [shape = 'u8[262144]{0}', space=vmem, size = 0x40000, scoped, tag = 'input window, operand 2, single buffered']
    #allocation3 [shape = 's32[1]{0}', space=sflag, size = 0x4, scoped, tag = 'scoped memory for teacher_forward.1']
    #allocation4 [shape = 'u8[2048]{0}', space=vmem, size = 0x800, scoped, tag = 'input window, operand 3, single buffered']
    #allocation5 [shape = 's32[1]{0}', space=sflag, size = 0x4, scoped, tag = 'scoped memory for teacher_forward.1']
    #allocation6 [shape = 'u8[262144]{0}', space=vmem, size = 0x40000, scoped, tag = 'input window, operand 4, single buffered']
    #allocation7 [shape = 'u8[65536]{0}', space=vmem, size = 0x10000, scoped, tag = 'input window, operand 6, single buffered']
    #allocation8 [shape = 's32[1]{0}', space=sflag, size = 0x4, scoped, tag = 'scoped memory for teacher_forward.1']
    #allocation9 [shape = 'u8[512]{0}', space=vmem, size = 0x400, scoped, tag = 'input window, operand 7, single buffered']
    #allocation10 [shape = 'u8[65536]{0}', space=vmem, size = 0x10000, scoped, tag = 'input window, operand 8, single buffered']
    #allocation11 [shape = 's32[1]{0}', space=sflag, size = 0x4, scoped, tag = 'scoped memory for teacher_forward.1']
    #allocation12 [shape = 'u8[1024]{0}', space=vmem, size = 0x400, scoped, tag = 'input window, operand 9, single buffered']
    #allocation13 [shape = 'u8[65536]{0}', space=vmem, size = 0x10000, scoped, tag = 'input window, operand 10, single buffered']
    #allocation14 [shape = 's32[1]{0}', space=sflag, size = 0x4, scoped, tag = 'scoped memory for teacher_forward.1']
    #allocation15 [shape = 'u8[1024]{0}', space=vmem, size = 0x400, scoped, tag = 'input window, operand 11, single buffered']
    #allocation16 [shape = 'u8[1024]{0}', space=vmem, size = 0x400, scoped, tag = 'input window, operand 13, single buffered']
    #allocation17 [shape = 's32[1]{0}', space=sflag, size = 0x4, scoped, tag = 'scoped memory for teacher_forward.1']
    #allocation18 [shape = 'u8[262144]{0}', space=vmem, size = 0x40000, scoped, tag = 'input window, operand 14, single buffered']
    #allocation19 [shape = 'u8[2048]{0}', space=vmem, size = 0x800, scoped, tag = 'input window, operand 15, single buffered']
    #allocation20 [shape = 's32[1]{0}', space=sflag, size = 0x4, scoped, tag = 'scoped memory for teacher_forward.1']
    #allocation21 [shape = 'u8[262144]{0}', space=vmem, size = 0x40000, scoped, tag = 'input window, operand 16, single buffered']
    #allocation22 [shape = 'u8[1024]{0}', space=vmem, size = 0x400, scoped, tag = 'input window, operand 17, single buffered']
    #allocation23 [shape = 's32[1]{0}', space=sflag, size = 0x4, scoped, tag = 'scoped memory for teacher_forward.1']
    #allocation24 [shape = 'u8[65536]{0}', space=vmem, size = 0x10000, scoped, tag = 'input window, operand 18, single buffered']
    #allocation25 [shape = 'u8[1024]{0}', space=vmem, size = 0x400, scoped, tag = 'input window, operand 19, single buffered']
    #allocation26 [shape = 's32[1]{0}', space=sflag, size = 0x4, scoped, tag = 'scoped memory for teacher_forward.1']
    #allocation27 [shape = 'u8[262144]{0}', space=vmem, size = 0x40000, scoped, tag = 'input window, operand 20, single buffered']
    #allocation28 [shape = 'u8[2048]{0}', space=vmem, size = 0x800, scoped, tag = 'input window, operand 21, single buffered']
    #allocation29 [shape = 's32[1]{0}', space=sflag, size = 0x4, scoped, tag = 'scoped memory for teacher_forward.1']
    #allocation30 [shape = 'u8[262144]{0}', space=vmem, size = 0x40000, scoped, tag = 'input window, operand 22, single buffered']
    #allocation31 [shape = 'u8[1024]{0}', space=vmem, size = 0x400, scoped, tag = 'input window, operand 23, single buffered']
    #allocation32 [shape = 's32[1]{0}', space=sflag, size = 0x4, scoped, tag = 'scoped memory for teacher_forward.1']
    #allocation33 [shape = 'u8[32768]{0}', space=vmem, size = 0x8000, scoped, tag = 'input window, operand 24, single buffered']
    #allocation34 [shape = 'u8[512]{0}', space=vmem, size = 0x400, scoped, tag = 'input window, operand 25, single buffered']
    #allocation35 [shape = 's32[1]{0}', space=sflag, size = 0x4, scoped, tag = 'scoped memory for teacher_forward.1']
    #allocation36 [shape = 'u8[32768]{0}', space=vmem, size = 0x8000, scoped, tag = 'input window, operand 26, single buffered']
    #allocation37 [shape = 'u8[512]{0}', space=vmem, size = 0x400, scoped, tag = 'input window, operand 27, single buffered']
    #allocation38 [shape = 's32[1]{0}', space=sflag, size = 0x4, scoped, tag = 'scoped memory for teacher_forward.1']
    %75 = vsyncpa [#allocation3], 0
    %76 = vsyncpa [#allocation5], 0
    %77 = vsyncpa [#allocation8], 0
    %78 = vsyncpa [#allocation11], 0
    %79 = vsyncpa [#allocation14], 0
    %80 = vsyncpa [#allocation17], 0
    %81 = vsyncpa [#allocation20], 0
    %82 = vsyncpa [#allocation23], 0
    %83 = vsyncpa [#allocation26], 0
    %84 = vsyncpa [#allocation29], 0
    %85 = vsyncpa [#allocation32], 0
    %86 = vsyncpa [#allocation35], 0
    %87 = vsyncpa [#allocation38], 0
    // Predicated region
    $region2: #{teacher_forward.1} parent=1 // pred_check
      _
    $region3: #{teacher_forward.1} parent=1 // pred_check_branch
      %89 = sbr.rel (0) target = $region5
    $region4: #{teacher_forward.1} parent=1 // pred_region
      _
    $region5: #{teacher_forward.1} parent=1 // pred_fallthru
      _
    // Predicated region
    $region6: #{teacher_forward.1} parent=1 // pred_check
      _
    $region7: #{teacher_forward.1} parent=1 // pred_check_branch
      %91 = sbr.rel (0) target = $region9
    $region8: #{teacher_forward.1} parent=1 // pred_region
      _
    $region9: #{teacher_forward.1} parent=1 // pred_fallthru
      _
    // Predicated region
    $region10: #{teacher_forward.1} parent=1 // pred_check
      _
    $region11: #{teacher_forward.1} parent=1 // pred_check_branch
      %93 = sbr.rel (0) target = $region13
    $region12: #{teacher_forward.1} parent=1 // pred_region
      %s95 = ssub.s32 8192, 8192
      %96 = vsyncadd [#allocation3], %s95
      %s97 = sshll.u32 [#allocation2], 4
      %s98 = int_to_ptr.vmem [resolvable:$true] %s97
      %103 = dma.hbm_to_vmem [thread:$0]  %s5, 8192, %s98, [#allocation3], 256, 256, 16
    $region13: #{teacher_forward.1} parent=1 // pred_fallthru
      _
    // Predicated region
    $region14: #{teacher_forward.1} parent=1 // pred_check
      _
    $region15: #{teacher_forward.1} parent=1 // pred_check_branch
      %105 = sbr.rel (0) target = $region17
    $region16: #{teacher_forward.1} parent=1 // pred_region
      %s107 = ssub.s32 64, 64
      %108 = vsyncadd [#allocation5], %s107
      %s110 = sshll.u32 [#allocation4], 4
      %s111 = int_to_ptr.vmem [resolvable:$true] %s110
      %113 = dma.hbm_to_vmem [thread:$0]  %s7, 64, %s111, [#allocation5]
    $region17: #{teacher_forward.1} parent=1 // pred_fallthru
      _
    // Predicated region
    $region18: #{teacher_forward.1} parent=1 // pred_check
      _
    $region19: #{teacher_forward.1} parent=1 // pred_check_branch
      %115 = sbr.rel (0) target = $region21
    $region20: #{teacher_forward.1} parent=1 // pred_region
      %s117 = ssub.s32 8192, 8192
      %118 = vsyncadd [#allocation5], %s117
      %s119 = sshll.u32 [#allocation6], 4
      %s120 = int_to_ptr.vmem [resolvable:$true] %s119
      %125 = dma.hbm_to_vmem [thread:$0]  %s9, 8192, %s120, [#allocation5], 128, 128, 8
    $region21: #{teacher_forward.1} parent=1 // pred_fallthru
      _
    // Predicated region
    $region22: #{teacher_forward.1} parent=1 // pred_check
      _
    $region23: #{teacher_forward.1} parent=1 // pred_check_branch
      %127 = sbr.rel (0) target = $region25
    $region24: #{teacher_forward.1} parent=1 // pred_region
      _
    $region25: #{teacher_forward.1} parent=1 // pred_fallthru
      _
    // Predicated region
    $region26: #{teacher_forward.1} parent=1 // pred_check
      _
    $region27: #{teacher_forward.1} parent=1 // pred_check_branch
      %129 = sbr.rel (0) target = $region29
    $region28: #{teacher_forward.1} parent=1 // pred_region
      %s131 = ssub.s32 2048, 2048
      %132 = vsyncadd [#allocation8], %s131
      %s133 = sshll.u32 [#allocation7], 4
      %s134 = int_to_ptr.vmem [resolvable:$true] %s133
      %139 = dma.hbm_to_vmem [thread:$0]  %s13, 2048, %s134, [#allocation8], 64, 64, 4
    $region29: #{teacher_forward.1} parent=1 // pred_fallthru
      _
    // Predicated region
    $region30: #{teacher_forward.1} parent=1 // pred_check
      _
    $region31: #{teacher_forward.1} parent=1 // pred_check_branch
      %141 = sbr.rel (0) target = $region33
    $region32: #{teacher_forward.1} parent=1 // pred_region
      %s143 = ssub.s32 16, 16
      %144 = vsyncadd [#allocation8], %s143
      %s146 = sshll.u32 [#allocation9], 4
      %s147 = int_to_ptr.vmem [resolvable:$true] %s146
      %149 = dma.hbm_to_vmem [thread:$0]  %s15, 16, %s147, [#allocation8]
    $region33: #{teacher_forward.1} parent=1 // pred_fallthru
      _
    // Predicated region
    $region34: #{teacher_forward.1} parent=1 // pred_check
      _
    $region35: #{teacher_forward.1} parent=1 // pred_check_branch
      %151 = sbr.rel (0) target = $region37
    $region36: #{teacher_forward.1} parent=1 // pred_region
      %s153 = ssub.s32 2048, 2048
      %154 = vsyncadd [#allocation11], %s153
      %s155 = sshll.u32 [#allocation10], 4
      %s156 = int_to_ptr.vmem [resolvable:$true] %s155
      %161 = dma.hbm_to_vmem [thread:$0]  %s17, 2048, %s156, [#allocation11], 128, 128, 8
    $region37: #{teacher_forward.1} parent=1 // pred_fallthru
      _
    // Predicated region
    $region38: #{teacher_forward.1} parent=1 // pred_check
      _
    $region39: #{teacher_forward.1} parent=1 // pred_check_branch
      %163 = sbr.rel (0) target = $region41
    $region40: #{teacher_forward.1} parent=1 // pred_region
      %s165 = ssub.s32 32, 32
      %166 = vsyncadd [#allocation11], %s165
      %s168 = sshll.u32 [#allocation12], 4
      %s169 = int_to_ptr.vmem [resolvable:$true] %s168
      %171 = dma.hbm_to_vmem [thread:$0]  %s19, 32, %s169, [#allocation11]
    $region41: #{teacher_forward.1} parent=1 // pred_fallthru
      _
    // Predicated region
    $region42: #{teacher_forward.1} parent=1 // pred_check
      _
    $region43: #{teacher_forward.1} parent=1 // pred_check_branch
      %173 = sbr.rel (0) target = $region45
    $region44: #{teacher_forward.1} parent=1 // pred_region
      %s175 = ssub.s32 2048, 2048
      %176 = vsyncadd [#allocation14], %s175
      %s177 = sshll.u32 [#allocation13], 4
      %s178 = int_to_ptr.vmem [resolvable:$true] %s177
      %183 = dma.hbm_to_vmem [thread:$0]  %s21, 2048, %s178, [#allocation14], 128, 128, 8
    $region45: #{teacher_forward.1} parent=1 // pred_fallthru
      _
    // Predicated region
    $region46: #{teacher_forward.1} parent=1 // pred_check
      _
    $region47: #{teacher_forward.1} parent=1 // pred_check_branch
      %185 = sbr.rel (0) target = $region49
    $region48: #{teacher_forward.1} parent=1 // pred_region
      %s187 = ssub.s32 32, 32
      %188 = vsyncadd [#allocation14], %s187
      %s190 = sshll.u32 [#allocation15], 4
      %s191 = int_to_ptr.vmem [resolvable:$true] %s190
      %193 = dma.hbm_to_vmem [thread:$0]  %s23, 32, %s191, [#allocation14]
    $region49: #{teacher_forward.1} parent=1 // pred_fallthru
      _
    // Predicated region
    $region50: #{teacher_forward.1} parent=1 // pred_check
      _
    $region51: #{teacher_forward.1} parent=1 // pred_check_branch
      %195 = sbr.rel (0) target = $region53
    $region52: #{teacher_forward.1} parent=1 // pred_region
      _
    $region53: #{teacher_forward.1} parent=1 // pred_fallthru
      _
    // Predicated region
    $region54: #{teacher_forward.1} parent=1 // pred_check
      _
    $region55: #{teacher_forward.1} parent=1 // pred_check_branch
      %197 = sbr.rel (0) target = $region57
    $region56: #{teacher_forward.1} parent=1 // pred_region
      %s199 = ssub.s32 32, 32
      %200 = vsyncadd [#allocation17], %s199
      %s202 = sshll.u32 [#allocation16], 4
      %s203 = int_to_ptr.vmem [resolvable:$true] %s202
      %205 = dma.hbm_to_vmem [thread:$0]  %s27, 32, %s203, [#allocation17]
    $region57: #{teacher_forward.1} parent=1 // pred_fallthru
      _
    // Predicated region
    $region58: #{teacher_forward.1} parent=1 // pred_check
      _
    $region59: #{teacher_forward.1} parent=1 // pred_check_branch
      %207 = sbr.rel (0) target = $region61
    $region60: #{teacher_forward.1} parent=1 // pred_region
      %s209 = ssub.s32 8192, 8192
      %210 = vsyncadd [#allocation17], %s209
      %s211 = sshll.u32 [#allocation18], 4
      %s212 = int_to_ptr.vmem [resolvable:$true] %s211
      %217 = dma.hbm_to_vmem [thread:$0]  %s29, 8192, %s212, [#allocation17], 256, 256, 16
    $region61: #{teacher_forward.1} parent=1 // pred_fallthru
      _
    // Predicated region
    $region62: #{teacher_forward.1} parent=1 // pred_check
      _
    $region63: #{teacher_forward.1} parent=1 // pred_check_branch
      %219 = sbr.rel (0) target = $region65
    $region64: #{teacher_forward.1} parent=1 // pred_region
      %s221 = ssub.s32 64, 64
      %222 = vsyncadd [#allocation20], %s221
      %s224 = sshll.u32 [#allocation19], 4
      %s225 = int_to_ptr.vmem [resolvable:$true] %s224
      %227 = dma.hbm_to_vmem [thread:$0]  %s31, 64, %s225, [#allocation20]
    $region65: #{teacher_forward.1} parent=1 // pred_fallthru
      _
    // Predicated region
    $region66: #{teacher_forward.1} parent=1 // pred_check
      _
    $region67: #{teacher_forward.1} parent=1 // pred_check_branch
      %229 = sbr.rel (0) target = $region69
    $region68: #{teacher_forward.1} parent=1 // pred_region
      %s231 = ssub.s32 8192, 8192
      %232 = vsyncadd [#allocation20], %s231
      %s233 = sshll.u32 [#allocation21], 4
      %s234 = int_to_ptr.vmem [resolvable:$true] %s233
      %239 = dma.hbm_to_vmem [thread:$0]  %s33, 8192, %s234, [#allocation20], 128, 128, 8
    $region69: #{teacher_forward.1} parent=1 // pred_fallthru
      _
    // Predicated region
    $region70: #{teacher_forward.1} parent=1 // pred_check
      _
    $region71: #{teacher_forward.1} parent=1 // pred_check_branch
      %241 = sbr.rel (0) target = $region73
    $region72: #{teacher_forward.1} parent=1 // pred_region
      %s243 = ssub.s32 32, 32
      %244 = vsyncadd [#allocation23], %s243
      %s246 = sshll.u32 [#allocation22], 4
      %s247 = int_to_ptr.vmem [resolvable:$true] %s246
      %249 = dma.hbm_to_vmem [thread:$0]  %s35, 32, %s247, [#allocation23]
    $region73: #{teacher_forward.1} parent=1 // pred_fallthru
      _
    // Predicated region
    $region74: #{teacher_forward.1} parent=1 // pred_check
      _
    $region75: #{teacher_forward.1} parent=1 // pred_check_branch
      %251 = sbr.rel (0) target = $region77
    $region76: #{teacher_forward.1} parent=1 // pred_region
      %s253 = ssub.s32 2048, 2048
      %254 = vsyncadd [#allocation23], %s253
      %s255 = sshll.u32 [#allocation24], 4
      %s256 = int_to_ptr.vmem [resolvable:$true] %s255
      %261 = dma.hbm_to_vmem [thread:$0]  %s37, 2048, %s256, [#allocation23], 128, 128, 8
    $region77: #{teacher_forward.1} parent=1 // pred_fallthru
      _
    // Predicated region
    $region78: #{teacher_forward.1} parent=1 // pred_check
      _
    $region79: #{teacher_forward.1} parent=1 // pred_check_branch
      %263 = sbr.rel (0) target = $region81
    $region80: #{teacher_forward.1} parent=1 // pred_region
      %s265 = ssub.s32 32, 32
      %266 = vsyncadd [#allocation26], %s265
      %s268 = sshll.u32 [#allocation25], 4
      %s269 = int_to_ptr.vmem [resolvable:$true] %s268
      %271 = dma.hbm_to_vmem [thread:$0]  %s39, 32, %s269, [#allocation26]
    $region81: #{teacher_forward.1} parent=1 // pred_fallthru
      _
    // Predicated region
    $region82: #{teacher_forward.1} parent=1 // pred_check
      _
    $region83: #{teacher_forward.1} parent=1 // pred_check_branch
      %273 = sbr.rel (0) target = $region85
    $region84: #{teacher_forward.1} parent=1 // pred_region
      %s275 = ssub.s32 8192, 8192
      %276 = vsyncadd [#allocation26], %s275
      %s277 = sshll.u32 [#allocation27], 4
      %s278 = int_to_ptr.vmem [resolvable:$true] %s277
      %283 = dma.hbm_to_vmem [thread:$0]  %s41, 8192, %s278, [#allocation26], 256, 256, 16
    $region85: #{teacher_forward.1} parent=1 // pred_fallthru
      _
    // Predicated region
    $region86: #{teacher_forward.1} parent=1 // pred_check
      _
    $region87: #{teacher_forward.1} parent=1 // pred_check_branch
      %285 = sbr.rel (0) target = $region89
    $region88: #{teacher_forward.1} parent=1 // pred_region
      %s287 = ssub.s32 64, 64
      %288 = vsyncadd [#allocation29], %s287
      %s290 = sshll.u32 [#allocation28], 4
      %s291 = int_to_ptr.vmem [resolvable:$true] %s290
      %293 = dma.hbm_to_vmem [thread:$0]  %s43, 64, %s291, [#allocation29]
    $region89: #{teacher_forward.1} parent=1 // pred_fallthru
      _
    // Predicated region
    $region90: #{teacher_forward.1} parent=1 // pred_check
      _
    $region91: #{teacher_forward.1} parent=1 // pred_check_branch
      %295 = sbr.rel (0) target = $region93
    $region92: #{teacher_forward.1} parent=1 // pred_region
      %s297 = ssub.s32 8192, 8192
      %298 = vsyncadd [#allocation29], %s297
      %s299 = sshll.u32 [#allocation30], 4
      %s300 = int_to_ptr.vmem [resolvable:$true] %s299
      %305 = dma.hbm_to_vmem [thread:$0]  %s45, 8192, %s300, [#allocation29], 128, 128, 8
    $region93: #{teacher_forward.1} parent=1 // pred_fallthru
      _
    // Predicated region
    $region94: #{teacher_forward.1} parent=1 // pred_check
      _
    $region95: #{teacher_forward.1} parent=1 // pred_check_branch
      %307 = sbr.rel (0) target = $region97
    $region96: #{teacher_forward.1} parent=1 // pred_region
      %s309 = ssub.s32 32, 32
      %310 = vsyncadd [#allocation32], %s309
      %s312 = sshll.u32 [#allocation31], 4
      %s313 = int_to_ptr.vmem [resolvable:$true] %s312
      %315 = dma.hbm_to_vmem [thread:$0]  %s47, 32, %s313, [#allocation32]
    $region97: #{teacher_forward.1} parent=1 // pred_fallthru
      _
    // Predicated region
    $region98: #{teacher_forward.1} parent=1 // pred_check
      _
    $region99: #{teacher_forward.1} parent=1 // pred_check_branch
      %317 = sbr.rel (0) target = $region101
    $region100: #{teacher_forward.1} parent=1 // pred_region
      %s319 = ssub.s32 1024, 1024
      %320 = vsyncadd [#allocation32], %s319
      %s321 = sshll.u32 [#allocation33], 4
      %s322 = int_to_ptr.vmem [resolvable:$true] %s321
      %327 = dma.hbm_to_vmem [thread:$0]  %s49, 1024, %s322, [#allocation32], 64, 64, 4
    $region101: #{teacher_forward.1} parent=1 // pred_fallthru
      _
    // Predicated region
    $region102: #{teacher_forward.1} parent=1 // pred_check
      _
    $region103: #{teacher_forward.1} parent=1 // pred_check_branch
      %329 = sbr.rel (0) target = $region105
    $region104: #{teacher_forward.1} parent=1 // pred_region
      %s331 = ssub.s32 16, 16
      %332 = vsyncadd [#allocation35], %s331
      %s334 = sshll.u32 [#allocation34], 4
      %s335 = int_to_ptr.vmem [resolvable:$true] %s334
      %337 = dma.hbm_to_vmem [thread:$0]  %s51, 16, %s335, [#allocation35]
    $region105: #{teacher_forward.1} parent=1 // pred_fallthru
      _
    // Predicated region
    $region106: #{teacher_forward.1} parent=1 // pred_check
      _
    $region107: #{teacher_forward.1} parent=1 // pred_check_branch
      %339 = sbr.rel (0) target = $region109
    $region108: #{teacher_forward.1} parent=1 // pred_region
      %s341 = ssub.s32 1024, 1024
      %342 = vsyncadd [#allocation35], %s341
      %s343 = sshll.u32 [#allocation36], 4
      %s344 = int_to_ptr.vmem [resolvable:$true] %s343
      %349 = dma.hbm_to_vmem [thread:$0]  %s53, 1024, %s344, [#allocation35], 64, 64, 4
    $region109: #{teacher_forward.1} parent=1 // pred_fallthru
      _
    // Predicated region
    $region110: #{teacher_forward.1} parent=1 // pred_check
      _
    $region111: #{teacher_forward.1} parent=1 // pred_check_branch
      %351 = sbr.rel (0) target = $region113
    $region112: #{teacher_forward.1} parent=1 // pred_region
      %s353 = ssub.s32 16, 16
      %354 = vsyncadd [#allocation38], %s353
      %s356 = sshll.u32 [#allocation37], 4
      %s357 = int_to_ptr.vmem [resolvable:$true] %s356
      %359 = dma.hbm_to_vmem [thread:$0]  %s55, 16, %s357, [#allocation38]
    $region113: #{teacher_forward.1} parent=1 // pred_fallthru
      _
    // Predicated region
    $region114: #{teacher_forward.1} parent=1 // pred_check
      _
    $region115: #{teacher_forward.1} parent=1 // pred_check_branch
      %361 = sbr.rel (0) target = $region117
    $region116: #{teacher_forward.1} parent=1 // pred_region
      %362 = dma.done [#allocation3], 8192
    $region117: #{teacher_forward.1} parent=1 // pred_fallthru
      _
    // Predicated region
    $region118: #{teacher_forward.1} parent=1 // pred_check
      _
    $region119: #{teacher_forward.1} parent=1 // pred_check_branch
      %364 = sbr.rel (0) target = $region121
    $region120: #{teacher_forward.1} parent=1 // pred_region
      %365 = dma.done [#allocation5], 64
    $region121: #{teacher_forward.1} parent=1 // pred_fallthru
      _
    // Predicated region
    $region122: #{teacher_forward.1} parent=1 // pred_check
      _
    $region123: #{teacher_forward.1} parent=1 // pred_check_branch
      %367 = sbr.rel (0) target = $region125
    $region124: #{teacher_forward.1} parent=1 // pred_region
      %368 = dma.done [#allocation5], 8192
    $region125: #{teacher_forward.1} parent=1 // pred_fallthru
      _
    // Predicated region
    $region126: #{teacher_forward.1} parent=1 // pred_check
      _
    $region127: #{teacher_forward.1} parent=1 // pred_check_branch
      %370 = sbr.rel (0) target = $region129
    $region128: #{teacher_forward.1} parent=1 // pred_region
      %371 = dma.done [#allocation8], 2048
    $region129: #{teacher_forward.1} parent=1 // pred_fallthru
      _
    // Predicated region
    $region130: #{teacher_forward.1} parent=1 // pred_check
      _
    $region131: #{teacher_forward.1} parent=1 // pred_check_branch
      %373 = sbr.rel (0) target = $region133
    $region132: #{teacher_forward.1} parent=1 // pred_region
      %374 = dma.done [#allocation8], 16
    $region133: #{teacher_forward.1} parent=1 // pred_fallthru
      _
    // Predicated region
    $region134: #{teacher_forward.1} parent=1 // pred_check
      _
    $region135: #{teacher_forward.1} parent=1 // pred_check_branch
      %376 = sbr.rel (0) target = $region137
    $region136: #{teacher_forward.1} parent=1 // pred_region
      %377 = dma.done [#allocation11], 2048
    $region137: #{teacher_forward.1} parent=1 // pred_fallthru
      _
    // Predicated region
    $region138: #{teacher_forward.1} parent=1 // pred_check
      _
    $region139: #{teacher_forward.1} parent=1 // pred_check_branch
      %379 = sbr.rel (0) target = $region141
    $region140: #{teacher_forward.1} parent=1 // pred_region
      %380 = dma.done [#allocation11], 32
    $region141: #{teacher_forward.1} parent=1 // pred_fallthru
      _
    // Predicated region
    $region142: #{teacher_forward.1} parent=1 // pred_check
      _
    $region143: #{teacher_forward.1} parent=1 // pred_check_branch
      %382 = sbr.rel (0) target = $region145
    $region144: #{teacher_forward.1} parent=1 // pred_region
      %383 = dma.done [#allocation14], 2048
    $region145: #{teacher_forward.1} parent=1 // pred_fallthru
      _
    // Predicated region
    $region146: #{teacher_forward.1} parent=1 // pred_check
      _
    $region147: #{teacher_forward.1} parent=1 // pred_check_branch
      %385 = sbr.rel (0) target = $region149
    $region148: #{teacher_forward.1} parent=1 // pred_region
      %386 = dma.done [#allocation14], 32
    $region149: #{teacher_forward.1} parent=1 // pred_fallthru
      _
    // Predicated region
    $region150: #{teacher_forward.1} parent=1 // pred_check
      _
    $region151: #{teacher_forward.1} parent=1 // pred_check_branch
      %388 = sbr.rel (0) target = $region153
    $region152: #{teacher_forward.1} parent=1 // pred_region
      %389 = dma.done [#allocation17], 32
    $region153: #{teacher_forward.1} parent=1 // pred_fallthru
      _
    // Predicated region
    $region154: #{teacher_forward.1} parent=1 // pred_check
      _
    $region155: #{teacher_forward.1} parent=1 // pred_check_branch
      %391 = sbr.rel (0) target = $region157
    $region156: #{teacher_forward.1} parent=1 // pred_region
      %392 = dma.done [#allocation17], 8192
    $region157: #{teacher_forward.1} parent=1 // pred_fallthru
      _
    // Predicated region
    $region158: #{teacher_forward.1} parent=1 // pred_check
      _
    $region159: #{teacher_forward.1} parent=1 // pred_check_branch
      %394 = sbr.rel (0) target = $region161
    $region160: #{teacher_forward.1} parent=1 // pred_region
      %395 = dma.done [#allocation20], 64
    $region161: #{teacher_forward.1} parent=1 // pred_fallthru
      _
    // Predicated region
    $region162: #{teacher_forward.1} parent=1 // pred_check
      _
    $region163: #{teacher_forward.1} parent=1 // pred_check_branch
      %397 = sbr.rel (0) target = $region165
    $region164: #{teacher_forward.1} parent=1 // pred_region
      %398 = dma.done [#allocation20], 8192
    $region165: #{teacher_forward.1} parent=1 // pred_fallthru
      _
    // Predicated region
    $region166: #{teacher_forward.1} parent=1 // pred_check
      _
    $region167: #{teacher_forward.1} parent=1 // pred_check_branch
      %400 = sbr.rel (0) target = $region169
    $region168: #{teacher_forward.1} parent=1 // pred_region
      %401 = dma.done [#allocation23], 32
    $region169: #{teacher_forward.1} parent=1 // pred_fallthru
      _
    // Predicated region
    $region170: #{teacher_forward.1} parent=1 // pred_check
      _
    $region171: #{teacher_forward.1} parent=1 // pred_check_branch
      %403 = sbr.rel (0) target = $region173
    $region172: #{teacher_forward.1} parent=1 // pred_region
      %404 = dma.done [#allocation23], 2048
    $region173: #{teacher_forward.1} parent=1 // pred_fallthru
      _
    // Predicated region
    $region174: #{teacher_forward.1} parent=1 // pred_check
      _
    $region175: #{teacher_forward.1} parent=1 // pred_check_branch
      %406 = sbr.rel (0) target = $region177
    $region176: #{teacher_forward.1} parent=1 // pred_region
      %407 = dma.done [#allocation26], 32
    $region177: #{teacher_forward.1} parent=1 // pred_fallthru
      _
    // Predicated region
    $region178: #{teacher_forward.1} parent=1 // pred_check
      _
    $region179: #{teacher_forward.1} parent=1 // pred_check_branch
      %409 = sbr.rel (0) target = $region181
    $region180: #{teacher_forward.1} parent=1 // pred_region
      %410 = dma.done [#allocation26], 8192
    $region181: #{teacher_forward.1} parent=1 // pred_fallthru
      _
    // Predicated region
    $region182: #{teacher_forward.1} parent=1 // pred_check
      _
    $region183: #{teacher_forward.1} parent=1 // pred_check_branch
      %412 = sbr.rel (0) target = $region185
    $region184: #{teacher_forward.1} parent=1 // pred_region
      %413 = dma.done [#allocation29], 64
    $region185: #{teacher_forward.1} parent=1 // pred_fallthru
      _
    // Predicated region
    $region186: #{teacher_forward.1} parent=1 // pred_check
      _
    $region187: #{teacher_forward.1} parent=1 // pred_check_branch
      %415 = sbr.rel (0) target = $region189
    $region188: #{teacher_forward.1} parent=1 // pred_region
      %416 = dma.done [#allocation29], 8192
    $region189: #{teacher_forward.1} parent=1 // pred_fallthru
      _
    // Predicated region
    $region190: #{teacher_forward.1} parent=1 // pred_check
      _
    $region191: #{teacher_forward.1} parent=1 // pred_check_branch
      %418 = sbr.rel (0) target = $region193
    $region192: #{teacher_forward.1} parent=1 // pred_region
      %419 = dma.done [#allocation32], 32
    $region193: #{teacher_forward.1} parent=1 // pred_fallthru
      _
    // Predicated region
    $region194: #{teacher_forward.1} parent=1 // pred_check
      _
    $region195: #{teacher_forward.1} parent=1 // pred_check_branch
      %421 = sbr.rel (0) target = $region197
    $region196: #{teacher_forward.1} parent=1 // pred_region
      %422 = dma.done [#allocation32], 1024
    $region197: #{teacher_forward.1} parent=1 // pred_fallthru
      _
    // Predicated region
    $region198: #{teacher_forward.1} parent=1 // pred_check
      _
    $region199: #{teacher_forward.1} parent=1 // pred_check_branch
      %424 = sbr.rel (0) target = $region201
    $region200: #{teacher_forward.1} parent=1 // pred_region
      %425 = dma.done [#allocation35], 16
    $region201: #{teacher_forward.1} parent=1 // pred_fallthru
      _
    // Predicated region
    $region202: #{teacher_forward.1} parent=1 // pred_check
      _
    $region203: #{teacher_forward.1} parent=1 // pred_check_branch
      %427 = sbr.rel (0) target = $region205
    $region204: #{teacher_forward.1} parent=1 // pred_region
      %428 = dma.done [#allocation35], 1024
    $region205: #{teacher_forward.1} parent=1 // pred_fallthru
      _
    // Predicated region
    $region206: #{teacher_forward.1} parent=1 // pred_check
      _
    $region207: #{teacher_forward.1} parent=1 // pred_check_branch
      %430 = sbr.rel (0) target = $region209
    $region208: #{teacher_forward.1} parent=1 // pred_region
      %431 = dma.done [#allocation38], 16
    $region209: #{teacher_forward.1} parent=1 // pred_fallthru
      _
    %v433 = vld [vmem:[%s1] sm:$0xff]
    %v434 = vld [vmem:[%s1 + $0x8] sm:$0xff]
    %v435 = vpack.c.bf16 %v433, %v433
    %v436 = vpack.c.bf16 %v434, %v434
    %v437 = vld [vmem:[#allocation2] sm:$0xff]
    %v438 = vld [vmem:[#allocation2 + $0x8] sm:$0xff]
    %v439 = vld [vmem:[#allocation2 + $0x10] sm:$0xff]
    %v440 = vld [vmem:[#allocation2 + $0x18] sm:$0xff]
    %v441 = vld [vmem:[#allocation2 + $0x20] sm:$0xff]
    %v442 = vld [vmem:[#allocation2 + $0x28] sm:$0xff]
    %v443 = vld [vmem:[#allocation2 + $0x30] sm:$0xff]
    %v444 = vld [vmem:[#allocation2 + $0x38] sm:$0xff]
    %v445 = vld [vmem:[#allocation2 + $0x40] sm:$0xff]
    %v446 = vld [vmem:[#allocation2 + $0x48] sm:$0xff]
    %v447 = vld [vmem:[#allocation2 + $0x50] sm:$0xff]
    %v448 = vld [vmem:[#allocation2 + $0x58] sm:$0xff]
    %v449 = vld [vmem:[#allocation2 + $0x60] sm:$0xff]
    %v450 = vld [vmem:[#allocation2 + $0x68] sm:$0xff]
    %v451 = vld [vmem:[#allocation2 + $0x70] sm:$0xff]
    %v452 = vld [vmem:[#allocation2 + $0x78] sm:$0xff]
    %v453 = vld [vmem:[#allocation2 + $0x80] sm:$0xff]
    %v454 = vld [vmem:[#allocation2 + $0x88] sm:$0xff]
    %v455 = vld [vmem:[#allocation2 + $0x90] sm:$0xff]
    %v456 = vld [vmem:[#allocation2 + $0x98] sm:$0xff]
    %v457 = vld [vmem:[#allocation2 + $0xa0] sm:$0xff]
    %v458 = vld [vmem:[#allocation2 + $0xa8] sm:$0xff]
    %v459 = vld [vmem:[#allocation2 + $0xb0] sm:$0xff]
    %v460 = vld [vmem:[#allocation2 + $0xb8] sm:$0xff]
    %v461 = vld [vmem:[#allocation2 + $0xc0] sm:$0xff]
    %v462 = vld [vmem:[#allocation2 + $0xc8] sm:$0xff]
    %v463 = vld [vmem:[#allocation2 + $0xd0] sm:$0xff]
    %v464 = vld [vmem:[#allocation2 + $0xd8] sm:$0xff]
    %v465 = vld [vmem:[#allocation2 + $0xe0] sm:$0xff]
    %v466 = vld [vmem:[#allocation2 + $0xe8] sm:$0xff]
    %v467 = vld [vmem:[#allocation2 + $0xf0] sm:$0xff]
    %v468 = vld [vmem:[#allocation2 + $0xf8] sm:$0xff]
    %v469 = vld [vmem:[#allocation2 + $0x100] sm:$0xff]
    %v470 = vld [vmem:[#allocation2 + $0x108] sm:$0xff]
    %v471 = vld [vmem:[#allocation2 + $0x110] sm:$0xff]
    %v472 = vld [vmem:[#allocation2 + $0x118] sm:$0xff]
    %v473 = vld [vmem:[#allocation2 + $0x120] sm:$0xff]
    %v474 = vld [vmem:[#allocation2 + $0x128] sm:$0xff]
    %v475 = vld [vmem:[#allocation2 + $0x130] sm:$0xff]
    %v476 = vld [vmem:[#allocation2 + $0x138] sm:$0xff]
    %v477 = vld [vmem:[#allocation2 + $0x140] sm:$0xff]
    %v478 = vld [vmem:[#allocation2 + $0x148] sm:$0xff]
    %v479 = vld [vmem:[#allocation2 + $0x150] sm:$0xff]
    %v480 = vld [vmem:[#allocation2 + $0x158] sm:$0xff]
    %v481 = vld [vmem:[#allocation2 + $0x160] sm:$0xff]
    %v482 = vld [vmem:[#allocation2 + $0x168] sm:$0xff]
    %v483 = vld [vmem:[#allocation2 + $0x170] sm:$0xff]
    %v484 = vld [vmem:[#allocation2 + $0x178] sm:$0xff]
    %v485 = vld [vmem:[#allocation2 + $0x180] sm:$0xff]
    %v486 = vld [vmem:[#allocation2 + $0x188] sm:$0xff]
    %v487 = vld [vmem:[#allocation2 + $0x190] sm:$0xff]
    %v488 = vld [vmem:[#allocation2 + $0x198] sm:$0xff]
    %v489 = vld [vmem:[#allocation2 + $0x1a0] sm:$0xff]
    %v490 = vld [vmem:[#allocation2 + $0x1a8] sm:$0xff]
    %v491 = vld [vmem:[#allocation2 + $0x1b0] sm:$0xff]
    %v492 = vld [vmem:[#allocation2 + $0x1b8] sm:$0xff]
    %v493 = vld [vmem:[#allocation2 + $0x1c0] sm:$0xff]
    %v494 = vld [vmem:[#allocation2 + $0x1c8] sm:$0xff]
    %v495 = vld [vmem:[#allocation2 + $0x1d0] sm:$0xff]
    %v496 = vld [vmem:[#allocation2 + $0x1d8] sm:$0xff]
    %v497 = vld [vmem:[#allocation2 + $0x1e0] sm:$0xff]
    %v498 = vld [vmem:[#allocation2 + $0x1e8] sm:$0xff]
    %v499 = vld [vmem:[#allocation2 + $0x1f0] sm:$0xff]
    %v500 = vld [vmem:[#allocation2 + $0x1f8] sm:$0xff]
    %v501 = vld [vmem:[#allocation4] sm:$0xf]
    %v503 = vlaneseq
    %v504 = vshrl.u32 %v503, 7
    %v505 = vsub.s32 0, %v504
    %v506 = vrot.slane %v501, %v505
    %v507 = vlaneseq
    %v508 = vshrl.u32 %v507, 7
    %v509 = vsub.s32 1, %v508
    %v510 = vrot.slane %v501, %v509
    %v511 = vlaneseq
    %v512 = vshrl.u32 %v511, 7
    %v513 = vsub.s32 2, %v512
    %v514 = vrot.slane %v501, %v513
    %v515 = vlaneseq
    %v516 = vshrl.u32 %v515, 7
    %v517 = vsub.s32 3, %v516
    %v518 = vrot.slane %v501, %v517
    %v587 = vunpack.c.l.b16 %v437
    %v588 = vunpack.c.h.b16 %v437
    %v589 = vunpack.c.l.b16 %v438
    %v590 = vunpack.c.h.b16 %v438
    %v591 = vunpack.c.l.b16 %v439
    %v592 = vunpack.c.h.b16 %v439
    %v593 = vunpack.c.l.b16 %v440
    %v594 = vunpack.c.h.b16 %v440
    %v595 = vunpack.c.l.b16 %v441
    %v596 = vunpack.c.h.b16 %v441
    %v597 = vunpack.c.l.b16 %v442
    %v598 = vunpack.c.h.b16 %v442
    %v599 = vunpack.c.l.b16 %v443
    %v600 = vunpack.c.h.b16 %v443
    %v601 = vunpack.c.l.b16 %v444
    %v602 = vunpack.c.h.b16 %v444
    %v603 = vunpack.c.l.b16 %v445
    %v604 = vunpack.c.h.b16 %v445
    %v605 = vunpack.c.l.b16 %v446
    %v606 = vunpack.c.h.b16 %v446
    %v607 = vunpack.c.l.b16 %v447
    %v608 = vunpack.c.h.b16 %v447
    %v609 = vunpack.c.l.b16 %v448
    %v610 = vunpack.c.h.b16 %v448
    %v611 = vunpack.c.l.b16 %v449
    %v612 = vunpack.c.h.b16 %v449
    %v613 = vunpack.c.l.b16 %v450
    %v614 = vunpack.c.h.b16 %v450
    %v615 = vunpack.c.l.b16 %v451
    %v616 = vunpack.c.h.b16 %v451
    %v617 = vunpack.c.l.b16 %v452
    %v618 = vunpack.c.h.b16 %v452
    %v619 = vunpack.c.l.b16 %v453
    %v620 = vunpack.c.h.b16 %v453
    %v621 = vunpack.c.l.b16 %v454
    %v622 = vunpack.c.h.b16 %v454
    %v623 = vunpack.c.l.b16 %v455
    %v624 = vunpack.c.h.b16 %v455
    %v625 = vunpack.c.l.b16 %v456
    %v626 = vunpack.c.h.b16 %v456
    %v627 = vunpack.c.l.b16 %v457
    %v628 = vunpack.c.h.b16 %v457
    %v629 = vunpack.c.l.b16 %v458
    %v630 = vunpack.c.h.b16 %v458
    %v631 = vunpack.c.l.b16 %v459
    %v632 = vunpack.c.h.b16 %v459
    %v633 = vunpack.c.l.b16 %v460
    %v634 = vunpack.c.h.b16 %v460
    %v635 = vunpack.c.l.b16 %v461
    %v636 = vunpack.c.h.b16 %v461
    %v637 = vunpack.c.l.b16 %v462
    %v638 = vunpack.c.h.b16 %v462
    %v639 = vunpack.c.l.b16 %v463
    %v640 = vunpack.c.h.b16 %v463
    %v641 = vunpack.c.l.b16 %v464
    %v642 = vunpack.c.h.b16 %v464
    %v643 = vunpack.c.l.b16 %v465
    %v644 = vunpack.c.h.b16 %v465
    %v645 = vunpack.c.l.b16 %v466
    %v646 = vunpack.c.h.b16 %v466
    %v647 = vunpack.c.l.b16 %v467
    %v648 = vunpack.c.h.b16 %v467
    %v649 = vunpack.c.l.b16 %v468
    %v650 = vunpack.c.h.b16 %v468
    %v651 = vunpack.c.l.b16 %v469
    %v652 = vunpack.c.h.b16 %v469
    %v653 = vunpack.c.l.b16 %v470
    %v654 = vunpack.c.h.b16 %v470
    %v655 = vunpack.c.l.b16 %v471
    %v656 = vunpack.c.h.b16 %v471
    %v657 = vunpack.c.l.b16 %v472
    %v658 = vunpack.c.h.b16 %v472
    %v659 = vunpack.c.l.b16 %v473
    %v660 = vunpack.c.h.b16 %v473
    %v661 = vunpack.c.l.b16 %v474
    %v662 = vunpack.c.h.b16 %v474
    %v663 = vunpack.c.l.b16 %v475
    %v664 = vunpack.c.h.b16 %v475
    %v665 = vunpack.c.l.b16 %v476
    %v666 = vunpack.c.h.b16 %v476
    %v667 = vunpack.c.l.b16 %v477
    %v668 = vunpack.c.h.b16 %v477
    %v669 = vunpack.c.l.b16 %v478
    %v670 = vunpack.c.h.b16 %v478
    %v671 = vunpack.c.l.b16 %v479
    %v672 = vunpack.c.h.b16 %v479
    %v673 = vunpack.c.l.b16 %v480
    %v674 = vunpack.c.h.b16 %v480
    %v675 = vunpack.c.l.b16 %v481
    %v676 = vunpack.c.h.b16 %v481
    %v677 = vunpack.c.l.b16 %v482
    %v678 = vunpack.c.h.b16 %v482
    %v679 = vunpack.c.l.b16 %v483
    %v680 = vunpack.c.h.b16 %v483
    %v681 = vunpack.c.l.b16 %v484
    %v682 = vunpack.c.h.b16 %v484
    %v683 = vunpack.c.l.b16 %v485
    %v684 = vunpack.c.h.b16 %v485
    %v685 = vunpack.c.l.b16 %v486
    %v686 = vunpack.c.h.b16 %v486
    %v687 = vunpack.c.l.b16 %v487
    %v688 = vunpack.c.h.b16 %v487
    %v689 = vunpack.c.l.b16 %v488
    %v690 = vunpack.c.h.b16 %v488
    %v691 = vunpack.c.l.b16 %v489
    %v692 = vunpack.c.h.b16 %v489
    %v693 = vunpack.c.l.b16 %v490
    %v694 = vunpack.c.h.b16 %v490
    %v695 = vunpack.c.l.b16 %v491
    %v696 = vunpack.c.h.b16 %v491
    %v697 = vunpack.c.l.b16 %v492
    %v698 = vunpack.c.h.b16 %v492
    %v699 = vunpack.c.l.b16 %v493
    %v700 = vunpack.c.h.b16 %v493
    %v701 = vunpack.c.l.b16 %v494
    %v702 = vunpack.c.h.b16 %v494
    %v703 = vunpack.c.l.b16 %v495
    %v704 = vunpack.c.h.b16 %v495
    %v705 = vunpack.c.l.b16 %v496
    %v706 = vunpack.c.h.b16 %v496
    %v707 = vunpack.c.l.b16 %v497
    %v708 = vunpack.c.h.b16 %v497
    %v709 = vunpack.c.l.b16 %v498
    %v710 = vunpack.c.h.b16 %v498
    %v711 = vunpack.c.l.b16 %v499
    %v712 = vunpack.c.h.b16 %v499
    %v713 = vunpack.c.l.b16 %v500
    %v714 = vunpack.c.h.b16 %v500
    %v715 = vpack.c.b16 %v591, %v587
    %v716 = vpack.c.b16 %v592, %v588
    %v717 = vpack.c.b16 %v593, %v589
    %v718 = vpack.c.b16 %v594, %v590
    %v719 = vpack.c.b16 %v599, %v595
    %v720 = vpack.c.b16 %v600, %v596
    %v721 = vpack.c.b16 %v601, %v597
    %v722 = vpack.c.b16 %v602, %v598
    %v723 = vpack.c.b16 %v607, %v603
    %v724 = vpack.c.b16 %v608, %v604
    %v725 = vpack.c.b16 %v609, %v605
    %v726 = vpack.c.b16 %v610, %v606
    %v727 = vpack.c.b16 %v615, %v611
    %v728 = vpack.c.b16 %v616, %v612
    %v729 = vpack.c.b16 %v617, %v613
    %v730 = vpack.c.b16 %v618, %v614
    %v731 = vpack.c.b16 %v623, %v619
    %v732 = vpack.c.b16 %v624, %v620
    %v733 = vpack.c.b16 %v625, %v621
    %v734 = vpack.c.b16 %v626, %v622
    %v735 = vpack.c.b16 %v631, %v627
    %v736 = vpack.c.b16 %v632, %v628
    %v737 = vpack.c.b16 %v633, %v629
    %v738 = vpack.c.b16 %v634, %v630
    %v739 = vpack.c.b16 %v639, %v635
    %v740 = vpack.c.b16 %v640, %v636
    %v741 = vpack.c.b16 %v641, %v637
    %v742 = vpack.c.b16 %v642, %v638
    %v743 = vpack.c.b16 %v647, %v643
    %v744 = vpack.c.b16 %v648, %v644
    %v745 = vpack.c.b16 %v649, %v645
    %v746 = vpack.c.b16 %v650, %v646
    %v747 = vpack.c.b16 %v655, %v651
    %v748 = vpack.c.b16 %v656, %v652
    %v749 = vpack.c.b16 %v657, %v653
    %v750 = vpack.c.b16 %v658, %v654
    %v751 = vpack.c.b16 %v663, %v659
    %v752 = vpack.c.b16 %v664, %v660
    %v753 = vpack.c.b16 %v665, %v661
    %v754 = vpack.c.b16 %v666, %v662
    %v755 = vpack.c.b16 %v671, %v667
    %v756 = vpack.c.b16 %v672, %v668
    %v757 = vpack.c.b16 %v673, %v669
    %v758 = vpack.c.b16 %v674, %v670
    %v759 = vpack.c.b16 %v679, %v675
    %v760 = vpack.c.b16 %v680, %v676
    %v761 = vpack.c.b16 %v681, %v677
    %v762 = vpack.c.b16 %v682, %v678
    %v763 = vpack.c.b16 %v687, %v683
    %v764 = vpack.c.b16 %v688, %v684
    %v765 = vpack.c.b16 %v689, %v685
    %v766 = vpack.c.b16 %v690, %v686
    %v767 = vpack.c.b16 %v695, %v691
    %v768 = vpack.c.b16 %v696, %v692
    %v769 = vpack.c.b16 %v697, %v693
    %v770 = vpack.c.b16 %v698, %v694
    %v771 = vpack.c.b16 %v703, %v699
    %v772 = vpack.c.b16 %v704, %v700
    %v773 = vpack.c.b16 %v705, %v701
    %v774 = vpack.c.b16 %v706, %v702
    %v775 = vpack.c.b16 %v711, %v707
    %v776 = vpack.c.b16 %v712, %v708
    %v777 = vpack.c.b16 %v713, %v709
    %v778 = vpack.c.b16 %v714, %v710
    %843 = vmatprep.subr.bf16.mxu0 %v716
    %844 = vmatpush1.bf16.msra.mxu0 %v715
    %845 = vmatprep.subr.bf16.mxu0 %v720
    %846 = vmatpush1.bf16.msra.mxu0 %v719
    %847 = vmatprep.subr.bf16.mxu0 %v724
    %848 = vmatpush1.bf16.msra.mxu0 %v723
    %849 = vmatprep.subr.bf16.mxu0 %v728
    %850 = vmatpush1.bf16.msra.mxu0 %v727
    %851 = vmatprep.subr.bf16.mxu0 %v732
    %852 = vmatpush1.bf16.msra.mxu0 %v731
    %853 = vmatprep.subr.bf16.mxu0 %v736
    %854 = vmatpush1.bf16.msra.mxu0 %v735
    %855 = vmatprep.subr.bf16.mxu0 %v740
    %856 = vmatpush1.bf16.msra.mxu0 %v739
    %857 = vmatprep.subr.bf16.mxu0 %v744
    %858 = vmatpush1.bf16.msra.mxu0 %v743
    %859 = vmatprep.subr.bf16.mxu0 %v748
    %860 = vmatpush1.bf16.msra.mxu0 %v747
    %861 = vmatprep.subr.bf16.mxu0 %v752
    %862 = vmatpush1.bf16.msra.mxu0 %v751
    %863 = vmatprep.subr.bf16.mxu0 %v756
    %864 = vmatpush1.bf16.msra.mxu0 %v755
    %865 = vmatprep.subr.bf16.mxu0 %v760
    %866 = vmatpush1.bf16.msra.mxu0 %v759
    %867 = vmatprep.subr.bf16.mxu0 %v764
    %868 = vmatpush1.bf16.msra.mxu0 %v763
    %869 = vmatprep.subr.bf16.mxu0 %v768
    %870 = vmatpush1.bf16.msra.mxu0 %v767
    %871 = vmatprep.subr.bf16.mxu0 %v772
    %872 = vmatpush1.bf16.msra.mxu0 %v771
    %873 = vmatprep.subr.bf16.mxu0 %v776
    %874 = vmatpush1.bf16.msra.mxu0 %v775
    %875 = vmatprep.mubr.bf16.mxu0 %v436
    %876 = vmatmul.mubr.bf16.gmra.mrb[0].mxu0 %v435
    %v877 = vpop.f32.mrb[0].mxu0
    %v878 = vadd.f32 %v506, %v877
    %v879 = vpop.f32.mrb[0].mxu0
    %v880 = vadd.f32 %v510, %v879
    %v881 = vpop.f32.mrb[0].mxu0
    %v882 = vpop.f32.mrb[0].mxu0
    %883 = vdwg.mxu0
    %884 = vmatprep.subr.bf16.mxu0 %v718
    %885 = vmatpush1.bf16.msra.mxu0 %v717
    %886 = vmatprep.subr.bf16.mxu0 %v722
    %887 = vmatpush1.bf16.msra.mxu0 %v721
    %888 = vmatprep.subr.bf16.mxu0 %v726
    %889 = vmatpush1.bf16.msra.mxu0 %v725
    %890 = vmatprep.subr.bf16.mxu0 %v730
    %891 = vmatpush1.bf16.msra.mxu0 %v729
    %892 = vmatprep.subr.bf16.mxu0 %v734
    %893 = vmatpush1.bf16.msra.mxu0 %v733
    %894 = vmatprep.subr.bf16.mxu0 %v738
    %895 = vmatpush1.bf16.msra.mxu0 %v737
    %896 = vmatprep.subr.bf16.mxu0 %v742
    %897 = vmatpush1.bf16.msra.mxu0 %v741
    %898 = vmatprep.subr.bf16.mxu0 %v746
    %899 = vmatpush1.bf16.msra.mxu0 %v745
    %900 = vmatprep.subr.bf16.mxu0 %v750
    %901 = vmatpush1.bf16.msra.mxu0 %v749
    %902 = vmatprep.subr.bf16.mxu0 %v754
    %903 = vmatpush1.bf16.msra.mxu0 %v753
    %904 = vmatprep.subr.bf16.mxu0 %v758
    %905 = vmatpush1.bf16.msra.mxu0 %v757
    %906 = vmatprep.subr.bf16.mxu0 %v762
    %907 = vmatpush1.bf16.msra.mxu0 %v761
    %908 = vmatprep.subr.bf16.mxu0 %v766
    %909 = vmatpush1.bf16.msra.mxu0 %v765
    %910 = vmatprep.subr.bf16.mxu0 %v770
    %911 = vmatpush1.bf16.msra.mxu0 %v769
    %912 = vmatprep.subr.bf16.mxu0 %v774
    %913 = vmatpush1.bf16.msra.mxu0 %v773
    %914 = vmatprep.subr.bf16.mxu0 %v778
    %915 = vmatpush1.bf16.msra.mxu0 %v777
    %916 = vmatprep.mubr.bf16.mxu0 %v436
    %917 = vmatmul.mubr.bf16.gmra.mrb[0].mxu0 %v435
    %v918 = vpop.f32.mrb[0].mxu0
    %v919 = vadd.f32 %v514, %v918
    %v920 = vpop.f32.mrb[0].mxu0
    %v921 = vadd.f32 %v518, %v920
    %v922 = vpop.f32.mrb[0].mxu0
    %v923 = vpop.f32.mrb[0].mxu0
    %924 = vdwg.mxu0
    %v925 = vmul.f32 %v878, 0.2
    %v926 = vmul.f32 %v880, 0.2
    %v927 = vmul.f32 %v919, 0.2
    %v928 = vmul.f32 %v921, 0.2
    %v929 = vmax.f32 %v878, %v925
    %v930 = vmax.f32 %v880, %v926
    %v931 = vmax.f32 %v919, %v927
    %v932 = vmax.f32 %v921, %v928
    %v933 = vpack.c.bf16 %v929, %v929
    %v934 = vpack.c.bf16 %v930, %v930
    %v935 = vpack.c.bf16 %v931, %v931
    %v936 = vpack.c.bf16 %v932, %v932
    %v937 = vld [vmem:[#allocation6] sm:$0xff]
    %v938 = vld [vmem:[#allocation6 + $0x8] sm:$0xff]
    %v939 = vld [vmem:[#allocation6 + $0x10] sm:$0xff]
    %v940 = vld [vmem:[#allocation6 + $0x18] sm:$0xff]
    %v941 = vld [vmem:[#allocation6 + $0x20] sm:$0xff]
    %v942 = vld [vmem:[#allocation6 + $0x28] sm:$0xff]
    %v943 = vld [vmem:[#allocation6 + $0x30] sm:$0xff]
    %v944 = vld [vmem:[#allocation6 + $0x38] sm:$0xff]
    %v945 = vld [vmem:[#allocation6 + $0x40] sm:$0xff]
    %v946 = vld [vmem:[#allocation6 + $0x48] sm:$0xff]
    %v947 = vld [vmem:[#allocation6 + $0x50] sm:$0xff]
    %v948 = vld [vmem:[#allocation6 + $0x58] sm:$0xff]
    %v949 = vld [vmem:[#allocation6 + $0x60] sm:$0xff]
    %v950 = vld [vmem:[#allocation6 + $0x68] sm:$0xff]
    %v951 = vld [vmem:[#allocation6 + $0x70] sm:$0xff]
    %v952 = vld [vmem:[#allocation6 + $0x78] sm:$0xff]
    %v953 = vld [vmem:[#allocation6 + $0x80] sm:$0xff]
    %v954 = vld [vmem:[#allocation6 + $0x88] sm:$0xff]
    %v955 = vld [vmem:[#allocation6 + $0x90] sm:$0xff]
    %v956 = vld [vmem:[#allocation6 + $0x98] sm:$0xff]
    %v957 = vld [vmem:[#allocation6 + $0xa0] sm:$0xff]
    %v958 = vld [vmem:[#allocation6 + $0xa8] sm:$0xff]
    %v959 = vld [vmem:[#allocation6 + $0xb0] sm:$0xff]
    %v960 = vld [vmem:[#allocation6 + $0xb8] sm:$0xff]
    %v961 = vld [vmem:[#allocation6 + $0xc0] sm:$0xff]
    %v962 = vld [vmem:[#allocation6 + $0xc8] sm:$0xff]
    %v963 = vld [vmem:[#allocation6 + $0xd0] sm:$0xff]
    %v964 = vld [vmem:[#allocation6 + $0xd8] sm:$0xff]
    %v965 = vld [vmem:[#allocation6 + $0xe0] sm:$0xff]
    %v966 = vld [vmem:[#allocation6 + $0xe8] sm:$0xff]
    %v967 = vld [vmem:[#allocation6 + $0xf0] sm:$0xff]
    %v968 = vld [vmem:[#allocation6 + $0xf8] sm:$0xff]
    %v969 = vld [vmem:[#allocation6 + $0x100] sm:$0xff]
    %v970 = vld [vmem:[#allocation6 + $0x108] sm:$0xff]
    %v971 = vld [vmem:[#allocation6 + $0x110] sm:$0xff]
    %v972 = vld [vmem:[#allocation6 + $0x118] sm:$0xff]
    %v973 = vld [vmem:[#allocation6 + $0x120] sm:$0xff]
    %v974 = vld [vmem:[#allocation6 + $0x128] sm:$0xff]
    %v975 = vld [vmem:[#allocation6 + $0x130] sm:$0xff]
    %v976 = vld [vmem:[#allocation6 + $0x138] sm:$0xff]
    %v977 = vld [vmem:[#allocation6 + $0x140] sm:$0xff]
    %v978 = vld [vmem:[#allocation6 + $0x148] sm:$0xff]
    %v979 = vld [vmem:[#allocation6 + $0x150] sm:$0xff]
    %v980 = vld [vmem:[#allocation6 + $0x158] sm:$0xff]
    %v981 = vld [vmem:[#allocation6 + $0x160] sm:$0xff]
    %v982 = vld [vmem:[#allocation6 + $0x168] sm:$0xff]
    %v983 = vld [vmem:[#allocation6 + $0x170] sm:$0xff]
    %v984 = vld [vmem:[#allocation6 + $0x178] sm:$0xff]
    %v985 = vld [vmem:[#allocation6 + $0x180] sm:$0xff]
    %v986 = vld [vmem:[#allocation6 + $0x188] sm:$0xff]
    %v987 = vld [vmem:[#allocation6 + $0x190] sm:$0xff]
    %v988 = vld [vmem:[#allocation6 + $0x198] sm:$0xff]
    %v989 = vld [vmem:[#allocation6 + $0x1a0] sm:$0xff]
    %v990 = vld [vmem:[#allocation6 + $0x1a8] sm:$0xff]
    %v991 = vld [vmem:[#allocation6 + $0x1b0] sm:$0xff]
    %v992 = vld [vmem:[#allocation6 + $0x1b8] sm:$0xff]
    %v993 = vld [vmem:[#allocation6 + $0x1c0] sm:$0xff]
    %v994 = vld [vmem:[#allocation6 + $0x1c8] sm:$0xff]
    %v995 = vld [vmem:[#allocation6 + $0x1d0] sm:$0xff]
    %v996 = vld [vmem:[#allocation6 + $0x1d8] sm:$0xff]
    %v997 = vld [vmem:[#allocation6 + $0x1e0] sm:$0xff]
    %v998 = vld [vmem:[#allocation6 + $0x1e8] sm:$0xff]
    %v999 = vld [vmem:[#allocation6 + $0x1f0] sm:$0xff]
    %v1000 = vld [vmem:[#allocation6 + $0x1f8] sm:$0xff]
    %v1001 = vld [vmem:[%s11] sm:$0x3]
    %v1003 = vlaneseq
    %v1004 = vshrl.u32 %v1003, 7
    %v1005 = vsub.s32 0, %v1004
    %v1006 = vrot.slane %v1001, %v1005
    %v1007 = vlaneseq
    %v1008 = vshrl.u32 %v1007, 7
    %v1009 = vsub.s32 1, %v1008
    %v1010 = vrot.slane %v1001, %v1009
    %v1077 = vunpack.c.l.b16 %v937
    %v1078 = vunpack.c.h.b16 %v937
    %v1079 = vunpack.c.l.b16 %v938
    %v1080 = vunpack.c.h.b16 %v938
    %v1081 = vunpack.c.l.b16 %v939
    %v1082 = vunpack.c.h.b16 %v939
    %v1083 = vunpack.c.l.b16 %v940
    %v1084 = vunpack.c.h.b16 %v940
    %v1085 = vunpack.c.l.b16 %v941
    %v1086 = vunpack.c.h.b16 %v941
    %v1087 = vunpack.c.l.b16 %v942
    %v1088 = vunpack.c.h.b16 %v942
    %v1089 = vunpack.c.l.b16 %v943
    %v1090 = vunpack.c.h.b16 %v943
    %v1091 = vunpack.c.l.b16 %v944
    %v1092 = vunpack.c.h.b16 %v944
    %v1093 = vunpack.c.l.b16 %v945
    %v1094 = vunpack.c.h.b16 %v945
    %v1095 = vunpack.c.l.b16 %v946
    %v1096 = vunpack.c.h.b16 %v946
    %v1097 = vunpack.c.l.b16 %v947
    %v1098 = vunpack.c.h.b16 %v947
    %v1099 = vunpack.c.l.b16 %v948
    %v1100 = vunpack.c.h.b16 %v948
    %v1101 = vunpack.c.l.b16 %v949
    %v1102 = vunpack.c.h.b16 %v949
    %v1103 = vunpack.c.l.b16 %v950
    %v1104 = vunpack.c.h.b16 %v950
    %v1105 = vunpack.c.l.b16 %v951
    %v1106 = vunpack.c.h.b16 %v951
    %v1107 = vunpack.c.l.b16 %v952
    %v1108 = vunpack.c.h.b16 %v952
    %v1109 = vunpack.c.l.b16 %v953
    %v1110 = vunpack.c.h.b16 %v953
    %v1111 = vunpack.c.l.b16 %v954
    %v1112 = vunpack.c.h.b16 %v954
    %v1113 = vunpack.c.l.b16 %v955
    %v1114 = vunpack.c.h.b16 %v955
    %v1115 = vunpack.c.l.b16 %v956
    %v1116 = vunpack.c.h.b16 %v956
    %v1117 = vunpack.c.l.b16 %v957
    %v1118 = vunpack.c.h.b16 %v957
    %v1119 = vunpack.c.l.b16 %v958
    %v1120 = vunpack.c.h.b16 %v958
    %v1121 = vunpack.c.l.b16 %v959
    %v1122 = vunpack.c.h.b16 %v959
    %v1123 = vunpack.c.l.b16 %v960
    %v1124 = vunpack.c.h.b16 %v960
    %v1125 = vunpack.c.l.b16 %v961
    %v1126 = vunpack.c.h.b16 %v961
    %v1127 = vunpack.c.l.b16 %v962
    %v1128 = vunpack.c.h.b16 %v962
    %v1129 = vunpack.c.l.b16 %v963
    %v1130 = vunpack.c.h.b16 %v963
    %v1131 = vunpack.c.l.b16 %v964
    %v1132 = vunpack.c.h.b16 %v964
    %v1133 = vunpack.c.l.b16 %v965
    %v1134 = vunpack.c.h.b16 %v965
    %v1135 = vunpack.c.l.b16 %v966
    %v1136 = vunpack.c.h.b16 %v966
    %v1137 = vunpack.c.l.b16 %v967
    %v1138 = vunpack.c.h.b16 %v967
    %v1139 = vunpack.c.l.b16 %v968
    %v1140 = vunpack.c.h.b16 %v968
    %v1141 = vunpack.c.l.b16 %v969
    %v1142 = vunpack.c.h.b16 %v969
    %v1143 = vunpack.c.l.b16 %v970
    %v1144 = vunpack.c.h.b16 %v970
    %v1145 = vunpack.c.l.b16 %v971
    %v1146 = vunpack.c.h.b16 %v971
    %v1147 = vunpack.c.l.b16 %v972
    %v1148 = vunpack.c.h.b16 %v972
    %v1149 = vunpack.c.l.b16 %v973
    %v1150 = vunpack.c.h.b16 %v973
    %v1151 = vunpack.c.l.b16 %v974
    %v1152 = vunpack.c.h.b16 %v974
    %v1153 = vunpack.c.l.b16 %v975
    %v1154 = vunpack.c.h.b16 %v975
    %v1155 = vunpack.c.l.b16 %v976
    %v1156 = vunpack.c.h.b16 %v976
    %v1157 = vunpack.c.l.b16 %v977
    %v1158 = vunpack.c.h.b16 %v977
    %v1159 = vunpack.c.l.b16 %v978
    %v1160 = vunpack.c.h.b16 %v978
    %v1161 = vunpack.c.l.b16 %v979
    %v1162 = vunpack.c.h.b16 %v979
    %v1163 = vunpack.c.l.b16 %v980
    %v1164 = vunpack.c.h.b16 %v980
    %v1165 = vunpack.c.l.b16 %v981
    %v1166 = vunpack.c.h.b16 %v981
    %v1167 = vunpack.c.l.b16 %v982
    %v1168 = vunpack.c.h.b16 %v982
    %v1169 = vunpack.c.l.b16 %v983
    %v1170 = vunpack.c.h.b16 %v983
    %v1171 = vunpack.c.l.b16 %v984
    %v1172 = vunpack.c.h.b16 %v984
    %v1173 = vunpack.c.l.b16 %v985
    %v1174 = vunpack.c.h.b16 %v985
    %v1175 = vunpack.c.l.b16 %v986
    %v1176 = vunpack.c.h.b16 %v986
    %v1177 = vunpack.c.l.b16 %v987
    %v1178 = vunpack.c.h.b16 %v987
    %v1179 = vunpack.c.l.b16 %v988
    %v1180 = vunpack.c.h.b16 %v988
    %v1181 = vunpack.c.l.b16 %v989
    %v1182 = vunpack.c.h.b16 %v989
    %v1183 = vunpack.c.l.b16 %v990
    %v1184 = vunpack.c.h.b16 %v990
    %v1185 = vunpack.c.l.b16 %v991
    %v1186 = vunpack.c.h.b16 %v991
    %v1187 = vunpack.c.l.b16 %v992
    %v1188 = vunpack.c.h.b16 %v992
    %v1189 = vunpack.c.l.b16 %v993
    %v1190 = vunpack.c.h.b16 %v993
    %v1191 = vunpack.c.l.b16 %v994
    %v1192 = vunpack.c.h.b16 %v994
    %v1193 = vunpack.c.l.b16 %v995
    %v1194 = vunpack.c.h.b16 %v995
    %v1195 = vunpack.c.l.b16 %v996
    %v1196 = vunpack.c.h.b16 %v996
    %v1197 = vunpack.c.l.b16 %v997
    %v1198 = vunpack.c.h.b16 %v997
    %v1199 = vunpack.c.l.b16 %v998
    %v1200 = vunpack.c.h.b16 %v998
    %v1201 = vunpack.c.l.b16 %v999
    %v1202 = vunpack.c.h.b16 %v999
    %v1203 = vunpack.c.l.b16 %v1000
    %v1204 = vunpack.c.h.b16 %v1000
    %v1205 = vpack.c.b16 %v1079, %v1077
    %v1206 = vpack.c.b16 %v1080, %v1078
    %v1207 = vpack.c.b16 %v1083, %v1081
    %v1208 = vpack.c.b16 %v1084, %v1082
    %v1209 = vpack.c.b16 %v1087, %v1085
    %v1210 = vpack.c.b16 %v1088, %v1086
    %v1211 = vpack.c.b16 %v1091, %v1089
    %v1212 = vpack.c.b16 %v1092, %v1090
    %v1213 = vpack.c.b16 %v1095, %v1093
    %v1214 = vpack.c.b16 %v1096, %v1094
    %v1215 = vpack.c.b16 %v1099, %v1097
    %v1216 = vpack.c.b16 %v1100, %v1098
    %v1217 = vpack.c.b16 %v1103, %v1101
    %v1218 = vpack.c.b16 %v1104, %v1102
    %v1219 = vpack.c.b16 %v1107, %v1105
    %v1220 = vpack.c.b16 %v1108, %v1106
    %v1221 = vpack.c.b16 %v1111, %v1109
    %v1222 = vpack.c.b16 %v1112, %v1110
    %v1223 = vpack.c.b16 %v1115, %v1113
    %v1224 = vpack.c.b16 %v1116, %v1114
    %v1225 = vpack.c.b16 %v1119, %v1117
    %v1226 = vpack.c.b16 %v1120, %v1118
    %v1227 = vpack.c.b16 %v1123, %v1121
    %v1228 = vpack.c.b16 %v1124, %v1122
    %v1229 = vpack.c.b16 %v1127, %v1125
    %v1230 = vpack.c.b16 %v1128, %v1126
    %v1231 = vpack.c.b16 %v1131, %v1129
    %v1232 = vpack.c.b16 %v1132, %v1130
    %v1233 = vpack.c.b16 %v1135, %v1133
    %v1234 = vpack.c.b16 %v1136, %v1134
    %v1235 = vpack.c.b16 %v1139, %v1137
    %v1236 = vpack.c.b16 %v1140, %v1138
    %v1237 = vpack.c.b16 %v1143, %v1141
    %v1238 = vpack.c.b16 %v1144, %v1142
    %v1239 = vpack.c.b16 %v1147, %v1145
    %v1240 = vpack.c.b16 %v1148, %v1146
    %v1241 = vpack.c.b16 %v1151, %v1149
    %v1242 = vpack.c.b16 %v1152, %v1150
    %v1243 = vpack.c.b16 %v1155, %v1153
    %v1244 = vpack.c.b16 %v1156, %v1154
    %v1245 = vpack.c.b16 %v1159, %v1157
    %v1246 = vpack.c.b16 %v1160, %v1158
    %v1247 = vpack.c.b16 %v1163, %v1161
    %v1248 = vpack.c.b16 %v1164, %v1162
    %v1249 = vpack.c.b16 %v1167, %v1165
    %v1250 = vpack.c.b16 %v1168, %v1166
    %v1251 = vpack.c.b16 %v1171, %v1169
    %v1252 = vpack.c.b16 %v1172, %v1170
    %v1253 = vpack.c.b16 %v1175, %v1173
    %v1254 = vpack.c.b16 %v1176, %v1174
    %v1255 = vpack.c.b16 %v1179, %v1177
    %v1256 = vpack.c.b16 %v1180, %v1178
    %v1257 = vpack.c.b16 %v1183, %v1181
    %v1258 = vpack.c.b16 %v1184, %v1182
    %v1259 = vpack.c.b16 %v1187, %v1185
    %v1260 = vpack.c.b16 %v1188, %v1186
    %v1261 = vpack.c.b16 %v1191, %v1189
    %v1262 = vpack.c.b16 %v1192, %v1190
    %v1263 = vpack.c.b16 %v1195, %v1193
    %v1264 = vpack.c.b16 %v1196, %v1194
    %v1265 = vpack.c.b16 %v1199, %v1197
    %v1266 = vpack.c.b16 %v1200, %v1198
    %v1267 = vpack.c.b16 %v1203, %v1201
    %v1268 = vpack.c.b16 %v1204, %v1202
    %1333 = vmatprep.subr.bf16.mxu0 %v1206
    %1334 = vmatpush1.bf16.msra.mxu0 %v1205
    %1335 = vmatprep.subr.bf16.mxu0 %v1208
    %1336 = vmatpush1.bf16.msra.mxu0 %v1207
    %1337 = vmatprep.subr.bf16.mxu0 %v1210
    %1338 = vmatpush1.bf16.msra.mxu0 %v1209
    %1339 = vmatprep.subr.bf16.mxu0 %v1212
    %1340 = vmatpush1.bf16.msra.mxu0 %v1211
    %1341 = vmatprep.subr.bf16.mxu0 %v1214
    %1342 = vmatpush1.bf16.msra.mxu0 %v1213
    %1343 = vmatprep.subr.bf16.mxu0 %v1216
    %1344 = vmatpush1.bf16.msra.mxu0 %v1215
    %1345 = vmatprep.subr.bf16.mxu0 %v1218
    %1346 = vmatpush1.bf16.msra.mxu0 %v1217
    %1347 = vmatprep.subr.bf16.mxu0 %v1220
    %1348 = vmatpush1.bf16.msra.mxu0 %v1219
    %1349 = vmatprep.subr.bf16.mxu0 %v1222
    %1350 = vmatpush1.bf16.msra.mxu0 %v1221
    %1351 = vmatprep.subr.bf16.mxu0 %v1224
    %1352 = vmatpush1.bf16.msra.mxu0 %v1223
    %1353 = vmatprep.subr.bf16.mxu0 %v1226
    %1354 = vmatpush1.bf16.msra.mxu0 %v1225
    %1355 = vmatprep.subr.bf16.mxu0 %v1228
    %1356 = vmatpush1.bf16.msra.mxu0 %v1227
    %1357 = vmatprep.subr.bf16.mxu0 %v1230
    %1358 = vmatpush1.bf16.msra.mxu0 %v1229
    %1359 = vmatprep.subr.bf16.mxu0 %v1232
    %1360 = vmatpush1.bf16.msra.mxu0 %v1231
    %1361 = vmatprep.subr.bf16.mxu0 %v1234
    %1362 = vmatpush1.bf16.msra.mxu0 %v1233
    %1363 = vmatprep.subr.bf16.mxu0 %v1236
    %1364 = vmatpush1.bf16.msra.mxu0 %v1235
    %1365 = vmatprep.mubr.bf16.mxu0 %v934
    %1366 = vmatmul.mubr.bf16.gmra.mrb[0].mxu0 %v933
    %v1367 = vpop.f32.mrb[0].mxu0
    %v1368 = vadd.f32 %v1006, %v1367
    %v1369 = vpop.f32.mrb[0].mxu0
    %v1370 = vadd.f32 %v1010, %v1369
    %v1371 = vpop.f32.mrb[0].mxu0
    %v1372 = vpop.f32.mrb[0].mxu0
    %1373 = vdwg.mxu0
    %1374 = vmatprep.subr.bf16.mxu0 %v1238
    %1375 = vmatpush1.bf16.msra.mxu0 %v1237
    %1376 = vmatprep.subr.bf16.mxu0 %v1240
    %1377 = vmatpush1.bf16.msra.mxu0 %v1239
    %1378 = vmatprep.subr.bf16.mxu0 %v1242
    %1379 = vmatpush1.bf16.msra.mxu0 %v1241
    %1380 = vmatprep.subr.bf16.mxu0 %v1244
    %1381 = vmatpush1.bf16.msra.mxu0 %v1243
    %1382 = vmatprep.subr.bf16.mxu0 %v1246
    %1383 = vmatpush1.bf16.msra.mxu0 %v1245
    %1384 = vmatprep.subr.bf16.mxu0 %v1248
    %1385 = vmatpush1.bf16.msra.mxu0 %v1247
    %1386 = vmatprep.subr.bf16.mxu0 %v1250
    %1387 = vmatpush1.bf16.msra.mxu0 %v1249
    %1388 = vmatprep.subr.bf16.mxu0 %v1252
    %1389 = vmatpush1.bf16.msra.mxu0 %v1251
    %1390 = vmatprep.subr.bf16.mxu0 %v1254
    %1391 = vmatpush1.bf16.msra.mxu0 %v1253
    %1392 = vmatprep.subr.bf16.mxu0 %v1256
    %1393 = vmatpush1.bf16.msra.mxu0 %v1255
    %1394 = vmatprep.subr.bf16.mxu0 %v1258
    %1395 = vmatpush1.bf16.msra.mxu0 %v1257
    %1396 = vmatprep.subr.bf16.mxu0 %v1260
    %1397 = vmatpush1.bf16.msra.mxu0 %v1259
    %1398 = vmatprep.subr.bf16.mxu0 %v1262
    %1399 = vmatpush1.bf16.msra.mxu0 %v1261
    %1400 = vmatprep.subr.bf16.mxu0 %v1264
    %1401 = vmatpush1.bf16.msra.mxu0 %v1263
    %1402 = vmatprep.subr.bf16.mxu0 %v1266
    %1403 = vmatpush1.bf16.msra.mxu0 %v1265
    %1404 = vmatprep.subr.bf16.mxu0 %v1268
    %1405 = vmatpush1.bf16.msra.mxu0 %v1267
    %1406 = vmatprep.mubr.bf16.mxu0 %v936
    %1407 = vmatmul.mubr.bf16.gmra.mrb[0].mxu0 %v935
    %v1408 = vpop.f32.mrb[0].mxu0
    %v1409 = vadd.f32 %v1368, %v1408
    %v1410 = vpop.f32.mrb[0].mxu0
    %v1411 = vadd.f32 %v1370, %v1410
    %v1412 = vpop.f32.mrb[0].mxu0
    %v1413 = vpop.f32.mrb[0].mxu0
    %1414 = vdwg.mxu0
    %v1415 = vmul.f32 %v1409, 0.2
    %v1416 = vmul.f32 %v1411, 0.2
    %v1417 = vmax.f32 %v1409, %v1415
    %v1418 = vmax.f32 %v1411, %v1416
    %v1419 = vpack.c.bf16 %v1417, %v1417
    %v1420 = vpack.c.bf16 %v1418, %v1418
    %v1421 = vld [vmem:[#allocation7] sm:$0xf]
    %v1422 = vld [vmem:[#allocation7 + $0x4] sm:$0xf]
    %v1423 = vld [vmem:[#allocation7 + $0x8] sm:$0xf]
    %v1424 = vld [vmem:[#allocation7 + $0xc] sm:$0xf]
    %v1425 = vld [vmem:[#allocation7 + $0x10] sm:$0xf]
    %v1426 = vld [vmem:[#allocation7 + $0x14] sm:$0xf]
    %v1427 = vld [vmem:[#allocation7 + $0x18] sm:$0xf]
    %v1428 = vld [vmem:[#allocation7 + $0x1c] sm:$0xf]
    %v1429 = vld [vmem:[#allocation7 + $0x20] sm:$0xf]
    %v1430 = vld [vmem:[#allocation7 + $0x24] sm:$0xf]
    %v1431 = vld [vmem:[#allocation7 + $0x28] sm:$0xf]
    %v1432 = vld [vmem:[#allocation7 + $0x2c] sm:$0xf]
    %v1433 = vld [vmem:[#allocation7 + $0x30] sm:$0xf]
    %v1434 = vld [vmem:[#allocation7 + $0x34] sm:$0xf]
    %v1435 = vld [vmem:[#allocation7 + $0x38] sm:$0xf]
    %v1436 = vld [vmem:[#allocation7 + $0x3c] sm:$0xf]
    %v1437 = vld [vmem:[#allocation7 + $0x40] sm:$0xf]
    %v1438 = vld [vmem:[#allocation7 + $0x44] sm:$0xf]
    %v1439 = vld [vmem:[#allocation7 + $0x48] sm:$0xf]
    %v1440 = vld [vmem:[#allocation7 + $0x4c] sm:$0xf]
    %v1441 = vld [vmem:[#allocation7 + $0x50] sm:$0xf]
    %v1442 = vld [vmem:[#allocation7 + $0x54] sm:$0xf]
    %v1443 = vld [vmem:[#allocation7 + $0x58] sm:$0xf]
    %v1444 = vld [vmem:[#allocation7 + $0x5c] sm:$0xf]
    %v1445 = vld [vmem:[#allocation7 + $0x60] sm:$0xf]
    %v1446 = vld [vmem:[#allocation7 + $0x64] sm:$0xf]
    %v1447 = vld [vmem:[#allocation7 + $0x68] sm:$0xf]
    %v1448 = vld [vmem:[#allocation7 + $0x6c] sm:$0xf]
    %v1449 = vld [vmem:[#allocation7 + $0x70] sm:$0xf]
    %v1450 = vld [vmem:[#allocation7 + $0x74] sm:$0xf]
    %v1451 = vld [vmem:[#allocation7 + $0x78] sm:$0xf]
    %v1452 = vld [vmem:[#allocation7 + $0x7c] sm:$0xf]
    %v1453 = vld [vmem:[#allocation9] sm:$0x1]
    %v1455 = vlaneseq
    %v1456 = vshrl.u32 %v1455, 7
    %v1457 = vsub.s32 0, %v1456
    %v1458 = vrot.slane %v1453, %v1457
    %v1492 = vunpack.c.l.b16 %v1421
    %v1493 = vunpack.c.l.b16 %v1422
    %v1494 = vunpack.c.l.b16 %v1423
    %v1495 = vunpack.c.l.b16 %v1424
    %v1496 = vunpack.c.l.b16 %v1425
    %v1497 = vunpack.c.l.b16 %v1426
    %v1498 = vunpack.c.l.b16 %v1427
    %v1499 = vunpack.c.l.b16 %v1428
    %v1500 = vunpack.c.l.b16 %v1429
    %v1501 = vunpack.c.l.b16 %v1430
    %v1502 = vunpack.c.l.b16 %v1431
    %v1503 = vunpack.c.l.b16 %v1432
    %v1504 = vunpack.c.l.b16 %v1433
    %v1505 = vunpack.c.l.b16 %v1434
    %v1506 = vunpack.c.l.b16 %v1435
    %v1507 = vunpack.c.l.b16 %v1436
    %v1508 = vunpack.c.l.b16 %v1437
    %v1509 = vunpack.c.l.b16 %v1438
    %v1510 = vunpack.c.l.b16 %v1439
    %v1511 = vunpack.c.l.b16 %v1440
    %v1512 = vunpack.c.l.b16 %v1441
    %v1513 = vunpack.c.l.b16 %v1442
    %v1514 = vunpack.c.l.b16 %v1443
    %v1515 = vunpack.c.l.b16 %v1444
    %v1516 = vunpack.c.l.b16 %v1445
    %v1517 = vunpack.c.l.b16 %v1446
    %v1518 = vunpack.c.l.b16 %v1447
    %v1519 = vunpack.c.l.b16 %v1448
    %v1520 = vunpack.c.l.b16 %v1449
    %v1521 = vunpack.c.l.b16 %v1450
    %v1522 = vunpack.c.l.b16 %v1451
    %v1523 = vunpack.c.l.b16 %v1452
    %v1524 = vpack.c.b16 %v1493, %v1492
    %v1525 = vpack.c.b16 %v1495, %v1494
    %v1526 = vpack.c.b16 %v1497, %v1496
    %v1527 = vpack.c.b16 %v1499, %v1498
    %v1528 = vpack.c.b16 %v1501, %v1500
    %v1529 = vpack.c.b16 %v1503, %v1502
    %v1530 = vpack.c.b16 %v1505, %v1504
    %v1531 = vpack.c.b16 %v1507, %v1506
    %v1532 = vpack.c.b16 %v1509, %v1508
    %v1533 = vpack.c.b16 %v1511, %v1510
    %v1534 = vpack.c.b16 %v1513, %v1512
    %v1535 = vpack.c.b16 %v1515, %v1514
    %v1536 = vpack.c.b16 %v1517, %v1516
    %v1537 = vpack.c.b16 %v1519, %v1518
    %v1538 = vpack.c.b16 %v1521, %v1520
    %v1539 = vpack.c.b16 %v1523, %v1522
    %1556 = vmatprep.subr.bf16.mxu0 0
    %1557 = vmatpush1.bf16.msra.mxu0 %v1524
    %1558 = vmatprep.subr.bf16.mxu0 0
    %1559 = vmatpush1.bf16.msra.mxu0 %v1525
    %1560 = vmatprep.subr.bf16.mxu0 0
    %1561 = vmatpush1.bf16.msra.mxu0 %v1526
    %1562 = vmatprep.subr.bf16.mxu0 0
    %1563 = vmatpush1.bf16.msra.mxu0 %v1527
    %1564 = vmatprep.subr.bf16.mxu0 0
    %1565 = vmatpush1.bf16.msra.mxu0 %v1528
    %1566 = vmatprep.subr.bf16.mxu0 0
    %1567 = vmatpush1.bf16.msra.mxu0 %v1529
    %1568 = vmatprep.subr.bf16.mxu0 0
    %1569 = vmatpush1.bf16.msra.mxu0 %v1530
    %1570 = vmatprep.subr.bf16.mxu0 0
    %1571 = vmatpush1.bf16.msra.mxu0 %v1531
    %1572 = vmatprep.subr.bf16.mxu0 0
    %1573 = vmatpush1.bf16.msra.mxu0 %v1532
    %1574 = vmatprep.subr.bf16.mxu0 0
    %1575 = vmatpush1.bf16.msra.mxu0 %v1533
    %1576 = vmatprep.subr.bf16.mxu0 0
    %1577 = vmatpush1.bf16.msra.mxu0 %v1534
    %1578 = vmatprep.subr.bf16.mxu0 0
    %1579 = vmatpush1.bf16.msra.mxu0 %v1535
    %1580 = vmatprep.subr.bf16.mxu0 0
    %1581 = vmatpush1.bf16.msra.mxu0 %v1536
    %1582 = vmatprep.subr.bf16.mxu0 0
    %1583 = vmatpush1.bf16.msra.mxu0 %v1537
    %1584 = vmatprep.subr.bf16.mxu0 0
    %1585 = vmatpush1.bf16.msra.mxu0 %v1538
    %1586 = vmatprep.subr.bf16.mxu0 0
    %1587 = vmatpush1.bf16.msra.mxu0 %v1539
    %1588 = vmatprep.mubr.bf16.mxu0 %v1420
    %1589 = vmatmul.mubr.bf16.gmra.mrb[0].mxu0 %v1419
    %v1590 = vpop.f32.mrb[0].mxu0
    %v1591 = vadd.f32 %v1458, %v1590
    %v1592 = vpop.f32.mrb[0].mxu0
    %v1593 = vpop.f32.mrb[0].mxu0
    %v1594 = vpop.f32.mrb[0].mxu0
    %1595 = vdwg.mxu0
    %v1596 = vmul.f32 %v1591, 0.2
    %v1597 = vmax.f32 %v1591, %v1596
    %1598 = vst [vmem:[%s57] sm:$0xff] %v1597
    %v1599 = vpack.c.bf16 %v1597, %v1597
    %v1600 = vld [vmem:[#allocation10] sm:$0xff]
    %v1601 = vld [vmem:[#allocation10 + $0x8] sm:$0xff]
    %v1602 = vld [vmem:[#allocation10 + $0x10] sm:$0xff]
    %v1603 = vld [vmem:[#allocation10 + $0x18] sm:$0xff]
    %v1604 = vld [vmem:[#allocation10 + $0x20] sm:$0xff]
    %v1605 = vld [vmem:[#allocation10 + $0x28] sm:$0xff]
    %v1606 = vld [vmem:[#allocation10 + $0x30] sm:$0xff]
    %v1607 = vld [vmem:[#allocation10 + $0x38] sm:$0xff]
    %v1608 = vld [vmem:[#allocation10 + $0x40] sm:$0xff]
    %v1609 = vld [vmem:[#allocation10 + $0x48] sm:$0xff]
    %v1610 = vld [vmem:[#allocation10 + $0x50] sm:$0xff]
    %v1611 = vld [vmem:[#allocation10 + $0x58] sm:$0xff]
    %v1612 = vld [vmem:[#allocation10 + $0x60] sm:$0xff]
    %v1613 = vld [vmem:[#allocation10 + $0x68] sm:$0xff]
    %v1614 = vld [vmem:[#allocation10 + $0x70] sm:$0xff]
    %v1615 = vld [vmem:[#allocation10 + $0x78] sm:$0xff]
    %v1616 = vld [vmem:[#allocation12] sm:$0x3]
    %v1618 = vlaneseq
    %v1619 = vshrl.u32 %v1618, 7
    %v1620 = vsub.s32 0, %v1619
    %v1621 = vrot.slane %v1616, %v1620
    %v1622 = vlaneseq
    %v1623 = vshrl.u32 %v1622, 7
    %v1624 = vsub.s32 1, %v1623
    %v1625 = vrot.slane %v1616, %v1624
    %v1644 = vunpack.c.l.b16 %v1600
    %v1645 = vunpack.c.h.b16 %v1600
    %v1646 = vunpack.c.l.b16 %v1601
    %v1647 = vunpack.c.h.b16 %v1601
    %v1648 = vunpack.c.l.b16 %v1602
    %v1649 = vunpack.c.h.b16 %v1602
    %v1650 = vunpack.c.l.b16 %v1603
    %v1651 = vunpack.c.h.b16 %v1603
    %v1652 = vunpack.c.l.b16 %v1604
    %v1653 = vunpack.c.h.b16 %v1604
    %v1654 = vunpack.c.l.b16 %v1605
    %v1655 = vunpack.c.h.b16 %v1605
    %v1656 = vunpack.c.l.b16 %v1606
    %v1657 = vunpack.c.h.b16 %v1606
    %v1658 = vunpack.c.l.b16 %v1607
    %v1659 = vunpack.c.h.b16 %v1607
    %v1660 = vunpack.c.l.b16 %v1608
    %v1661 = vunpack.c.h.b16 %v1608
    %v1662 = vunpack.c.l.b16 %v1609
    %v1663 = vunpack.c.h.b16 %v1609
    %v1664 = vunpack.c.l.b16 %v1610
    %v1665 = vunpack.c.h.b16 %v1610
    %v1666 = vunpack.c.l.b16 %v1611
    %v1667 = vunpack.c.h.b16 %v1611
    %v1668 = vunpack.c.l.b16 %v1612
    %v1669 = vunpack.c.h.b16 %v1612
    %v1670 = vunpack.c.l.b16 %v1613
    %v1671 = vunpack.c.h.b16 %v1613
    %v1672 = vunpack.c.l.b16 %v1614
    %v1673 = vunpack.c.h.b16 %v1614
    %v1674 = vunpack.c.l.b16 %v1615
    %v1675 = vunpack.c.h.b16 %v1615
    %v1676 = vpack.c.b16 %v1646, %v1644
    %v1677 = vpack.c.b16 %v1647, %v1645
    %v1678 = vpack.c.b16 %v1650, %v1648
    %v1679 = vpack.c.b16 %v1651, %v1649
    %v1680 = vpack.c.b16 %v1654, %v1652
    %v1681 = vpack.c.b16 %v1655, %v1653
    %v1682 = vpack.c.b16 %v1658, %v1656
    %v1683 = vpack.c.b16 %v1659, %v1657
    %v1684 = vpack.c.b16 %v1662, %v1660
    %v1685 = vpack.c.b16 %v1663, %v1661
    %v1686 = vpack.c.b16 %v1666, %v1664
    %v1687 = vpack.c.b16 %v1667, %v1665
    %v1688 = vpack.c.b16 %v1670, %v1668
    %v1689 = vpack.c.b16 %v1671, %v1669
    %v1690 = vpack.c.b16 %v1674, %v1672
    %v1691 = vpack.c.b16 %v1675, %v1673
    %1708 = vmatprep.subr.bf16.mxu0 %v1677
    %1709 = vmatpush1.bf16.msra.mxu0 %v1676
    %1710 = vmatprep.subr.bf16.mxu0 %v1679
    %1711 = vmatpush1.bf16.msra.mxu0 %v1678
    %1712 = vmatprep.subr.bf16.mxu0 %v1681
    %1713 = vmatpush1.bf16.msra.mxu0 %v1680
    %1714 = vmatprep.subr.bf16.mxu0 %v1683
    %1715 = vmatpush1.bf16.msra.mxu0 %v1682
    %1716 = vmatprep.subr.bf16.mxu0 %v1685
    %1717 = vmatpush1.bf16.msra.mxu0 %v1684
    %1718 = vmatprep.subr.bf16.mxu0 %v1687
    %1719 = vmatpush1.bf16.msra.mxu0 %v1686
    %1720 = vmatprep.subr.bf16.mxu0 %v1689
    %1721 = vmatpush1.bf16.msra.mxu0 %v1688
    %1722 = vmatprep.subr.bf16.mxu0 %v1691
    %1723 = vmatpush1.bf16.msra.mxu0 %v1690
    %1724 = vmatprep.subr.bf16.mxu0 0
    %1725 = vmatpush1.bf16.msra.mxu0 0
    %1726 = vmatprep.subr.bf16.mxu0 0
    %1727 = vmatpush1.bf16.msra.mxu0 0
    %1728 = vmatprep.subr.bf16.mxu0 0
    %1729 = vmatpush1.bf16.msra.mxu0 0
    %1730 = vmatprep.subr.bf16.mxu0 0
    %1731 = vmatpush1.bf16.msra.mxu0 0
    %1732 = vmatprep.subr.bf16.mxu0 0
    %1733 = vmatpush1.bf16.msra.mxu0 0
    %1734 = vmatprep.subr.bf16.mxu0 0
    %1735 = vmatpush1.bf16.msra.mxu0 0
    %1736 = vmatprep.subr.bf16.mxu0 0
    %1737 = vmatpush1.bf16.msra.mxu0 0
    %1738 = vmatprep.subr.bf16.mxu0 0
    %1739 = vmatpush1.bf16.msra.mxu0 0
    %1740 = vmatprep.mubr.bf16.mxu0 0
    %1741 = vmatmul.mubr.bf16.gmra.mrb[0].mxu0 %v1599
    %v1742 = vpop.f32.mrb[0].mxu0
    %v1743 = vadd.f32 %v1621, %v1742
    %v1744 = vpop.f32.mrb[0].mxu0
    %v1745 = vadd.f32 %v1625, %v1744
    %v1746 = vpop.f32.mrb[0].mxu0
    %v1747 = vpop.f32.mrb[0].mxu0
    %1748 = vdwg.mxu0
    %1749 = vst [vmem:[%s59] sm:$0xff] %v1743
    %1750 = vst [vmem:[%s61] sm:$0xff] %v1745
    %v1751 = vmul.f32 %v1745, 0.5
    %v1752 = vmul.f32 %v1751, 1.442695
    %v1753 = vpow.pop %v1752
    %v1754 = vld [vmem:[%s3] sm:$0xff]
    %v1755 = vmul.f32 %v1753, %v1754
    %v1756 = vadd.f32 %v1743, %v1755
    %1757 = vst [vmem:[%s63] sm:$0xff] %v1756
    %v1758 = vpack.c.bf16 %v1756, %v1756
    %v1759 = vld [vmem:[#allocation13] sm:$0xff]
    %v1760 = vld [vmem:[#allocation13 + $0x8] sm:$0xff]
    %v1761 = vld [vmem:[#allocation13 + $0x10] sm:$0xff]
    %v1762 = vld [vmem:[#allocation13 + $0x18] sm:$0xff]
    %v1763 = vld [vmem:[#allocation13 + $0x20] sm:$0xff]
    %v1764 = vld [vmem:[#allocation13 + $0x28] sm:$0xff]
    %v1765 = vld [vmem:[#allocation13 + $0x30] sm:$0xff]
    %v1766 = vld [vmem:[#allocation13 + $0x38] sm:$0xff]
    %v1767 = vld [vmem:[#allocation13 + $0x40] sm:$0xff]
    %v1768 = vld [vmem:[#allocation13 + $0x48] sm:$0xff]
    %v1769 = vld [vmem:[#allocation13 + $0x50] sm:$0xff]
    %v1770 = vld [vmem:[#allocation13 + $0x58] sm:$0xff]
    %v1771 = vld [vmem:[#allocation13 + $0x60] sm:$0xff]
    %v1772 = vld [vmem:[#allocation13 + $0x68] sm:$0xff]
    %v1773 = vld [vmem:[#allocation13 + $0x70] sm:$0xff]
    %v1774 = vld [vmem:[#allocation13 + $0x78] sm:$0xff]
    %v1775 = vld [vmem:[#allocation15] sm:$0x3]
    %v1777 = vlaneseq
    %v1778 = vshrl.u32 %v1777, 7
    %v1779 = vsub.s32 0, %v1778
    %v1780 = vrot.slane %v1775, %v1779
    %v1781 = vlaneseq
    %v1782 = vshrl.u32 %v1781, 7
    %v1783 = vsub.s32 1, %v1782
    %v1784 = vrot.slane %v1775, %v1783
    %v1803 = vunpack.c.l.b16 %v1759
    %v1804 = vunpack.c.h.b16 %v1759
    %v1805 = vunpack.c.l.b16 %v1760
    %v1806 = vunpack.c.h.b16 %v1760
    %v1807 = vunpack.c.l.b16 %v1761
    %v1808 = vunpack.c.h.b16 %v1761
    %v1809 = vunpack.c.l.b16 %v1762
    %v1810 = vunpack.c.h.b16 %v1762
    %v1811 = vunpack.c.l.b16 %v1763
    %v1812 = vunpack.c.h.b16 %v1763
    %v1813 = vunpack.c.l.b16 %v1764
    %v1814 = vunpack.c.h.b16 %v1764
    %v1815 = vunpack.c.l.b16 %v1765
    %v1816 = vunpack.c.h.b16 %v1765
    %v1817 = vunpack.c.l.b16 %v1766
    %v1818 = vunpack.c.h.b16 %v1766
    %v1819 = vunpack.c.l.b16 %v1767
    %v1820 = vunpack.c.h.b16 %v1767
    %v1821 = vunpack.c.l.b16 %v1768
    %v1822 = vunpack.c.h.b16 %v1768
    %v1823 = vunpack.c.l.b16 %v1769
    %v1824 = vunpack.c.h.b16 %v1769
    %v1825 = vunpack.c.l.b16 %v1770
    %v1826 = vunpack.c.h.b16 %v1770
    %v1827 = vunpack.c.l.b16 %v1771
    %v1828 = vunpack.c.h.b16 %v1771
    %v1829 = vunpack.c.l.b16 %v1772
    %v1830 = vunpack.c.h.b16 %v1772
    %v1831 = vunpack.c.l.b16 %v1773
    %v1832 = vunpack.c.h.b16 %v1773
    %v1833 = vunpack.c.l.b16 %v1774
    %v1834 = vunpack.c.h.b16 %v1774
    %v1835 = vpack.c.b16 %v1805, %v1803
    %v1836 = vpack.c.b16 %v1806, %v1804
    %v1837 = vpack.c.b16 %v1809, %v1807
    %v1838 = vpack.c.b16 %v1810, %v1808
    %v1839 = vpack.c.b16 %v1813, %v1811
    %v1840 = vpack.c.b16 %v1814, %v1812
    %v1841 = vpack.c.b16 %v1817, %v1815
    %v1842 = vpack.c.b16 %v1818, %v1816
    %v1843 = vpack.c.b16 %v1821, %v1819
    %v1844 = vpack.c.b16 %v1822, %v1820
    %v1845 = vpack.c.b16 %v1825, %v1823
    %v1846 = vpack.c.b16 %v1826, %v1824
    %v1847 = vpack.c.b16 %v1829, %v1827
    %v1848 = vpack.c.b16 %v1830, %v1828
    %v1849 = vpack.c.b16 %v1833, %v1831
    %v1850 = vpack.c.b16 %v1834, %v1832
    %1867 = vmatprep.subr.bf16.mxu0 %v1836
    %1868 = vmatpush1.bf16.msra.mxu0 %v1835
    %1869 = vmatprep.subr.bf16.mxu0 %v1838
    %1870 = vmatpush1.bf16.msra.mxu0 %v1837
    %1871 = vmatprep.subr.bf16.mxu0 %v1840
    %1872 = vmatpush1.bf16.msra.mxu0 %v1839
    %1873 = vmatprep.subr.bf16.mxu0 %v1842
    %1874 = vmatpush1.bf16.msra.mxu0 %v1841
    %1875 = vmatprep.subr.bf16.mxu0 %v1844
    %1876 = vmatpush1.bf16.msra.mxu0 %v1843
    %1877 = vmatprep.subr.bf16.mxu0 %v1846
    %1878 = vmatpush1.bf16.msra.mxu0 %v1845
    %1879 = vmatprep.subr.bf16.mxu0 %v1848
    %1880 = vmatpush1.bf16.msra.mxu0 %v1847
    %1881 = vmatprep.subr.bf16.mxu0 %v1850
    %1882 = vmatpush1.bf16.msra.mxu0 %v1849
    %1883 = vmatprep.subr.bf16.mxu0 0
    %1884 = vmatpush1.bf16.msra.mxu0 0
    %1885 = vmatprep.subr.bf16.mxu0 0
    %1886 = vmatpush1.bf16.msra.mxu0 0
    %1887 = vmatprep.subr.bf16.mxu0 0
    %1888 = vmatpush1.bf16.msra.mxu0 0
    %1889 = vmatprep.subr.bf16.mxu0 0
    %1890 = vmatpush1.bf16.msra.mxu0 0
    %1891 = vmatprep.subr.bf16.mxu0 0
    %1892 = vmatpush1.bf16.msra.mxu0 0
    %1893 = vmatprep.subr.bf16.mxu0 0
    %1894 = vmatpush1.bf16.msra.mxu0 0
    %1895 = vmatprep.subr.bf16.mxu0 0
    %1896 = vmatpush1.bf16.msra.mxu0 0
    %1897 = vmatprep.subr.bf16.mxu0 0
    %1898 = vmatpush1.bf16.msra.mxu0 0
    %1899 = vmatprep.mubr.bf16.mxu0 0
    %1900 = vmatmul.mubr.bf16.gmra.mrb[0].mxu0 %v1758
    %v1901 = vpop.f32.mrb[0].mxu0
    %v1902 = vadd.f32 %v1780, %v1901
    %v1903 = vpop.f32.mrb[0].mxu0
    %v1904 = vadd.f32 %v1784, %v1903
    %v1905 = vpop.f32.mrb[0].mxu0
    %v1906 = vpop.f32.mrb[0].mxu0
    %1907 = vdwg.mxu0
    %v1908 = vmul.f32 %v1902, 0.2
    %v1909 = vmul.f32 %v1904, 0.2
    %v1910 = vmax.f32 %v1902, %v1908
    %v1911 = vmax.f32 %v1904, %v1909
    %v1912 = vpack.c.bf16 %v1910, %v1910
    %v1913 = vld [vmem:[%s25] sm:$0xff]
    %v1914 = vld [vmem:[%s25 + $0x8] sm:$0xff]
    %v1915 = vld [vmem:[%s25 + $0x10] sm:$0xff]
    %v1916 = vld [vmem:[%s25 + $0x18] sm:$0xff]
    %v1917 = vld [vmem:[%s25 + $0x20] sm:$0xff]
    %v1918 = vld [vmem:[%s25 + $0x28] sm:$0xff]
    %v1919 = vld [vmem:[%s25 + $0x30] sm:$0xff]
    %v1920 = vld [vmem:[%s25 + $0x38] sm:$0xff]
    %v1921 = vld [vmem:[%s25 + $0x40] sm:$0xff]
    %v1922 = vld [vmem:[%s25 + $0x48] sm:$0xff]
    %v1923 = vld [vmem:[%s25 + $0x50] sm:$0xff]
    %v1924 = vld [vmem:[%s25 + $0x58] sm:$0xff]
    %v1925 = vld [vmem:[%s25 + $0x60] sm:$0xff]
    %v1926 = vld [vmem:[%s25 + $0x68] sm:$0xff]
    %v1927 = vld [vmem:[%s25 + $0x70] sm:$0xff]
    %v1928 = vld [vmem:[%s25 + $0x78] sm:$0xff]
    %v1929 = vld [vmem:[#allocation16] sm:$0x3]
    %v1931 = vlaneseq
    %v1932 = vshrl.u32 %v1931, 7
    %v1933 = vsub.s32 0, %v1932
    %v1934 = vrot.slane %v1929, %v1933
    %v1935 = vlaneseq
    %v1936 = vshrl.u32 %v1935, 7
    %v1937 = vsub.s32 1, %v1936
    %v1938 = vrot.slane %v1929, %v1937
    %v1957 = vunpack.c.l.b16 %v1913
    %v1958 = vunpack.c.h.b16 %v1913
    %v1959 = vunpack.c.l.b16 %v1914
    %v1960 = vunpack.c.h.b16 %v1914
    %v1961 = vunpack.c.l.b16 %v1915
    %v1962 = vunpack.c.h.b16 %v1915
    %v1963 = vunpack.c.l.b16 %v1916
    %v1964 = vunpack.c.h.b16 %v1916
    %v1965 = vunpack.c.l.b16 %v1917
    %v1966 = vunpack.c.h.b16 %v1917
    %v1967 = vunpack.c.l.b16 %v1918
    %v1968 = vunpack.c.h.b16 %v1918
    %v1969 = vunpack.c.l.b16 %v1919
    %v1970 = vunpack.c.h.b16 %v1919
    %v1971 = vunpack.c.l.b16 %v1920
    %v1972 = vunpack.c.h.b16 %v1920
    %v1973 = vunpack.c.l.b16 %v1921
    %v1974 = vunpack.c.h.b16 %v1921
    %v1975 = vunpack.c.l.b16 %v1922
    %v1976 = vunpack.c.h.b16 %v1922
    %v1977 = vunpack.c.l.b16 %v1923
    %v1978 = vunpack.c.h.b16 %v1923
    %v1979 = vunpack.c.l.b16 %v1924
    %v1980 = vunpack.c.h.b16 %v1924
    %v1981 = vunpack.c.l.b16 %v1925
    %v1982 = vunpack.c.h.b16 %v1925
    %v1983 = vunpack.c.l.b16 %v1926
    %v1984 = vunpack.c.h.b16 %v1926
    %v1985 = vunpack.c.l.b16 %v1927
    %v1986 = vunpack.c.h.b16 %v1927
    %v1987 = vunpack.c.l.b16 %v1928
    %v1988 = vunpack.c.h.b16 %v1928
    %v1989 = vpack.c.b16 %v1959, %v1957
    %v1990 = vpack.c.b16 %v1960, %v1958
    %v1991 = vpack.c.b16 %v1963, %v1961
    %v1992 = vpack.c.b16 %v1964, %v1962
    %v1993 = vpack.c.b16 %v1967, %v1965
    %v1994 = vpack.c.b16 %v1968, %v1966
    %v1995 = vpack.c.b16 %v1971, %v1969
    %v1996 = vpack.c.b16 %v1972, %v1970
    %v1997 = vpack.c.b16 %v1975, %v1973
    %v1998 = vpack.c.b16 %v1976, %v1974
    %v1999 = vpack.c.b16 %v1979, %v1977
    %v2000 = vpack.c.b16 %v1980, %v1978
    %v2001 = vpack.c.b16 %v1983, %v1981
    %v2002 = vpack.c.b16 %v1984, %v1982
    %v2003 = vpack.c.b16 %v1987, %v1985
    %v2004 = vpack.c.b16 %v1988, %v1986
    %2021 = vmatprep.subr.bf16.mxu0 %v1990
    %2022 = vmatpush1.bf16.msra.mxu0 %v1989
    %2023 = vmatprep.subr.bf16.mxu0 %v1992
    %2024 = vmatpush1.bf16.msra.mxu0 %v1991
    %2025 = vmatprep.subr.bf16.mxu0 %v1994
    %2026 = vmatpush1.bf16.msra.mxu0 %v1993
    %2027 = vmatprep.subr.bf16.mxu0 %v1996
    %2028 = vmatpush1.bf16.msra.mxu0 %v1995
    %2029 = vmatprep.subr.bf16.mxu0 %v1998
    %2030 = vmatpush1.bf16.msra.mxu0 %v1997
    %2031 = vmatprep.subr.bf16.mxu0 %v2000
    %2032 = vmatpush1.bf16.msra.mxu0 %v1999
    %2033 = vmatprep.subr.bf16.mxu0 %v2002
    %2034 = vmatpush1.bf16.msra.mxu0 %v2001
    %2035 = vmatprep.subr.bf16.mxu0 %v2004
    %2036 = vmatpush1.bf16.msra.mxu0 %v2003
    %2037 = vmatprep.subr.bf16.mxu0 0
    %2038 = vmatpush1.bf16.msra.mxu0 0
    %2039 = vmatprep.subr.bf16.mxu0 0
    %2040 = vmatpush1.bf16.msra.mxu0 0
    %2041 = vmatprep.subr.bf16.mxu0 0
    %2042 = vmatpush1.bf16.msra.mxu0 0
    %2043 = vmatprep.subr.bf16.mxu0 0
    %2044 = vmatpush1.bf16.msra.mxu0 0
    %2045 = vmatprep.subr.bf16.mxu0 0
    %2046 = vmatpush1.bf16.msra.mxu0 0
    %2047 = vmatprep.subr.bf16.mxu0 0
    %2048 = vmatpush1.bf16.msra.mxu0 0
    %2049 = vmatprep.subr.bf16.mxu0 0
    %2050 = vmatpush1.bf16.msra.mxu0 0
    %2051 = vmatprep.subr.bf16.mxu0 0
    %2052 = vmatpush1.bf16.msra.mxu0 0
    %2053 = vmatprep.mubr.bf16.mxu0 0
    %2054 = vmatmul.mubr.bf16.gmra.mrb[0].mxu0 %v1912
    %v2055 = vpop.f32.mrb[0].mxu0
    %v2056 = vadd.f32 %v1934, %v2055
    %v2057 = vpop.f32.mrb[0].mxu0
    %v2058 = vadd.f32 %v1938, %v2057
    %v2059 = vpop.f32.mrb[0].mxu0
    %v2060 = vpop.f32.mrb[0].mxu0
    %2061 = vdwg.mxu0
    %v2062 = vmul.f32 %v2056, 0.2
    %v2063 = vmul.f32 %v2058, 0.2
    %v2064 = vmax.f32 %v2056, %v2062
    %v2065 = vmax.f32 %v2058, %v2063
    %v2066 = vpack.c.bf16 %v2064, %v2064
    %v2067 = vpack.c.bf16 %v2065, %v2065
    %v2068 = vld [vmem:[#allocation18] sm:$0xff]
    %v2069 = vld [vmem:[#allocation18 + $0x8] sm:$0xff]
    %v2070 = vld [vmem:[#allocation18 + $0x10] sm:$0xff]
    %v2071 = vld [vmem:[#allocation18 + $0x18] sm:$0xff]
    %v2072 = vld [vmem:[#allocation18 + $0x20] sm:$0xff]
    %v2073 = vld [vmem:[#allocation18 + $0x28] sm:$0xff]
    %v2074 = vld [vmem:[#allocation18 + $0x30] sm:$0xff]
    %v2075 = vld [vmem:[#allocation18 + $0x38] sm:$0xff]
    %v2076 = vld [vmem:[#allocation18 + $0x40] sm:$0xff]
    %v2077 = vld [vmem:[#allocation18 + $0x48] sm:$0xff]
    %v2078 = vld [vmem:[#allocation18 + $0x50] sm:$0xff]
    %v2079 = vld [vmem:[#allocation18 + $0x58] sm:$0xff]
    %v2080 = vld [vmem:[#allocation18 + $0x60] sm:$0xff]
    %v2081 = vld [vmem:[#allocation18 + $0x68] sm:$0xff]
    %v2082 = vld [vmem:[#allocation18 + $0x70] sm:$0xff]
    %v2083 = vld [vmem:[#allocation18 + $0x78] sm:$0xff]
    %v2084 = vld [vmem:[#allocation18 + $0x80] sm:$0xff]
    %v2085 = vld [vmem:[#allocation18 + $0x88] sm:$0xff]
    %v2086 = vld [vmem:[#allocation18 + $0x90] sm:$0xff]
    %v2087 = vld [vmem:[#allocation18 + $0x98] sm:$0xff]
    %v2088 = vld [vmem:[#allocation18 + $0xa0] sm:$0xff]
    %v2089 = vld [vmem:[#allocation18 + $0xa8] sm:$0xff]
    %v2090 = vld [vmem:[#allocation18 + $0xb0] sm:$0xff]
    %v2091 = vld [vmem:[#allocation18 + $0xb8] sm:$0xff]
    %v2092 = vld [vmem:[#allocation18 + $0xc0] sm:$0xff]
    %v2093 = vld [vmem:[#allocation18 + $0xc8] sm:$0xff]
    %v2094 = vld [vmem:[#allocation18 + $0xd0] sm:$0xff]
    %v2095 = vld [vmem:[#allocation18 + $0xd8] sm:$0xff]
    %v2096 = vld [vmem:[#allocation18 + $0xe0] sm:$0xff]
    %v2097 = vld [vmem:[#allocation18 + $0xe8] sm:$0xff]
    %v2098 = vld [vmem:[#allocation18 + $0xf0] sm:$0xff]
    %v2099 = vld [vmem:[#allocation18 + $0xf8] sm:$0xff]
    %v2100 = vld [vmem:[#allocation18 + $0x100] sm:$0xff]
    %v2101 = vld [vmem:[#allocation18 + $0x108] sm:$0xff]
    %v2102 = vld [vmem:[#allocation18 + $0x110] sm:$0xff]
    %v2103 = vld [vmem:[#allocation18 + $0x118] sm:$0xff]
    %v2104 = vld [vmem:[#allocation18 + $0x120] sm:$0xff]
    %v2105 = vld [vmem:[#allocation18 + $0x128] sm:$0xff]
    %v2106 = vld [vmem:[#allocation18 + $0x130] sm:$0xff]
    %v2107 = vld [vmem:[#allocation18 + $0x138] sm:$0xff]
    %v2108 = vld [vmem:[#allocation18 + $0x140] sm:$0xff]
    %v2109 = vld [vmem:[#allocation18 + $0x148] sm:$0xff]
    %v2110 = vld [vmem:[#allocation18 + $0x150] sm:$0xff]
    %v2111 = vld [vmem:[#allocation18 + $0x158] sm:$0xff]
    %v2112 = vld [vmem:[#allocation18 + $0x160] sm:$0xff]
    %v2113 = vld [vmem:[#allocation18 + $0x168] sm:$0xff]
    %v2114 = vld [vmem:[#allocation18 + $0x170] sm:$0xff]
    %v2115 = vld [vmem:[#allocation18 + $0x178] sm:$0xff]
    %v2116 = vld [vmem:[#allocation18 + $0x180] sm:$0xff]
    %v2117 = vld [vmem:[#allocation18 + $0x188] sm:$0xff]
    %v2118 = vld [vmem:[#allocation18 + $0x190] sm:$0xff]
    %v2119 = vld [vmem:[#allocation18 + $0x198] sm:$0xff]
    %v2120 = vld [vmem:[#allocation18 + $0x1a0] sm:$0xff]
    %v2121 = vld [vmem:[#allocation18 + $0x1a8] sm:$0xff]
    %v2122 = vld [vmem:[#allocation18 + $0x1b0] sm:$0xff]
    %v2123 = vld [vmem:[#allocation18 + $0x1b8] sm:$0xff]
    %v2124 = vld [vmem:[#allocation18 + $0x1c0] sm:$0xff]
    %v2125 = vld [vmem:[#allocation18 + $0x1c8] sm:$0xff]
    %v2126 = vld [vmem:[#allocation18 + $0x1d0] sm:$0xff]
    %v2127 = vld [vmem:[#allocation18 + $0x1d8] sm:$0xff]
    %v2128 = vld [vmem:[#allocation18 + $0x1e0] sm:$0xff]
    %v2129 = vld [vmem:[#allocation18 + $0x1e8] sm:$0xff]
    %v2130 = vld [vmem:[#allocation18 + $0x1f0] sm:$0xff]
    %v2131 = vld [vmem:[#allocation18 + $0x1f8] sm:$0xff]
    %v2132 = vld [vmem:[#allocation19] sm:$0xf]
    %v2134 = vlaneseq
    %v2135 = vshrl.u32 %v2134, 7
    %v2136 = vsub.s32 0, %v2135
    %v2137 = vrot.slane %v2132, %v2136
    %v2138 = vlaneseq
    %v2139 = vshrl.u32 %v2138, 7
    %v2140 = vsub.s32 1, %v2139
    %v2141 = vrot.slane %v2132, %v2140
    %v2142 = vlaneseq
    %v2143 = vshrl.u32 %v2142, 7
    %v2144 = vsub.s32 2, %v2143
    %v2145 = vrot.slane %v2132, %v2144
    %v2146 = vlaneseq
    %v2147 = vshrl.u32 %v2146, 7
    %v2148 = vsub.s32 3, %v2147
    %v2149 = vrot.slane %v2132, %v2148
    %v2218 = vunpack.c.l.b16 %v2068
    %v2219 = vunpack.c.h.b16 %v2068
    %v2220 = vunpack.c.l.b16 %v2069
    %v2221 = vunpack.c.h.b16 %v2069
    %v2222 = vunpack.c.l.b16 %v2070
    %v2223 = vunpack.c.h.b16 %v2070
    %v2224 = vunpack.c.l.b16 %v2071
    %v2225 = vunpack.c.h.b16 %v2071
    %v2226 = vunpack.c.l.b16 %v2072
    %v2227 = vunpack.c.h.b16 %v2072
    %v2228 = vunpack.c.l.b16 %v2073
    %v2229 = vunpack.c.h.b16 %v2073
    %v2230 = vunpack.c.l.b16 %v2074
    %v2231 = vunpack.c.h.b16 %v2074
    %v2232 = vunpack.c.l.b16 %v2075
    %v2233 = vunpack.c.h.b16 %v2075
    %v2234 = vunpack.c.l.b16 %v2076
    %v2235 = vunpack.c.h.b16 %v2076
    %v2236 = vunpack.c.l.b16 %v2077
    %v2237 = vunpack.c.h.b16 %v2077
    %v2238 = vunpack.c.l.b16 %v2078
    %v2239 = vunpack.c.h.b16 %v2078
    %v2240 = vunpack.c.l.b16 %v2079
    %v2241 = vunpack.c.h.b16 %v2079
    %v2242 = vunpack.c.l.b16 %v2080
    %v2243 = vunpack.c.h.b16 %v2080
    %v2244 = vunpack.c.l.b16 %v2081
    %v2245 = vunpack.c.h.b16 %v2081
    %v2246 = vunpack.c.l.b16 %v2082
    %v2247 = vunpack.c.h.b16 %v2082
    %v2248 = vunpack.c.l.b16 %v2083
    %v2249 = vunpack.c.h.b16 %v2083
    %v2250 = vunpack.c.l.b16 %v2084
    %v2251 = vunpack.c.h.b16 %v2084
    %v2252 = vunpack.c.l.b16 %v2085
    %v2253 = vunpack.c.h.b16 %v2085
    %v2254 = vunpack.c.l.b16 %v2086
    %v2255 = vunpack.c.h.b16 %v2086
    %v2256 = vunpack.c.l.b16 %v2087
    %v2257 = vunpack.c.h.b16 %v2087
    %v2258 = vunpack.c.l.b16 %v2088
    %v2259 = vunpack.c.h.b16 %v2088
    %v2260 = vunpack.c.l.b16 %v2089
    %v2261 = vunpack.c.h.b16 %v2089
    %v2262 = vunpack.c.l.b16 %v2090
    %v2263 = vunpack.c.h.b16 %v2090
    %v2264 = vunpack.c.l.b16 %v2091
    %v2265 = vunpack.c.h.b16 %v2091
    %v2266 = vunpack.c.l.b16 %v2092
    %v2267 = vunpack.c.h.b16 %v2092
    %v2268 = vunpack.c.l.b16 %v2093
    %v2269 = vunpack.c.h.b16 %v2093
    %v2270 = vunpack.c.l.b16 %v2094
    %v2271 = vunpack.c.h.b16 %v2094
    %v2272 = vunpack.c.l.b16 %v2095
    %v2273 = vunpack.c.h.b16 %v2095
    %v2274 = vunpack.c.l.b16 %v2096
    %v2275 = vunpack.c.h.b16 %v2096
    %v2276 = vunpack.c.l.b16 %v2097
    %v2277 = vunpack.c.h.b16 %v2097
    %v2278 = vunpack.c.l.b16 %v2098
    %v2279 = vunpack.c.h.b16 %v2098
    %v2280 = vunpack.c.l.b16 %v2099
    %v2281 = vunpack.c.h.b16 %v2099
    %v2282 = vunpack.c.l.b16 %v2100
    %v2283 = vunpack.c.h.b16 %v2100
    %v2284 = vunpack.c.l.b16 %v2101
    %v2285 = vunpack.c.h.b16 %v2101
    %v2286 = vunpack.c.l.b16 %v2102
    %v2287 = vunpack.c.h.b16 %v2102
    %v2288 = vunpack.c.l.b16 %v2103
    %v2289 = vunpack.c.h.b16 %v2103
    %v2290 = vunpack.c.l.b16 %v2104
    %v2291 = vunpack.c.h.b16 %v2104
    %v2292 = vunpack.c.l.b16 %v2105
    %v2293 = vunpack.c.h.b16 %v2105
    %v2294 = vunpack.c.l.b16 %v2106
    %v2295 = vunpack.c.h.b16 %v2106
    %v2296 = vunpack.c.l.b16 %v2107
    %v2297 = vunpack.c.h.b16 %v2107
    %v2298 = vunpack.c.l.b16 %v2108
    %v2299 = vunpack.c.h.b16 %v2108
    %v2300 = vunpack.c.l.b16 %v2109
    %v2301 = vunpack.c.h.b16 %v2109
    %v2302 = vunpack.c.l.b16 %v2110
    %v2303 = vunpack.c.h.b16 %v2110
    %v2304 = vunpack.c.l.b16 %v2111
    %v2305 = vunpack.c.h.b16 %v2111
    %v2306 = vunpack.c.l.b16 %v2112
    %v2307 = vunpack.c.h.b16 %v2112
    %v2308 = vunpack.c.l.b16 %v2113
    %v2309 = vunpack.c.h.b16 %v2113
    %v2310 = vunpack.c.l.b16 %v2114
    %v2311 = vunpack.c.h.b16 %v2114
    %v2312 = vunpack.c.l.b16 %v2115
    %v2313 = vunpack.c.h.b16 %v2115
    %v2314 = vunpack.c.l.b16 %v2116
    %v2315 = vunpack.c.h.b16 %v2116
    %v2316 = vunpack.c.l.b16 %v2117
    %v2317 = vunpack.c.h.b16 %v2117
    %v2318 = vunpack.c.l.b16 %v2118
    %v2319 = vunpack.c.h.b16 %v2118
    %v2320 = vunpack.c.l.b16 %v2119
    %v2321 = vunpack.c.h.b16 %v2119
    %v2322 = vunpack.c.l.b16 %v2120
    %v2323 = vunpack.c.h.b16 %v2120
    %v2324 = vunpack.c.l.b16 %v2121
    %v2325 = vunpack.c.h.b16 %v2121
    %v2326 = vunpack.c.l.b16 %v2122
    %v2327 = vunpack.c.h.b16 %v2122
    %v2328 = vunpack.c.l.b16 %v2123
    %v2329 = vunpack.c.h.b16 %v2123
    %v2330 = vunpack.c.l.b16 %v2124
    %v2331 = vunpack.c.h.b16 %v2124
    %v2332 = vunpack.c.l.b16 %v2125
    %v2333 = vunpack.c.h.b16 %v2125
    %v2334 = vunpack.c.l.b16 %v2126
    %v2335 = vunpack.c.h.b16 %v2126
    %v2336 = vunpack.c.l.b16 %v2127
    %v2337 = vunpack.c.h.b16 %v2127
    %v2338 = vunpack.c.l.b16 %v2128
    %v2339 = vunpack.c.h.b16 %v2128
    %v2340 = vunpack.c.l.b16 %v2129
    %v2341 = vunpack.c.h.b16 %v2129
    %v2342 = vunpack.c.l.b16 %v2130
    %v2343 = vunpack.c.h.b16 %v2130
    %v2344 = vunpack.c.l.b16 %v2131
    %v2345 = vunpack.c.h.b16 %v2131
    %v2346 = vpack.c.b16 %v2222, %v2218
    %v2347 = vpack.c.b16 %v2223, %v2219
    %v2348 = vpack.c.b16 %v2224, %v2220
    %v2349 = vpack.c.b16 %v2225, %v2221
    %v2350 = vpack.c.b16 %v2230, %v2226
    %v2351 = vpack.c.b16 %v2231, %v2227
    %v2352 = vpack.c.b16 %v2232, %v2228
    %v2353 = vpack.c.b16 %v2233, %v2229
    %v2354 = vpack.c.b16 %v2238, %v2234
    %v2355 = vpack.c.b16 %v2239, %v2235
    %v2356 = vpack.c.b16 %v2240, %v2236
    %v2357 = vpack.c.b16 %v2241, %v2237
    %v2358 = vpack.c.b16 %v2246, %v2242
    %v2359 = vpack.c.b16 %v2247, %v2243
    %v2360 = vpack.c.b16 %v2248, %v2244
    %v2361 = vpack.c.b16 %v2249, %v2245
    %v2362 = vpack.c.b16 %v2254, %v2250
    %v2363 = vpack.c.b16 %v2255, %v2251
    %v2364 = vpack.c.b16 %v2256, %v2252
    %v2365 = vpack.c.b16 %v2257, %v2253
    %v2366 = vpack.c.b16 %v2262, %v2258
    %v2367 = vpack.c.b16 %v2263, %v2259
    %v2368 = vpack.c.b16 %v2264, %v2260
    %v2369 = vpack.c.b16 %v2265, %v2261
    %v2370 = vpack.c.b16 %v2270, %v2266
    %v2371 = vpack.c.b16 %v2271, %v2267
    %v2372 = vpack.c.b16 %v2272, %v2268
    %v2373 = vpack.c.b16 %v2273, %v2269
    %v2374 = vpack.c.b16 %v2278, %v2274
    %v2375 = vpack.c.b16 %v2279, %v2275
    %v2376 = vpack.c.b16 %v2280, %v2276
    %v2377 = vpack.c.b16 %v2281, %v2277
    %v2378 = vpack.c.b16 %v2286, %v2282
    %v2379 = vpack.c.b16 %v2287, %v2283
    %v2380 = vpack.c.b16 %v2288, %v2284
    %v2381 = vpack.c.b16 %v2289, %v2285
    %v2382 = vpack.c.b16 %v2294, %v2290
    %v2383 = vpack.c.b16 %v2295, %v2291
    %v2384 = vpack.c.b16 %v2296, %v2292
    %v2385 = vpack.c.b16 %v2297, %v2293
    %v2386 = vpack.c.b16 %v2302, %v2298
    %v2387 = vpack.c.b16 %v2303, %v2299
    %v2388 = vpack.c.b16 %v2304, %v2300
    %v2389 = vpack.c.b16 %v2305, %v2301
    %v2390 = vpack.c.b16 %v2310, %v2306
    %v2391 = vpack.c.b16 %v2311, %v2307
    %v2392 = vpack.c.b16 %v2312, %v2308
    %v2393 = vpack.c.b16 %v2313, %v2309
    %v2394 = vpack.c.b16 %v2318, %v2314
    %v2395 = vpack.c.b16 %v2319, %v2315
    %v2396 = vpack.c.b16 %v2320, %v2316
    %v2397 = vpack.c.b16 %v2321, %v2317
    %v2398 = vpack.c.b16 %v2326, %v2322
    %v2399 = vpack.c.b16 %v2327, %v2323
    %v2400 = vpack.c.b16 %v2328, %v2324
    %v2401 = vpack.c.b16 %v2329, %v2325
    %v2402 = vpack.c.b16 %v2334, %v2330
    %v2403 = vpack.c.b16 %v2335, %v2331
    %v2404 = vpack.c.b16 %v2336, %v2332
    %v2405 = vpack.c.b16 %v2337, %v2333
    %v2406 = vpack.c.b16 %v2342, %v2338
    %v2407 = vpack.c.b16 %v2343, %v2339
    %v2408 = vpack.c.b16 %v2344, %v2340
    %v2409 = vpack.c.b16 %v2345, %v2341
    %2474 = vmatprep.subr.bf16.mxu0 %v2347
    %2475 = vmatpush1.bf16.msra.mxu0 %v2346
    %2476 = vmatprep.subr.bf16.mxu0 %v2351
    %2477 = vmatpush1.bf16.msra.mxu0 %v2350
    %2478 = vmatprep.subr.bf16.mxu0 %v2355
    %2479 = vmatpush1.bf16.msra.mxu0 %v2354
    %2480 = vmatprep.subr.bf16.mxu0 %v2359
    %2481 = vmatpush1.bf16.msra.mxu0 %v2358
    %2482 = vmatprep.subr.bf16.mxu0 %v2363
    %2483 = vmatpush1.bf16.msra.mxu0 %v2362
    %2484 = vmatprep.subr.bf16.mxu0 %v2367
    %2485 = vmatpush1.bf16.msra.mxu0 %v2366
    %2486 = vmatprep.subr.bf16.mxu0 %v2371
    %2487 = vmatpush1.bf16.msra.mxu0 %v2370
    %2488 = vmatprep.subr.bf16.mxu0 %v2375
    %2489 = vmatpush1.bf16.msra.mxu0 %v2374
    %2490 = vmatprep.subr.bf16.mxu0 %v2379
    %2491 = vmatpush1.bf16.msra.mxu0 %v2378
    %2492 = vmatprep.subr.bf16.mxu0 %v2383
    %2493 = vmatpush1.bf16.msra.mxu0 %v2382
    %2494 = vmatprep.subr.bf16.mxu0 %v2387
    %2495 = vmatpush1.bf16.msra.mxu0 %v2386
    %2496 = vmatprep.subr.bf16.mxu0 %v2391
    %2497 = vmatpush1.bf16.msra.mxu0 %v2390
    %2498 = vmatprep.subr.bf16.mxu0 %v2395
    %2499 = vmatpush1.bf16.msra.mxu0 %v2394
    %2500 = vmatprep.subr.bf16.mxu0 %v2399
    %2501 = vmatpush1.bf16.msra.mxu0 %v2398
    %2502 = vmatprep.subr.bf16.mxu0 %v2403
    %2503 = vmatpush1.bf16.msra.mxu0 %v2402
    %2504 = vmatprep.subr.bf16.mxu0 %v2407
    %2505 = vmatpush1.bf16.msra.mxu0 %v2406
    %2506 = vmatprep.mubr.bf16.mxu0 %v2067
    %2507 = vmatmul.mubr.bf16.gmra.mrb[0].mxu0 %v2066
    %v2508 = vpop.f32.mrb[0].mxu0
    %v2509 = vadd.f32 %v2137, %v2508
    %v2510 = vpop.f32.mrb[0].mxu0
    %v2511 = vadd.f32 %v2141, %v2510
    %v2512 = vpop.f32.mrb[0].mxu0
    %v2513 = vpop.f32.mrb[0].mxu0
    %2514 = vdwg.mxu0
    %2515 = vmatprep.subr.bf16.mxu0 %v2349
    %2516 = vmatpush1.bf16.msra.mxu0 %v2348
    %2517 = vmatprep.subr.bf16.mxu0 %v2353
    %2518 = vmatpush1.bf16.msra.mxu0 %v2352
    %2519 = vmatprep.subr.bf16.mxu0 %v2357
    %2520 = vmatpush1.bf16.msra.mxu0 %v2356
    %2521 = vmatprep.subr.bf16.mxu0 %v2361
    %2522 = vmatpush1.bf16.msra.mxu0 %v2360
    %2523 = vmatprep.subr.bf16.mxu0 %v2365
    %2524 = vmatpush1.bf16.msra.mxu0 %v2364
    %2525 = vmatprep.subr.bf16.mxu0 %v2369
    %2526 = vmatpush1.bf16.msra.mxu0 %v2368
    %2527 = vmatprep.subr.bf16.mxu0 %v2373
    %2528 = vmatpush1.bf16.msra.mxu0 %v2372
    %2529 = vmatprep.subr.bf16.mxu0 %v2377
    %2530 = vmatpush1.bf16.msra.mxu0 %v2376
    %2531 = vmatprep.subr.bf16.mxu0 %v2381
    %2532 = vmatpush1.bf16.msra.mxu0 %v2380
    %2533 = vmatprep.subr.bf16.mxu0 %v2385
    %2534 = vmatpush1.bf16.msra.mxu0 %v2384
    %2535 = vmatprep.subr.bf16.mxu0 %v2389
    %2536 = vmatpush1.bf16.msra.mxu0 %v2388
    %2537 = vmatprep.subr.bf16.mxu0 %v2393
    %2538 = vmatpush1.bf16.msra.mxu0 %v2392
    %2539 = vmatprep.subr.bf16.mxu0 %v2397
    %2540 = vmatpush1.bf16.msra.mxu0 %v2396
    %2541 = vmatprep.subr.bf16.mxu0 %v2401
    %2542 = vmatpush1.bf16.msra.mxu0 %v2400
    %2543 = vmatprep.subr.bf16.mxu0 %v2405
    %2544 = vmatpush1.bf16.msra.mxu0 %v2404
    %2545 = vmatprep.subr.bf16.mxu0 %v2409
    %2546 = vmatpush1.bf16.msra.mxu0 %v2408
    %2547 = vmatprep.mubr.bf16.mxu0 %v2067
    %2548 = vmatmul.mubr.bf16.gmra.mrb[0].mxu0 %v2066
    %v2549 = vpop.f32.mrb[0].mxu0
    %v2550 = vadd.f32 %v2145, %v2549
    %v2551 = vpop.f32.mrb[0].mxu0
    %v2552 = vadd.f32 %v2149, %v2551
    %v2553 = vpop.f32.mrb[0].mxu0
    %v2554 = vpop.f32.mrb[0].mxu0
    %2555 = vdwg.mxu0
    %v2556 = vmul.f32 %v2509, 0.2
    %v2557 = vmul.f32 %v2511, 0.2
    %v2558 = vmul.f32 %v2550, 0.2
    %v2559 = vmul.f32 %v2552, 0.2
    %v2560 = vmax.f32 %v2509, %v2556
    %v2561 = vmax.f32 %v2511, %v2557
    %v2562 = vmax.f32 %v2550, %v2558
    %v2563 = vmax.f32 %v2552, %v2559
    %v2564 = vpack.c.bf16 %v2560, %v2560
    %v2565 = vpack.c.bf16 %v2561, %v2561
    %v2566 = vpack.c.bf16 %v2562, %v2562
    %v2567 = vpack.c.bf16 %v2563, %v2563
    %v2568 = vld [vmem:[#allocation21] sm:$0xff]
    %v2569 = vld [vmem:[#allocation21 + $0x8] sm:$0xff]
    %v2570 = vld [vmem:[#allocation21 + $0x10] sm:$0xff]
    %v2571 = vld [vmem:[#allocation21 + $0x18] sm:$0xff]
    %v2572 = vld [vmem:[#allocation21 + $0x20] sm:$0xff]
    %v2573 = vld [vmem:[#allocation21 + $0x28] sm:$0xff]
    %v2574 = vld [vmem:[#allocation21 + $0x30] sm:$0xff]
    %v2575 = vld [vmem:[#allocation21 + $0x38] sm:$0xff]
    %v2576 = vld [vmem:[#allocation21 + $0x40] sm:$0xff]
    %v2577 = vld [vmem:[#allocation21 + $0x48] sm:$0xff]
    %v2578 = vld [vmem:[#allocation21 + $0x50] sm:$0xff]
    %v2579 = vld [vmem:[#allocation21 + $0x58] sm:$0xff]
    %v2580 = vld [vmem:[#allocation21 + $0x60] sm:$0xff]
    %v2581 = vld [vmem:[#allocation21 + $0x68] sm:$0xff]
    %v2582 = vld [vmem:[#allocation21 + $0x70] sm:$0xff]
    %v2583 = vld [vmem:[#allocation21 + $0x78] sm:$0xff]
    %v2584 = vld [vmem:[#allocation21 + $0x80] sm:$0xff]
    %v2585 = vld [vmem:[#allocation21 + $0x88] sm:$0xff]
    %v2586 = vld [vmem:[#allocation21 + $0x90] sm:$0xff]
    %v2587 = vld [vmem:[#allocation21 + $0x98] sm:$0xff]
    %v2588 = vld [vmem:[#allocation21 + $0xa0] sm:$0xff]
    %v2589 = vld [vmem:[#allocation21 + $0xa8] sm:$0xff]
    %v2590 = vld [vmem:[#allocation21 + $0xb0] sm:$0xff]
    %v2591 = vld [vmem:[#allocation21 + $0xb8] sm:$0xff]
    %v2592 = vld [vmem:[#allocation21 + $0xc0] sm:$0xff]
    %v2593 = vld [vmem:[#allocation21 + $0xc8] sm:$0xff]
    %v2594 = vld [vmem:[#allocation21 + $0xd0] sm:$0xff]
    %v2595 = vld [vmem:[#allocation21 + $0xd8] sm:$0xff]
    %v2596 = vld [vmem:[#allocation21 + $0xe0] sm:$0xff]
    %v2597 = vld [vmem:[#allocation21 + $0xe8] sm:$0xff]
    %v2598 = vld [vmem:[#allocation21 + $0xf0] sm:$0xff]
    %v2599 = vld [vmem:[#allocation21 + $0xf8] sm:$0xff]
    %v2600 = vld [vmem:[#allocation21 + $0x100] sm:$0xff]
    %v2601 = vld [vmem:[#allocation21 + $0x108] sm:$0xff]
    %v2602 = vld [vmem:[#allocation21 + $0x110] sm:$0xff]
    %v2603 = vld [vmem:[#allocation21 + $0x118] sm:$0xff]
    %v2604 = vld [vmem:[#allocation21 + $0x120] sm:$0xff]
    %v2605 = vld [vmem:[#allocation21 + $0x128] sm:$0xff]
    %v2606 = vld [vmem:[#allocation21 + $0x130] sm:$0xff]
    %v2607 = vld [vmem:[#allocation21 + $0x138] sm:$0xff]
    %v2608 = vld [vmem:[#allocation21 + $0x140] sm:$0xff]
    %v2609 = vld [vmem:[#allocation21 + $0x148] sm:$0xff]
    %v2610 = vld [vmem:[#allocation21 + $0x150] sm:$0xff]
    %v2611 = vld [vmem:[#allocation21 + $0x158] sm:$0xff]
    %v2612 = vld [vmem:[#allocation21 + $0x160] sm:$0xff]
    %v2613 = vld [vmem:[#allocation21 + $0x168] sm:$0xff]
    %v2614 = vld [vmem:[#allocation21 + $0x170] sm:$0xff]
    %v2615 = vld [vmem:[#allocation21 + $0x178] sm:$0xff]
    %v2616 = vld [vmem:[#allocation21 + $0x180] sm:$0xff]
    %v2617 = vld [vmem:[#allocation21 + $0x188] sm:$0xff]
    %v2618 = vld [vmem:[#allocation21 + $0x190] sm:$0xff]
    %v2619 = vld [vmem:[#allocation21 + $0x198] sm:$0xff]
    %v2620 = vld [vmem:[#allocation21 + $0x1a0] sm:$0xff]
    %v2621 = vld [vmem:[#allocation21 + $0x1a8] sm:$0xff]
    %v2622 = vld [vmem:[#allocation21 + $0x1b0] sm:$0xff]
    %v2623 = vld [vmem:[#allocation21 + $0x1b8] sm:$0xff]
    %v2624 = vld [vmem:[#allocation21 + $0x1c0] sm:$0xff]
    %v2625 = vld [vmem:[#allocation21 + $0x1c8] sm:$0xff]
    %v2626 = vld [vmem:[#allocation21 + $0x1d0] sm:$0xff]
    %v2627 = vld [vmem:[#allocation21 + $0x1d8] sm:$0xff]
    %v2628 = vld [vmem:[#allocation21 + $0x1e0] sm:$0xff]
    %v2629 = vld [vmem:[#allocation21 + $0x1e8] sm:$0xff]
    %v2630 = vld [vmem:[#allocation21 + $0x1f0] sm:$0xff]
    %v2631 = vld [vmem:[#allocation21 + $0x1f8] sm:$0xff]
    %v2632 = vld [vmem:[#allocation22] sm:$0x3]
    %v2634 = vlaneseq
    %v2635 = vshrl.u32 %v2634, 7
    %v2636 = vsub.s32 0, %v2635
    %v2637 = vrot.slane %v2632, %v2636
    %v2638 = vlaneseq
    %v2639 = vshrl.u32 %v2638, 7
    %v2640 = vsub.s32 1, %v2639
    %v2641 = vrot.slane %v2632, %v2640
    %v2708 = vunpack.c.l.b16 %v2568
    %v2709 = vunpack.c.h.b16 %v2568
    %v2710 = vunpack.c.l.b16 %v2569
    %v2711 = vunpack.c.h.b16 %v2569
    %v2712 = vunpack.c.l.b16 %v2570
    %v2713 = vunpack.c.h.b16 %v2570
    %v2714 = vunpack.c.l.b16 %v2571
    %v2715 = vunpack.c.h.b16 %v2571
    %v2716 = vunpack.c.l.b16 %v2572
    %v2717 = vunpack.c.h.b16 %v2572
    %v2718 = vunpack.c.l.b16 %v2573
    %v2719 = vunpack.c.h.b16 %v2573
    %v2720 = vunpack.c.l.b16 %v2574
    %v2721 = vunpack.c.h.b16 %v2574
    %v2722 = vunpack.c.l.b16 %v2575
    %v2723 = vunpack.c.h.b16 %v2575
    %v2724 = vunpack.c.l.b16 %v2576
    %v2725 = vunpack.c.h.b16 %v2576
    %v2726 = vunpack.c.l.b16 %v2577
    %v2727 = vunpack.c.h.b16 %v2577
    %v2728 = vunpack.c.l.b16 %v2578
    %v2729 = vunpack.c.h.b16 %v2578
    %v2730 = vunpack.c.l.b16 %v2579
    %v2731 = vunpack.c.h.b16 %v2579
    %v2732 = vunpack.c.l.b16 %v2580
    %v2733 = vunpack.c.h.b16 %v2580
    %v2734 = vunpack.c.l.b16 %v2581
    %v2735 = vunpack.c.h.b16 %v2581
    %v2736 = vunpack.c.l.b16 %v2582
    %v2737 = vunpack.c.h.b16 %v2582
    %v2738 = vunpack.c.l.b16 %v2583
    %v2739 = vunpack.c.h.b16 %v2583
    %v2740 = vunpack.c.l.b16 %v2584
    %v2741 = vunpack.c.h.b16 %v2584
    %v2742 = vunpack.c.l.b16 %v2585
    %v2743 = vunpack.c.h.b16 %v2585
    %v2744 = vunpack.c.l.b16 %v2586
    %v2745 = vunpack.c.h.b16 %v2586
    %v2746 = vunpack.c.l.b16 %v2587
    %v2747 = vunpack.c.h.b16 %v2587
    %v2748 = vunpack.c.l.b16 %v2588
    %v2749 = vunpack.c.h.b16 %v2588
    %v2750 = vunpack.c.l.b16 %v2589
    %v2751 = vunpack.c.h.b16 %v2589
    %v2752 = vunpack.c.l.b16 %v2590
    %v2753 = vunpack.c.h.b16 %v2590
    %v2754 = vunpack.c.l.b16 %v2591
    %v2755 = vunpack.c.h.b16 %v2591
    %v2756 = vunpack.c.l.b16 %v2592
    %v2757 = vunpack.c.h.b16 %v2592
    %v2758 = vunpack.c.l.b16 %v2593
    %v2759 = vunpack.c.h.b16 %v2593
    %v2760 = vunpack.c.l.b16 %v2594
    %v2761 = vunpack.c.h.b16 %v2594
    %v2762 = vunpack.c.l.b16 %v2595
    %v2763 = vunpack.c.h.b16 %v2595
    %v2764 = vunpack.c.l.b16 %v2596
    %v2765 = vunpack.c.h.b16 %v2596
    %v2766 = vunpack.c.l.b16 %v2597
    %v2767 = vunpack.c.h.b16 %v2597
    %v2768 = vunpack.c.l.b16 %v2598
    %v2769 = vunpack.c.h.b16 %v2598
    %v2770 = vunpack.c.l.b16 %v2599
    %v2771 = vunpack.c.h.b16 %v2599
    %v2772 = vunpack.c.l.b16 %v2600
    %v2773 = vunpack.c.h.b16 %v2600
    %v2774 = vunpack.c.l.b16 %v2601
    %v2775 = vunpack.c.h.b16 %v2601
    %v2776 = vunpack.c.l.b16 %v2602
    %v2777 = vunpack.c.h.b16 %v2602
    %v2778 = vunpack.c.l.b16 %v2603
    %v2779 = vunpack.c.h.b16 %v2603
    %v2780 = vunpack.c.l.b16 %v2604
    %v2781 = vunpack.c.h.b16 %v2604
    %v2782 = vunpack.c.l.b16 %v2605
    %v2783 = vunpack.c.h.b16 %v2605
    %v2784 = vunpack.c.l.b16 %v2606
    %v2785 = vunpack.c.h.b16 %v2606
    %v2786 = vunpack.c.l.b16 %v2607
    %v2787 = vunpack.c.h.b16 %v2607
    %v2788 = vunpack.c.l.b16 %v2608
    %v2789 = vunpack.c.h.b16 %v2608
    %v2790 = vunpack.c.l.b16 %v2609
    %v2791 = vunpack.c.h.b16 %v2609
    %v2792 = vunpack.c.l.b16 %v2610
    %v2793 = vunpack.c.h.b16 %v2610
    %v2794 = vunpack.c.l.b16 %v2611
    %v2795 = vunpack.c.h.b16 %v2611
    %v2796 = vunpack.c.l.b16 %v2612
    %v2797 = vunpack.c.h.b16 %v2612
    %v2798 = vunpack.c.l.b16 %v2613
    %v2799 = vunpack.c.h.b16 %v2613
    %v2800 = vunpack.c.l.b16 %v2614
    %v2801 = vunpack.c.h.b16 %v2614
    %v2802 = vunpack.c.l.b16 %v2615
    %v2803 = vunpack.c.h.b16 %v2615
    %v2804 = vunpack.c.l.b16 %v2616
    %v2805 = vunpack.c.h.b16 %v2616
    %v2806 = vunpack.c.l.b16 %v2617
    %v2807 = vunpack.c.h.b16 %v2617
    %v2808 = vunpack.c.l.b16 %v2618
    %v2809 = vunpack.c.h.b16 %v2618
    %v2810 = vunpack.c.l.b16 %v2619
    %v2811 = vunpack.c.h.b16 %v2619
    %v2812 = vunpack.c.l.b16 %v2620
    %v2813 = vunpack.c.h.b16 %v2620
    %v2814 = vunpack.c.l.b16 %v2621
    %v2815 = vunpack.c.h.b16 %v2621
    %v2816 = vunpack.c.l.b16 %v2622
    %v2817 = vunpack.c.h.b16 %v2622
    %v2818 = vunpack.c.l.b16 %v2623
    %v2819 = vunpack.c.h.b16 %v2623
    %v2820 = vunpack.c.l.b16 %v2624
    %v2821 = vunpack.c.h.b16 %v2624
    %v2822 = vunpack.c.l.b16 %v2625
    %v2823 = vunpack.c.h.b16 %v2625
    %v2824 = vunpack.c.l.b16 %v2626
    %v2825 = vunpack.c.h.b16 %v2626
    %v2826 = vunpack.c.l.b16 %v2627
    %v2827 = vunpack.c.h.b16 %v2627
    %v2828 = vunpack.c.l.b16 %v2628
    %v2829 = vunpack.c.h.b16 %v2628
    %v2830 = vunpack.c.l.b16 %v2629
    %v2831 = vunpack.c.h.b16 %v2629
    %v2832 = vunpack.c.l.b16 %v2630
    %v2833 = vunpack.c.h.b16 %v2630
    %v2834 = vunpack.c.l.b16 %v2631
    %v2835 = vunpack.c.h.b16 %v2631
    %v2836 = vpack.c.b16 %v2710, %v2708
    %v2837 = vpack.c.b16 %v2711, %v2709
    %v2838 = vpack.c.b16 %v2714, %v2712
    %v2839 = vpack.c.b16 %v2715, %v2713
    %v2840 = vpack.c.b16 %v2718, %v2716
    %v2841 = vpack.c.b16 %v2719, %v2717
    %v2842 = vpack.c.b16 %v2722, %v2720
    %v2843 = vpack.c.b16 %v2723, %v2721
    %v2844 = vpack.c.b16 %v2726, %v2724
    %v2845 = vpack.c.b16 %v2727, %v2725
    %v2846 = vpack.c.b16 %v2730, %v2728
    %v2847 = vpack.c.b16 %v2731, %v2729
    %v2848 = vpack.c.b16 %v2734, %v2732
    %v2849 = vpack.c.b16 %v2735, %v2733
    %v2850 = vpack.c.b16 %v2738, %v2736
    %v2851 = vpack.c.b16 %v2739, %v2737
    %v2852 = vpack.c.b16 %v2742, %v2740
    %v2853 = vpack.c.b16 %v2743, %v2741
    %v2854 = vpack.c.b16 %v2746, %v2744
    %v2855 = vpack.c.b16 %v2747, %v2745
    %v2856 = vpack.c.b16 %v2750, %v2748
    %v2857 = vpack.c.b16 %v2751, %v2749
    %v2858 = vpack.c.b16 %v2754, %v2752
    %v2859 = vpack.c.b16 %v2755, %v2753
    %v2860 = vpack.c.b16 %v2758, %v2756
    %v2861 = vpack.c.b16 %v2759, %v2757
    %v2862 = vpack.c.b16 %v2762, %v2760
    %v2863 = vpack.c.b16 %v2763, %v2761
    %v2864 = vpack.c.b16 %v2766, %v2764
    %v2865 = vpack.c.b16 %v2767, %v2765
    %v2866 = vpack.c.b16 %v2770, %v2768
    %v2867 = vpack.c.b16 %v2771, %v2769
    %v2868 = vpack.c.b16 %v2774, %v2772
    %v2869 = vpack.c.b16 %v2775, %v2773
    %v2870 = vpack.c.b16 %v2778, %v2776
    %v2871 = vpack.c.b16 %v2779, %v2777
    %v2872 = vpack.c.b16 %v2782, %v2780
    %v2873 = vpack.c.b16 %v2783, %v2781
    %v2874 = vpack.c.b16 %v2786, %v2784
    %v2875 = vpack.c.b16 %v2787, %v2785
    %v2876 = vpack.c.b16 %v2790, %v2788
    %v2877 = vpack.c.b16 %v2791, %v2789
    %v2878 = vpack.c.b16 %v2794, %v2792
    %v2879 = vpack.c.b16 %v2795, %v2793
    %v2880 = vpack.c.b16 %v2798, %v2796
    %v2881 = vpack.c.b16 %v2799, %v2797
    %v2882 = vpack.c.b16 %v2802, %v2800
    %v2883 = vpack.c.b16 %v2803, %v2801
    %v2884 = vpack.c.b16 %v2806, %v2804
    %v2885 = vpack.c.b16 %v2807, %v2805
    %v2886 = vpack.c.b16 %v2810, %v2808
    %v2887 = vpack.c.b16 %v2811, %v2809
    %v2888 = vpack.c.b16 %v2814, %v2812
    %v2889 = vpack.c.b16 %v2815, %v2813
    %v2890 = vpack.c.b16 %v2818, %v2816
    %v2891 = vpack.c.b16 %v2819, %v2817
    %v2892 = vpack.c.b16 %v2822, %v2820
    %v2893 = vpack.c.b16 %v2823, %v2821
    %v2894 = vpack.c.b16 %v2826, %v2824
    %v2895 = vpack.c.b16 %v2827, %v2825
    %v2896 = vpack.c.b16 %v2830, %v2828
    %v2897 = vpack.c.b16 %v2831, %v2829
    %v2898 = vpack.c.b16 %v2834, %v2832
    %v2899 = vpack.c.b16 %v2835, %v2833
    %2964 = vmatprep.subr.bf16.mxu0 %v2837
    %2965 = vmatpush1.bf16.msra.mxu0 %v2836
    %2966 = vmatprep.subr.bf16.mxu0 %v2839
    %2967 = vmatpush1.bf16.msra.mxu0 %v2838
    %2968 = vmatprep.subr.bf16.mxu0 %v2841
    %2969 = vmatpush1.bf16.msra.mxu0 %v2840
    %2970 = vmatprep.subr.bf16.mxu0 %v2843
    %2971 = vmatpush1.bf16.msra.mxu0 %v2842
    %2972 = vmatprep.subr.bf16.mxu0 %v2845
    %2973 = vmatpush1.bf16.msra.mxu0 %v2844
    %2974 = vmatprep.subr.bf16.mxu0 %v2847
    %2975 = vmatpush1.bf16.msra.mxu0 %v2846
    %2976 = vmatprep.subr.bf16.mxu0 %v2849
    %2977 = vmatpush1.bf16.msra.mxu0 %v2848
    %2978 = vmatprep.subr.bf16.mxu0 %v2851
    %2979 = vmatpush1.bf16.msra.mxu0 %v2850
    %2980 = vmatprep.subr.bf16.mxu0 %v2853
    %2981 = vmatpush1.bf16.msra.mxu0 %v2852
    %2982 = vmatprep.subr.bf16.mxu0 %v2855
    %2983 = vmatpush1.bf16.msra.mxu0 %v2854
    %2984 = vmatprep.subr.bf16.mxu0 %v2857
    %2985 = vmatpush1.bf16.msra.mxu0 %v2856
    %2986 = vmatprep.subr.bf16.mxu0 %v2859
    %2987 = vmatpush1.bf16.msra.mxu0 %v2858
    %2988 = vmatprep.subr.bf16.mxu0 %v2861
    %2989 = vmatpush1.bf16.msra.mxu0 %v2860
    %2990 = vmatprep.subr.bf16.mxu0 %v2863
    %2991 = vmatpush1.bf16.msra.mxu0 %v2862
    %2992 = vmatprep.subr.bf16.mxu0 %v2865
    %2993 = vmatpush1.bf16.msra.mxu0 %v2864
    %2994 = vmatprep.subr.bf16.mxu0 %v2867
    %2995 = vmatpush1.bf16.msra.mxu0 %v2866
    %2996 = vmatprep.mubr.bf16.mxu0 %v2565
    %2997 = vmatmul.mubr.bf16.gmra.mrb[0].mxu0 %v2564
    %v2998 = vpop.f32.mrb[0].mxu0
    %v2999 = vadd.f32 %v2637, %v2998
    %v3000 = vpop.f32.mrb[0].mxu0
    %v3001 = vadd.f32 %v2641, %v3000
    %v3002 = vpop.f32.mrb[0].mxu0
    %v3003 = vpop.f32.mrb[0].mxu0
    %3004 = vdwg.mxu0
    %3005 = vmatprep.subr.bf16.mxu0 %v2869
    %3006 = vmatpush1.bf16.msra.mxu0 %v2868
    %3007 = vmatprep.subr.bf16.mxu0 %v2871
    %3008 = vmatpush1.bf16.msra.mxu0 %v2870
    %3009 = vmatprep.subr.bf16.mxu0 %v2873
    %3010 = vmatpush1.bf16.msra.mxu0 %v2872
    %3011 = vmatprep.subr.bf16.mxu0 %v2875
    %3012 = vmatpush1.bf16.msra.mxu0 %v2874
    %3013 = vmatprep.subr.bf16.mxu0 %v2877
    %3014 = vmatpush1.bf16.msra.mxu0 %v2876
    %3015 = vmatprep.subr.bf16.mxu0 %v2879
    %3016 = vmatpush1.bf16.msra.mxu0 %v2878
    %3017 = vmatprep.subr.bf16.mxu0 %v2881
    %3018 = vmatpush1.bf16.msra.mxu0 %v2880
    %3019 = vmatprep.subr.bf16.mxu0 %v2883
    %3020 = vmatpush1.bf16.msra.mxu0 %v2882
    %3021 = vmatprep.subr.bf16.mxu0 %v2885
    %3022 = vmatpush1.bf16.msra.mxu0 %v2884
    %3023 = vmatprep.subr.bf16.mxu0 %v2887
    %3024 = vmatpush1.bf16.msra.mxu0 %v2886
    %3025 = vmatprep.subr.bf16.mxu0 %v2889
    %3026 = vmatpush1.bf16.msra.mxu0 %v2888
    %3027 = vmatprep.subr.bf16.mxu0 %v2891
    %3028 = vmatpush1.bf16.msra.mxu0 %v2890
    %3029 = vmatprep.subr.bf16.mxu0 %v2893
    %3030 = vmatpush1.bf16.msra.mxu0 %v2892
    %3031 = vmatprep.subr.bf16.mxu0 %v2895
    %3032 = vmatpush1.bf16.msra.mxu0 %v2894
    %3033 = vmatprep.subr.bf16.mxu0 %v2897
    %3034 = vmatpush1.bf16.msra.mxu0 %v2896
    %3035 = vmatprep.subr.bf16.mxu0 %v2899
    %3036 = vmatpush1.bf16.msra.mxu0 %v2898
    %3037 = vmatprep.mubr.bf16.mxu0 %v2567
    %3038 = vmatmul.mubr.bf16.gmra.mrb[0].mxu0 %v2566
    %v3039 = vpop.f32.mrb[0].mxu0
    %v3040 = vadd.f32 %v2999, %v3039
    %v3041 = vpop.f32.mrb[0].mxu0
    %v3042 = vadd.f32 %v3001, %v3041
    %v3043 = vpop.f32.mrb[0].mxu0
    %v3044 = vpop.f32.mrb[0].mxu0
    %3045 = vdwg.mxu0
    %v3046 = vsub.f32 0.0, %v3040
    %v3047 = vsub.f32 0.0, %v3042
    %v3048 = vmul.f32 %v3046, 1.442695
    %v3049 = vpow.pop %v3048
    %v3050 = vmul.f32 %v3047, 1.442695
    %v3051 = vpow.pop %v3050
    %v3052 = vadd.f32 %v3049, 1.0
    %v3053 = vadd.f32 %v3051, 1.0
    %v3054 = vrcp.pop %v3052
    %v3055 = vrcp.pop %v3053
    %3056 = vst [vmem:[%s65] sm:$0xff] %v3054
    %3057 = vst [vmem:[%s65 + $0x8] sm:$0xff] %v3055
    %v3058 = vpack.c.bf16 %v1911, %v1911
    %v3059 = vld [vmem:[#allocation24] sm:$0xff]
    %v3060 = vld [vmem:[#allocation24 + $0x8] sm:$0xff]
    %v3061 = vld [vmem:[#allocation24 + $0x10] sm:$0xff]
    %v3062 = vld [vmem:[#allocation24 + $0x18] sm:$0xff]
    %v3063 = vld [vmem:[#allocation24 + $0x20] sm:$0xff]
    %v3064 = vld [vmem:[#allocation24 + $0x28] sm:$0xff]
    %v3065 = vld [vmem:[#allocation24 + $0x30] sm:$0xff]
    %v3066 = vld [vmem:[#allocation24 + $0x38] sm:$0xff]
    %v3067 = vld [vmem:[#allocation24 + $0x40] sm:$0xff]
    %v3068 = vld [vmem:[#allocation24 + $0x48] sm:$0xff]
    %v3069 = vld [vmem:[#allocation24 + $0x50] sm:$0xff]
    %v3070 = vld [vmem:[#allocation24 + $0x58] sm:$0xff]
    %v3071 = vld [vmem:[#allocation24 + $0x60] sm:$0xff]
    %v3072 = vld [vmem:[#allocation24 + $0x68] sm:$0xff]
    %v3073 = vld [vmem:[#allocation24 + $0x70] sm:$0xff]
    %v3074 = vld [vmem:[#allocation24 + $0x78] sm:$0xff]
    %v3075 = vld [vmem:[#allocation25] sm:$0x3]
    %v3077 = vlaneseq
    %v3078 = vshrl.u32 %v3077, 7
    %v3079 = vsub.s32 0, %v3078
    %v3080 = vrot.slane %v3075, %v3079
    %v3081 = vlaneseq
    %v3082 = vshrl.u32 %v3081, 7
    %v3083 = vsub.s32 1, %v3082
    %v3084 = vrot.slane %v3075, %v3083
    %v3103 = vunpack.c.l.b16 %v3059
    %v3104 = vunpack.c.h.b16 %v3059
    %v3105 = vunpack.c.l.b16 %v3060
    %v3106 = vunpack.c.h.b16 %v3060
    %v3107 = vunpack.c.l.b16 %v3061
    %v3108 = vunpack.c.h.b16 %v3061
    %v3109 = vunpack.c.l.b16 %v3062
    %v3110 = vunpack.c.h.b16 %v3062
    %v3111 = vunpack.c.l.b16 %v3063
    %v3112 = vunpack.c.h.b16 %v3063
    %v3113 = vunpack.c.l.b16 %v3064
    %v3114 = vunpack.c.h.b16 %v3064
    %v3115 = vunpack.c.l.b16 %v3065
    %v3116 = vunpack.c.h.b16 %v3065
    %v3117 = vunpack.c.l.b16 %v3066
    %v3118 = vunpack.c.h.b16 %v3066
    %v3119 = vunpack.c.l.b16 %v3067
    %v3120 = vunpack.c.h.b16 %v3067
    %v3121 = vunpack.c.l.b16 %v3068
    %v3122 = vunpack.c.h.b16 %v3068
    %v3123 = vunpack.c.l.b16 %v3069
    %v3124 = vunpack.c.h.b16 %v3069
    %v3125 = vunpack.c.l.b16 %v3070
    %v3126 = vunpack.c.h.b16 %v3070
    %v3127 = vunpack.c.l.b16 %v3071
    %v3128 = vunpack.c.h.b16 %v3071
    %v3129 = vunpack.c.l.b16 %v3072
    %v3130 = vunpack.c.h.b16 %v3072
    %v3131 = vunpack.c.l.b16 %v3073
    %v3132 = vunpack.c.h.b16 %v3073
    %v3133 = vunpack.c.l.b16 %v3074
    %v3134 = vunpack.c.h.b16 %v3074
    %v3135 = vpack.c.b16 %v3105, %v3103
    %v3136 = vpack.c.b16 %v3106, %v3104
    %v3137 = vpack.c.b16 %v3109, %v3107
    %v3138 = vpack.c.b16 %v3110, %v3108
    %v3139 = vpack.c.b16 %v3113, %v3111
    %v3140 = vpack.c.b16 %v3114, %v3112
    %v3141 = vpack.c.b16 %v3117, %v3115
    %v3142 = vpack.c.b16 %v3118, %v3116
    %v3143 = vpack.c.b16 %v3121, %v3119
    %v3144 = vpack.c.b16 %v3122, %v3120
    %v3145 = vpack.c.b16 %v3125, %v3123
    %v3146 = vpack.c.b16 %v3126, %v3124
    %v3147 = vpack.c.b16 %v3129, %v3127
    %v3148 = vpack.c.b16 %v3130, %v3128
    %v3149 = vpack.c.b16 %v3133, %v3131
    %v3150 = vpack.c.b16 %v3134, %v3132
    %3167 = vmatprep.subr.bf16.mxu0 %v3136
    %3168 = vmatpush1.bf16.msra.mxu0 %v3135
    %3169 = vmatprep.subr.bf16.mxu0 %v3138
    %3170 = vmatpush1.bf16.msra.mxu0 %v3137
    %3171 = vmatprep.subr.bf16.mxu0 %v3140
    %3172 = vmatpush1.bf16.msra.mxu0 %v3139
    %3173 = vmatprep.subr.bf16.mxu0 %v3142
    %3174 = vmatpush1.bf16.msra.mxu0 %v3141
    %3175 = vmatprep.subr.bf16.mxu0 %v3144
    %3176 = vmatpush1.bf16.msra.mxu0 %v3143
    %3177 = vmatprep.subr.bf16.mxu0 %v3146
    %3178 = vmatpush1.bf16.msra.mxu0 %v3145
    %3179 = vmatprep.subr.bf16.mxu0 %v3148
    %3180 = vmatpush1.bf16.msra.mxu0 %v3147
    %3181 = vmatprep.subr.bf16.mxu0 %v3150
    %3182 = vmatpush1.bf16.msra.mxu0 %v3149
    %3183 = vmatprep.subr.bf16.mxu0 0
    %3184 = vmatpush1.bf16.msra.mxu0 0
    %3185 = vmatprep.subr.bf16.mxu0 0
    %3186 = vmatpush1.bf16.msra.mxu0 0
    %3187 = vmatprep.subr.bf16.mxu0 0
    %3188 = vmatpush1.bf16.msra.mxu0 0
    %3189 = vmatprep.subr.bf16.mxu0 0
    %3190 = vmatpush1.bf16.msra.mxu0 0
    %3191 = vmatprep.subr.bf16.mxu0 0
    %3192 = vmatpush1.bf16.msra.mxu0 0
    %3193 = vmatprep.subr.bf16.mxu0 0
    %3194 = vmatpush1.bf16.msra.mxu0 0
    %3195 = vmatprep.subr.bf16.mxu0 0
    %3196 = vmatpush1.bf16.msra.mxu0 0
    %3197 = vmatprep.subr.bf16.mxu0 0
    %3198 = vmatpush1.bf16.msra.mxu0 0
    %3199 = vmatprep.mubr.bf16.mxu0 0
    %3200 = vmatmul.mubr.bf16.gmra.mrb[0].mxu0 %v3058
    %v3201 = vpop.f32.mrb[0].mxu0
    %v3202 = vadd.f32 %v3080, %v3201
    %v3203 = vpop.f32.mrb[0].mxu0
    %v3204 = vadd.f32 %v3084, %v3203
    %v3205 = vpop.f32.mrb[0].mxu0
    %v3206 = vpop.f32.mrb[0].mxu0
    %3207 = vdwg.mxu0
    %v3208 = vmul.f32 %v3202, 0.2
    %v3209 = vmul.f32 %v3204, 0.2
    %v3210 = vmax.f32 %v3202, %v3208
    %v3211 = vmax.f32 %v3204, %v3209
    %v3212 = vpack.c.bf16 %v3210, %v3210
    %v3213 = vpack.c.bf16 %v3211, %v3211
    %v3214 = vld [vmem:[#allocation27] sm:$0xff]
    %v3215 = vld [vmem:[#allocation27 + $0x8] sm:$0xff]
    %v3216 = vld [vmem:[#allocation27 + $0x10] sm:$0xff]
    %v3217 = vld [vmem:[#allocation27 + $0x18] sm:$0xff]
    %v3218 = vld [vmem:[#allocation27 + $0x20] sm:$0xff]
    %v3219 = vld [vmem:[#allocation27 + $0x28] sm:$0xff]
    %v3220 = vld [vmem:[#allocation27 + $0x30] sm:$0xff]
    %v3221 = vld [vmem:[#allocation27 + $0x38] sm:$0xff]
    %v3222 = vld [vmem:[#allocation27 + $0x40] sm:$0xff]
    %v3223 = vld [vmem:[#allocation27 + $0x48] sm:$0xff]
    %v3224 = vld [vmem:[#allocation27 + $0x50] sm:$0xff]
    %v3225 = vld [vmem:[#allocation27 + $0x58] sm:$0xff]
    %v3226 = vld [vmem:[#allocation27 + $0x60] sm:$0xff]
    %v3227 = vld [vmem:[#allocation27 + $0x68] sm:$0xff]
    %v3228 = vld [vmem:[#allocation27 + $0x70] sm:$0xff]
    %v3229 = vld [vmem:[#allocation27 + $0x78] sm:$0xff]
    %v3230 = vld [vmem:[#allocation27 + $0x80] sm:$0xff]
    %v3231 = vld [vmem:[#allocation27 + $0x88] sm:$0xff]
    %v3232 = vld [vmem:[#allocation27 + $0x90] sm:$0xff]
    %v3233 = vld [vmem:[#allocation27 + $0x98] sm:$0xff]
    %v3234 = vld [vmem:[#allocation27 + $0xa0] sm:$0xff]
    %v3235 = vld [vmem:[#allocation27 + $0xa8] sm:$0xff]
    %v3236 = vld [vmem:[#allocation27 + $0xb0] sm:$0xff]
    %v3237 = vld [vmem:[#allocation27 + $0xb8] sm:$0xff]
    %v3238 = vld [vmem:[#allocation27 + $0xc0] sm:$0xff]
    %v3239 = vld [vmem:[#allocation27 + $0xc8] sm:$0xff]
    %v3240 = vld [vmem:[#allocation27 + $0xd0] sm:$0xff]
    %v3241 = vld [vmem:[#allocation27 + $0xd8] sm:$0xff]
    %v3242 = vld [vmem:[#allocation27 + $0xe0] sm:$0xff]
    %v3243 = vld [vmem:[#allocation27 + $0xe8] sm:$0xff]
    %v3244 = vld [vmem:[#allocation27 + $0xf0] sm:$0xff]
    %v3245 = vld [vmem:[#allocation27 + $0xf8] sm:$0xff]
    %v3246 = vld [vmem:[#allocation27 + $0x100] sm:$0xff]
    %v3247 = vld [vmem:[#allocation27 + $0x108] sm:$0xff]
    %v3248 = vld [vmem:[#allocation27 + $0x110] sm:$0xff]
    %v3249 = vld [vmem:[#allocation27 + $0x118] sm:$0xff]
    %v3250 = vld [vmem:[#allocation27 + $0x120] sm:$0xff]
    %v3251 = vld [vmem:[#allocation27 + $0x128] sm:$0xff]
    %v3252 = vld [vmem:[#allocation27 + $0x130] sm:$0xff]
    %v3253 = vld [vmem:[#allocation27 + $0x138] sm:$0xff]
    %v3254 = vld [vmem:[#allocation27 + $0x140] sm:$0xff]
    %v3255 = vld [vmem:[#allocation27 + $0x148] sm:$0xff]
    %v3256 = vld [vmem:[#allocation27 + $0x150] sm:$0xff]
    %v3257 = vld [vmem:[#allocation27 + $0x158] sm:$0xff]
    %v3258 = vld [vmem:[#allocation27 + $0x160] sm:$0xff]
    %v3259 = vld [vmem:[#allocation27 + $0x168] sm:$0xff]
    %v3260 = vld [vmem:[#allocation27 + $0x170] sm:$0xff]
    %v3261 = vld [vmem:[#allocation27 + $0x178] sm:$0xff]
    %v3262 = vld [vmem:[#allocation27 + $0x180] sm:$0xff]
    %v3263 = vld [vmem:[#allocation27 + $0x188] sm:$0xff]
    %v3264 = vld [vmem:[#allocation27 + $0x190] sm:$0xff]
    %v3265 = vld [vmem:[#allocation27 + $0x198] sm:$0xff]
    %v3266 = vld [vmem:[#allocation27 + $0x1a0] sm:$0xff]
    %v3267 = vld [vmem:[#allocation27 + $0x1a8] sm:$0xff]
    %v3268 = vld [vmem:[#allocation27 + $0x1b0] sm:$0xff]
    %v3269 = vld [vmem:[#allocation27 + $0x1b8] sm:$0xff]
    %v3270 = vld [vmem:[#allocation27 + $0x1c0] sm:$0xff]
    %v3271 = vld [vmem:[#allocation27 + $0x1c8] sm:$0xff]
    %v3272 = vld [vmem:[#allocation27 + $0x1d0] sm:$0xff]
    %v3273 = vld [vmem:[#allocation27 + $0x1d8] sm:$0xff]
    %v3274 = vld [vmem:[#allocation27 + $0x1e0] sm:$0xff]
    %v3275 = vld [vmem:[#allocation27 + $0x1e8] sm:$0xff]
    %v3276 = vld [vmem:[#allocation27 + $0x1f0] sm:$0xff]
    %v3277 = vld [vmem:[#allocation27 + $0x1f8] sm:$0xff]
    %v3278 = vld [vmem:[#allocation28] sm:$0xf]
    %v3280 = vlaneseq
    %v3281 = vshrl.u32 %v3280, 7
    %v3282 = vsub.s32 0, %v3281
    %v3283 = vrot.slane %v3278, %v3282
    %v3284 = vlaneseq
    %v3285 = vshrl.u32 %v3284, 7
    %v3286 = vsub.s32 1, %v3285
    %v3287 = vrot.slane %v3278, %v3286
    %v3288 = vlaneseq
    %v3289 = vshrl.u32 %v3288, 7
    %v3290 = vsub.s32 2, %v3289
    %v3291 = vrot.slane %v3278, %v3290
    %v3292 = vlaneseq
    %v3293 = vshrl.u32 %v3292, 7
    %v3294 = vsub.s32 3, %v3293
    %v3295 = vrot.slane %v3278, %v3294
    %v3364 = vunpack.c.l.b16 %v3214
    %v3365 = vunpack.c.h.b16 %v3214
    %v3366 = vunpack.c.l.b16 %v3215
    %v3367 = vunpack.c.h.b16 %v3215
    %v3368 = vunpack.c.l.b16 %v3216
    %v3369 = vunpack.c.h.b16 %v3216
    %v3370 = vunpack.c.l.b16 %v3217
    %v3371 = vunpack.c.h.b16 %v3217
    %v3372 = vunpack.c.l.b16 %v3218
    %v3373 = vunpack.c.h.b16 %v3218
    %v3374 = vunpack.c.l.b16 %v3219
    %v3375 = vunpack.c.h.b16 %v3219
    %v3376 = vunpack.c.l.b16 %v3220
    %v3377 = vunpack.c.h.b16 %v3220
    %v3378 = vunpack.c.l.b16 %v3221
    %v3379 = vunpack.c.h.b16 %v3221
    %v3380 = vunpack.c.l.b16 %v3222
    %v3381 = vunpack.c.h.b16 %v3222
    %v3382 = vunpack.c.l.b16 %v3223
    %v3383 = vunpack.c.h.b16 %v3223
    %v3384 = vunpack.c.l.b16 %v3224
    %v3385 = vunpack.c.h.b16 %v3224
    %v3386 = vunpack.c.l.b16 %v3225
    %v3387 = vunpack.c.h.b16 %v3225
    %v3388 = vunpack.c.l.b16 %v3226
    %v3389 = vunpack.c.h.b16 %v3226
    %v3390 = vunpack.c.l.b16 %v3227
    %v3391 = vunpack.c.h.b16 %v3227
    %v3392 = vunpack.c.l.b16 %v3228
    %v3393 = vunpack.c.h.b16 %v3228
    %v3394 = vunpack.c.l.b16 %v3229
    %v3395 = vunpack.c.h.b16 %v3229
    %v3396 = vunpack.c.l.b16 %v3230
    %v3397 = vunpack.c.h.b16 %v3230
    %v3398 = vunpack.c.l.b16 %v3231
    %v3399 = vunpack.c.h.b16 %v3231
    %v3400 = vunpack.c.l.b16 %v3232
    %v3401 = vunpack.c.h.b16 %v3232
    %v3402 = vunpack.c.l.b16 %v3233
    %v3403 = vunpack.c.h.b16 %v3233
    %v3404 = vunpack.c.l.b16 %v3234
    %v3405 = vunpack.c.h.b16 %v3234
    %v3406 = vunpack.c.l.b16 %v3235
    %v3407 = vunpack.c.h.b16 %v3235
    %v3408 = vunpack.c.l.b16 %v3236
    %v3409 = vunpack.c.h.b16 %v3236
    %v3410 = vunpack.c.l.b16 %v3237
    %v3411 = vunpack.c.h.b16 %v3237
    %v3412 = vunpack.c.l.b16 %v3238
    %v3413 = vunpack.c.h.b16 %v3238
    %v3414 = vunpack.c.l.b16 %v3239
    %v3415 = vunpack.c.h.b16 %v3239
    %v3416 = vunpack.c.l.b16 %v3240
    %v3417 = vunpack.c.h.b16 %v3240
    %v3418 = vunpack.c.l.b16 %v3241
    %v3419 = vunpack.c.h.b16 %v3241
    %v3420 = vunpack.c.l.b16 %v3242
    %v3421 = vunpack.c.h.b16 %v3242
    %v3422 = vunpack.c.l.b16 %v3243
    %v3423 = vunpack.c.h.b16 %v3243
    %v3424 = vunpack.c.l.b16 %v3244
    %v3425 = vunpack.c.h.b16 %v3244
    %v3426 = vunpack.c.l.b16 %v3245
    %v3427 = vunpack.c.h.b16 %v3245
    %v3428 = vunpack.c.l.b16 %v3246
    %v3429 = vunpack.c.h.b16 %v3246
    %v3430 = vunpack.c.l.b16 %v3247
    %v3431 = vunpack.c.h.b16 %v3247
    %v3432 = vunpack.c.l.b16 %v3248
    %v3433 = vunpack.c.h.b16 %v3248
    %v3434 = vunpack.c.l.b16 %v3249
    %v3435 = vunpack.c.h.b16 %v3249
    %v3436 = vunpack.c.l.b16 %v3250
    %v3437 = vunpack.c.h.b16 %v3250
    %v3438 = vunpack.c.l.b16 %v3251
    %v3439 = vunpack.c.h.b16 %v3251
    %v3440 = vunpack.c.l.b16 %v3252
    %v3441 = vunpack.c.h.b16 %v3252
    %v3442 = vunpack.c.l.b16 %v3253
    %v3443 = vunpack.c.h.b16 %v3253
    %v3444 = vunpack.c.l.b16 %v3254
    %v3445 = vunpack.c.h.b16 %v3254
    %v3446 = vunpack.c.l.b16 %v3255
    %v3447 = vunpack.c.h.b16 %v3255
    %v3448 = vunpack.c.l.b16 %v3256
    %v3449 = vunpack.c.h.b16 %v3256
    %v3450 = vunpack.c.l.b16 %v3257
    %v3451 = vunpack.c.h.b16 %v3257
    %v3452 = vunpack.c.l.b16 %v3258
    %v3453 = vunpack.c.h.b16 %v3258
    %v3454 = vunpack.c.l.b16 %v3259
    %v3455 = vunpack.c.h.b16 %v3259
    %v3456 = vunpack.c.l.b16 %v3260
    %v3457 = vunpack.c.h.b16 %v3260
    %v3458 = vunpack.c.l.b16 %v3261
    %v3459 = vunpack.c.h.b16 %v3261
    %v3460 = vunpack.c.l.b16 %v3262
    %v3461 = vunpack.c.h.b16 %v3262
    %v3462 = vunpack.c.l.b16 %v3263
    %v3463 = vunpack.c.h.b16 %v3263
    %v3464 = vunpack.c.l.b16 %v3264
    %v3465 = vunpack.c.h.b16 %v3264
    %v3466 = vunpack.c.l.b16 %v3265
    %v3467 = vunpack.c.h.b16 %v3265
    %v3468 = vunpack.c.l.b16 %v3266
    %v3469 = vunpack.c.h.b16 %v3266
    %v3470 = vunpack.c.l.b16 %v3267
    %v3471 = vunpack.c.h.b16 %v3267
    %v3472 = vunpack.c.l.b16 %v3268
    %v3473 = vunpack.c.h.b16 %v3268
    %v3474 = vunpack.c.l.b16 %v3269
    %v3475 = vunpack.c.h.b16 %v3269
    %v3476 = vunpack.c.l.b16 %v3270
    %v3477 = vunpack.c.h.b16 %v3270
    %v3478 = vunpack.c.l.b16 %v3271
    %v3479 = vunpack.c.h.b16 %v3271
    %v3480 = vunpack.c.l.b16 %v3272
    %v3481 = vunpack.c.h.b16 %v3272
    %v3482 = vunpack.c.l.b16 %v3273
    %v3483 = vunpack.c.h.b16 %v3273
    %v3484 = vunpack.c.l.b16 %v3274
    %v3485 = vunpack.c.h.b16 %v3274
    %v3486 = vunpack.c.l.b16 %v3275
    %v3487 = vunpack.c.h.b16 %v3275
    %v3488 = vunpack.c.l.b16 %v3276
    %v3489 = vunpack.c.h.b16 %v3276
    %v3490 = vunpack.c.l.b16 %v3277
    %v3491 = vunpack.c.h.b16 %v3277
    %v3492 = vpack.c.b16 %v3368, %v3364
    %v3493 = vpack.c.b16 %v3369, %v3365
    %v3494 = vpack.c.b16 %v3370, %v3366
    %v3495 = vpack.c.b16 %v3371, %v3367
    %v3496 = vpack.c.b16 %v3376, %v3372
    %v3497 = vpack.c.b16 %v3377, %v3373
    %v3498 = vpack.c.b16 %v3378, %v3374
    %v3499 = vpack.c.b16 %v3379, %v3375
    %v3500 = vpack.c.b16 %v3384, %v3380
    %v3501 = vpack.c.b16 %v3385, %v3381
    %v3502 = vpack.c.b16 %v3386, %v3382
    %v3503 = vpack.c.b16 %v3387, %v3383
    %v3504 = vpack.c.b16 %v3392, %v3388
    %v3505 = vpack.c.b16 %v3393, %v3389
    %v3506 = vpack.c.b16 %v3394, %v3390
    %v3507 = vpack.c.b16 %v3395, %v3391
    %v3508 = vpack.c.b16 %v3400, %v3396
    %v3509 = vpack.c.b16 %v3401, %v3397
    %v3510 = vpack.c.b16 %v3402, %v3398
    %v3511 = vpack.c.b16 %v3403, %v3399
    %v3512 = vpack.c.b16 %v3408, %v3404
    %v3513 = vpack.c.b16 %v3409, %v3405
    %v3514 = vpack.c.b16 %v3410, %v3406
    %v3515 = vpack.c.b16 %v3411, %v3407
    %v3516 = vpack.c.b16 %v3416, %v3412
    %v3517 = vpack.c.b16 %v3417, %v3413
    %v3518 = vpack.c.b16 %v3418, %v3414
    %v3519 = vpack.c.b16 %v3419, %v3415
    %v3520 = vpack.c.b16 %v3424, %v3420
    %v3521 = vpack.c.b16 %v3425, %v3421
    %v3522 = vpack.c.b16 %v3426, %v3422
    %v3523 = vpack.c.b16 %v3427, %v3423
    %v3524 = vpack.c.b16 %v3432, %v3428
    %v3525 = vpack.c.b16 %v3433, %v3429
    %v3526 = vpack.c.b16 %v3434, %v3430
    %v3527 = vpack.c.b16 %v3435, %v3431
    %v3528 = vpack.c.b16 %v3440, %v3436
    %v3529 = vpack.c.b16 %v3441, %v3437
    %v3530 = vpack.c.b16 %v3442, %v3438
    %v3531 = vpack.c.b16 %v3443, %v3439
    %v3532 = vpack.c.b16 %v3448, %v3444
    %v3533 = vpack.c.b16 %v3449, %v3445
    %v3534 = vpack.c.b16 %v3450, %v3446
    %v3535 = vpack.c.b16 %v3451, %v3447
    %v3536 = vpack.c.b16 %v3456, %v3452
    %v3537 = vpack.c.b16 %v3457, %v3453
    %v3538 = vpack.c.b16 %v3458, %v3454
    %v3539 = vpack.c.b16 %v3459, %v3455
    %v3540 = vpack.c.b16 %v3464, %v3460
    %v3541 = vpack.c.b16 %v3465, %v3461
    %v3542 = vpack.c.b16 %v3466, %v3462
    %v3543 = vpack.c.b16 %v3467, %v3463
    %v3544 = vpack.c.b16 %v3472, %v3468
    %v3545 = vpack.c.b16 %v3473, %v3469
    %v3546 = vpack.c.b16 %v3474, %v3470
    %v3547 = vpack.c.b16 %v3475, %v3471
    %v3548 = vpack.c.b16 %v3480, %v3476
    %v3549 = vpack.c.b16 %v3481, %v3477
    %v3550 = vpack.c.b16 %v3482, %v3478
    %v3551 = vpack.c.b16 %v3483, %v3479
    %v3552 = vpack.c.b16 %v3488, %v3484
    %v3553 = vpack.c.b16 %v3489, %v3485
    %v3554 = vpack.c.b16 %v3490, %v3486
    %v3555 = vpack.c.b16 %v3491, %v3487
    %3620 = vmatprep.subr.bf16.mxu0 %v3493
    %3621 = vmatpush1.bf16.msra.mxu0 %v3492
    %3622 = vmatprep.subr.bf16.mxu0 %v3497
    %3623 = vmatpush1.bf16.msra.mxu0 %v3496
    %3624 = vmatprep.subr.bf16.mxu0 %v3501
    %3625 = vmatpush1.bf16.msra.mxu0 %v3500
    %3626 = vmatprep.subr.bf16.mxu0 %v3505
    %3627 = vmatpush1.bf16.msra.mxu0 %v3504
    %3628 = vmatprep.subr.bf16.mxu0 %v3509
    %3629 = vmatpush1.bf16.msra.mxu0 %v3508
    %3630 = vmatprep.subr.bf16.mxu0 %v3513
    %3631 = vmatpush1.bf16.msra.mxu0 %v3512
    %3632 = vmatprep.subr.bf16.mxu0 %v3517
    %3633 = vmatpush1.bf16.msra.mxu0 %v3516
    %3634 = vmatprep.subr.bf16.mxu0 %v3521
    %3635 = vmatpush1.bf16.msra.mxu0 %v3520
    %3636 = vmatprep.subr.bf16.mxu0 %v3525
    %3637 = vmatpush1.bf16.msra.mxu0 %v3524
    %3638 = vmatprep.subr.bf16.mxu0 %v3529
    %3639 = vmatpush1.bf16.msra.mxu0 %v3528
    %3640 = vmatprep.subr.bf16.mxu0 %v3533
    %3641 = vmatpush1.bf16.msra.mxu0 %v3532
    %3642 = vmatprep.subr.bf16.mxu0 %v3537
    %3643 = vmatpush1.bf16.msra.mxu0 %v3536
    %3644 = vmatprep.subr.bf16.mxu0 %v3541
    %3645 = vmatpush1.bf16.msra.mxu0 %v3540
    %3646 = vmatprep.subr.bf16.mxu0 %v3545
    %3647 = vmatpush1.bf16.msra.mxu0 %v3544
    %3648 = vmatprep.subr.bf16.mxu0 %v3549
    %3649 = vmatpush1.bf16.msra.mxu0 %v3548
    %3650 = vmatprep.subr.bf16.mxu0 %v3553
    %3651 = vmatpush1.bf16.msra.mxu0 %v3552
    %3652 = vmatprep.mubr.bf16.mxu0 %v3213
    %3653 = vmatmul.mubr.bf16.gmra.mrb[0].mxu0 %v3212
    %v3654 = vpop.f32.mrb[0].mxu0
    %v3655 = vadd.f32 %v3283, %v3654
    %v3656 = vpop.f32.mrb[0].mxu0
    %v3657 = vadd.f32 %v3287, %v3656
    %v3658 = vpop.f32.mrb[0].mxu0
    %v3659 = vpop.f32.mrb[0].mxu0
    %3660 = vdwg.mxu0
    %3661 = vmatprep.subr.bf16.mxu0 %v3495
    %3662 = vmatpush1.bf16.msra.mxu0 %v3494
    %3663 = vmatprep.subr.bf16.mxu0 %v3499
    %3664 = vmatpush1.bf16.msra.mxu0 %v3498
    %3665 = vmatprep.subr.bf16.mxu0 %v3503
    %3666 = vmatpush1.bf16.msra.mxu0 %v3502
    %3667 = vmatprep.subr.bf16.mxu0 %v3507
    %3668 = vmatpush1.bf16.msra.mxu0 %v3506
    %3669 = vmatprep.subr.bf16.mxu0 %v3511
    %3670 = vmatpush1.bf16.msra.mxu0 %v3510
    %3671 = vmatprep.subr.bf16.mxu0 %v3515
    %3672 = vmatpush1.bf16.msra.mxu0 %v3514
    %3673 = vmatprep.subr.bf16.mxu0 %v3519
    %3674 = vmatpush1.bf16.msra.mxu0 %v3518
    %3675 = vmatprep.subr.bf16.mxu0 %v3523
    %3676 = vmatpush1.bf16.msra.mxu0 %v3522
    %3677 = vmatprep.subr.bf16.mxu0 %v3527
    %3678 = vmatpush1.bf16.msra.mxu0 %v3526
    %3679 = vmatprep.subr.bf16.mxu0 %v3531
    %3680 = vmatpush1.bf16.msra.mxu0 %v3530
    %3681 = vmatprep.subr.bf16.mxu0 %v3535
    %3682 = vmatpush1.bf16.msra.mxu0 %v3534
    %3683 = vmatprep.subr.bf16.mxu0 %v3539
    %3684 = vmatpush1.bf16.msra.mxu0 %v3538
    %3685 = vmatprep.subr.bf16.mxu0 %v3543
    %3686 = vmatpush1.bf16.msra.mxu0 %v3542
    %3687 = vmatprep.subr.bf16.mxu0 %v3547
    %3688 = vmatpush1.bf16.msra.mxu0 %v3546
    %3689 = vmatprep.subr.bf16.mxu0 %v3551
    %3690 = vmatpush1.bf16.msra.mxu0 %v3550
    %3691 = vmatprep.subr.bf16.mxu0 %v3555
    %3692 = vmatpush1.bf16.msra.mxu0 %v3554
    %3693 = vmatprep.mubr.bf16.mxu0 %v3213
    %3694 = vmatmul.mubr.bf16.gmra.mrb[0].mxu0 %v3212
    %v3695 = vpop.f32.mrb[0].mxu0
    %v3696 = vadd.f32 %v3291, %v3695
    %v3697 = vpop.f32.mrb[0].mxu0
    %v3698 = vadd.f32 %v3295, %v3697
    %v3699 = vpop.f32.mrb[0].mxu0
    %v3700 = vpop.f32.mrb[0].mxu0
    %3701 = vdwg.mxu0
    %v3702 = vmul.f32 %v3655, 0.2
    %v3703 = vmul.f32 %v3657, 0.2
    %v3704 = vmul.f32 %v3696, 0.2
    %v3705 = vmul.f32 %v3698, 0.2
    %v3706 = vmax.f32 %v3655, %v3702
    %v3707 = vmax.f32 %v3657, %v3703
    %v3708 = vmax.f32 %v3696, %v3704
    %v3709 = vmax.f32 %v3698, %v3705
    %v3710 = vpack.c.bf16 %v3706, %v3706
    %v3711 = vpack.c.bf16 %v3707, %v3707
    %v3712 = vpack.c.bf16 %v3708, %v3708
    %v3713 = vpack.c.bf16 %v3709, %v3709
    %v3714 = vld [vmem:[#allocation30] sm:$0xff]
    %v3715 = vld [vmem:[#allocation30 + $0x8] sm:$0xff]
    %v3716 = vld [vmem:[#allocation30 + $0x10] sm:$0xff]
    %v3717 = vld [vmem:[#allocation30 + $0x18] sm:$0xff]
    %v3718 = vld [vmem:[#allocation30 + $0x20] sm:$0xff]
    %v3719 = vld [vmem:[#allocation30 + $0x28] sm:$0xff]
    %v3720 = vld [vmem:[#allocation30 + $0x30] sm:$0xff]
    %v3721 = vld [vmem:[#allocation30 + $0x38] sm:$0xff]
    %v3722 = vld [vmem:[#allocation30 + $0x40] sm:$0xff]
    %v3723 = vld [vmem:[#allocation30 + $0x48] sm:$0xff]
    %v3724 = vld [vmem:[#allocation30 + $0x50] sm:$0xff]
    %v3725 = vld [vmem:[#allocation30 + $0x58] sm:$0xff]
    %v3726 = vld [vmem:[#allocation30 + $0x60] sm:$0xff]
    %v3727 = vld [vmem:[#allocation30 + $0x68] sm:$0xff]
    %v3728 = vld [vmem:[#allocation30 + $0x70] sm:$0xff]
    %v3729 = vld [vmem:[#allocation30 + $0x78] sm:$0xff]
    %v3730 = vld [vmem:[#allocation30 + $0x80] sm:$0xff]
    %v3731 = vld [vmem:[#allocation30 + $0x88] sm:$0xff]
    %v3732 = vld [vmem:[#allocation30 + $0x90] sm:$0xff]
    %v3733 = vld [vmem:[#allocation30 + $0x98] sm:$0xff]
    %v3734 = vld [vmem:[#allocation30 + $0xa0] sm:$0xff]
    %v3735 = vld [vmem:[#allocation30 + $0xa8] sm:$0xff]
    %v3736 = vld [vmem:[#allocation30 + $0xb0] sm:$0xff]
    %v3737 = vld [vmem:[#allocation30 + $0xb8] sm:$0xff]
    %v3738 = vld [vmem:[#allocation30 + $0xc0] sm:$0xff]
    %v3739 = vld [vmem:[#allocation30 + $0xc8] sm:$0xff]
    %v3740 = vld [vmem:[#allocation30 + $0xd0] sm:$0xff]
    %v3741 = vld [vmem:[#allocation30 + $0xd8] sm:$0xff]
    %v3742 = vld [vmem:[#allocation30 + $0xe0] sm:$0xff]
    %v3743 = vld [vmem:[#allocation30 + $0xe8] sm:$0xff]
    %v3744 = vld [vmem:[#allocation30 + $0xf0] sm:$0xff]
    %v3745 = vld [vmem:[#allocation30 + $0xf8] sm:$0xff]
    %v3746 = vld [vmem:[#allocation30 + $0x100] sm:$0xff]
    %v3747 = vld [vmem:[#allocation30 + $0x108] sm:$0xff]
    %v3748 = vld [vmem:[#allocation30 + $0x110] sm:$0xff]
    %v3749 = vld [vmem:[#allocation30 + $0x118] sm:$0xff]
    %v3750 = vld [vmem:[#allocation30 + $0x120] sm:$0xff]
    %v3751 = vld [vmem:[#allocation30 + $0x128] sm:$0xff]
    %v3752 = vld [vmem:[#allocation30 + $0x130] sm:$0xff]
    %v3753 = vld [vmem:[#allocation30 + $0x138] sm:$0xff]
    %v3754 = vld [vmem:[#allocation30 + $0x140] sm:$0xff]
    %v3755 = vld [vmem:[#allocation30 + $0x148] sm:$0xff]
    %v3756 = vld [vmem:[#allocation30 + $0x150] sm:$0xff]
    %v3757 = vld [vmem:[#allocation30 + $0x158] sm:$0xff]
    %v3758 = vld [vmem:[#allocation30 + $0x160] sm:$0xff]
    %v3759 = vld [vmem:[#allocation30 + $0x168] sm:$0xff]
    %v3760 = vld [vmem:[#allocation30 + $0x170] sm:$0xff]
    %v3761 = vld [vmem:[#allocation30 + $0x178] sm:$0xff]
    %v3762 = vld [vmem:[#allocation30 + $0x180] sm:$0xff]
    %v3763 = vld [vmem:[#allocation30 + $0x188] sm:$0xff]
    %v3764 = vld [vmem:[#allocation30 + $0x190] sm:$0xff]
    %v3765 = vld [vmem:[#allocation30 + $0x198] sm:$0xff]
    %v3766 = vld [vmem:[#allocation30 + $0x1a0] sm:$0xff]
    %v3767 = vld [vmem:[#allocation30 + $0x1a8] sm:$0xff]
    %v3768 = vld [vmem:[#allocation30 + $0x1b0] sm:$0xff]
    %v3769 = vld [vmem:[#allocation30 + $0x1b8] sm:$0xff]
    %v3770 = vld [vmem:[#allocation30 + $0x1c0] sm:$0xff]
    %v3771 = vld [vmem:[#allocation30 + $0x1c8] sm:$0xff]
    %v3772 = vld [vmem:[#allocation30 + $0x1d0] sm:$0xff]
    %v3773 = vld [vmem:[#allocation30 + $0x1d8] sm:$0xff]
    %v3774 = vld [vmem:[#allocation30 + $0x1e0] sm:$0xff]
    %v3775 = vld [vmem:[#allocation30 + $0x1e8] sm:$0xff]
    %v3776 = vld [vmem:[#allocation30 + $0x1f0] sm:$0xff]
    %v3777 = vld [vmem:[#allocation30 + $0x1f8] sm:$0xff]
    %v3778 = vld [vmem:[#allocation31] sm:$0x3]
    %v3780 = vlaneseq
    %v3781 = vshrl.u32 %v3780, 7
    %v3782 = vsub.s32 0, %v3781
    %v3783 = vrot.slane %v3778, %v3782
    %v3784 = vlaneseq
    %v3785 = vshrl.u32 %v3784, 7
    %v3786 = vsub.s32 1, %v3785
    %v3787 = vrot.slane %v3778, %v3786
    %v3854 = vunpack.c.l.b16 %v3714
    %v3855 = vunpack.c.h.b16 %v3714
    %v3856 = vunpack.c.l.b16 %v3715
    %v3857 = vunpack.c.h.b16 %v3715
    %v3858 = vunpack.c.l.b16 %v3716
    %v3859 = vunpack.c.h.b16 %v3716
    %v3860 = vunpack.c.l.b16 %v3717
    %v3861 = vunpack.c.h.b16 %v3717
    %v3862 = vunpack.c.l.b16 %v3718
    %v3863 = vunpack.c.h.b16 %v3718
    %v3864 = vunpack.c.l.b16 %v3719
    %v3865 = vunpack.c.h.b16 %v3719
    %v3866 = vunpack.c.l.b16 %v3720
    %v3867 = vunpack.c.h.b16 %v3720
    %v3868 = vunpack.c.l.b16 %v3721
    %v3869 = vunpack.c.h.b16 %v3721
    %v3870 = vunpack.c.l.b16 %v3722
    %v3871 = vunpack.c.h.b16 %v3722
    %v3872 = vunpack.c.l.b16 %v3723
    %v3873 = vunpack.c.h.b16 %v3723
    %v3874 = vunpack.c.l.b16 %v3724
    %v3875 = vunpack.c.h.b16 %v3724
    %v3876 = vunpack.c.l.b16 %v3725
    %v3877 = vunpack.c.h.b16 %v3725
    %v3878 = vunpack.c.l.b16 %v3726
    %v3879 = vunpack.c.h.b16 %v3726
    %v3880 = vunpack.c.l.b16 %v3727
    %v3881 = vunpack.c.h.b16 %v3727
    %v3882 = vunpack.c.l.b16 %v3728
    %v3883 = vunpack.c.h.b16 %v3728
    %v3884 = vunpack.c.l.b16 %v3729
    %v3885 = vunpack.c.h.b16 %v3729
    %v3886 = vunpack.c.l.b16 %v3730
    %v3887 = vunpack.c.h.b16 %v3730
    %v3888 = vunpack.c.l.b16 %v3731
    %v3889 = vunpack.c.h.b16 %v3731
    %v3890 = vunpack.c.l.b16 %v3732
    %v3891 = vunpack.c.h.b16 %v3732
    %v3892 = vunpack.c.l.b16 %v3733
    %v3893 = vunpack.c.h.b16 %v3733
    %v3894 = vunpack.c.l.b16 %v3734
    %v3895 = vunpack.c.h.b16 %v3734
    %v3896 = vunpack.c.l.b16 %v3735
    %v3897 = vunpack.c.h.b16 %v3735
    %v3898 = vunpack.c.l.b16 %v3736
    %v3899 = vunpack.c.h.b16 %v3736
    %v3900 = vunpack.c.l.b16 %v3737
    %v3901 = vunpack.c.h.b16 %v3737
    %v3902 = vunpack.c.l.b16 %v3738
    %v3903 = vunpack.c.h.b16 %v3738
    %v3904 = vunpack.c.l.b16 %v3739
    %v3905 = vunpack.c.h.b16 %v3739
    %v3906 = vunpack.c.l.b16 %v3740
    %v3907 = vunpack.c.h.b16 %v3740
    %v3908 = vunpack.c.l.b16 %v3741
    %v3909 = vunpack.c.h.b16 %v3741
    %v3910 = vunpack.c.l.b16 %v3742
    %v3911 = vunpack.c.h.b16 %v3742
    %v3912 = vunpack.c.l.b16 %v3743
    %v3913 = vunpack.c.h.b16 %v3743
    %v3914 = vunpack.c.l.b16 %v3744
    %v3915 = vunpack.c.h.b16 %v3744
    %v3916 = vunpack.c.l.b16 %v3745
    %v3917 = vunpack.c.h.b16 %v3745
    %v3918 = vunpack.c.l.b16 %v3746
    %v3919 = vunpack.c.h.b16 %v3746
    %v3920 = vunpack.c.l.b16 %v3747
    %v3921 = vunpack.c.h.b16 %v3747
    %v3922 = vunpack.c.l.b16 %v3748
    %v3923 = vunpack.c.h.b16 %v3748
    %v3924 = vunpack.c.l.b16 %v3749
    %v3925 = vunpack.c.h.b16 %v3749
    %v3926 = vunpack.c.l.b16 %v3750
    %v3927 = vunpack.c.h.b16 %v3750
    %v3928 = vunpack.c.l.b16 %v3751
    %v3929 = vunpack.c.h.b16 %v3751
    %v3930 = vunpack.c.l.b16 %v3752
    %v3931 = vunpack.c.h.b16 %v3752
    %v3932 = vunpack.c.l.b16 %v3753
    %v3933 = vunpack.c.h.b16 %v3753
    %v3934 = vunpack.c.l.b16 %v3754
    %v3935 = vunpack.c.h.b16 %v3754
    %v3936 = vunpack.c.l.b16 %v3755
    %v3937 = vunpack.c.h.b16 %v3755
    %v3938 = vunpack.c.l.b16 %v3756
    %v3939 = vunpack.c.h.b16 %v3756
    %v3940 = vunpack.c.l.b16 %v3757
    %v3941 = vunpack.c.h.b16 %v3757
    %v3942 = vunpack.c.l.b16 %v3758
    %v3943 = vunpack.c.h.b16 %v3758
    %v3944 = vunpack.c.l.b16 %v3759
    %v3945 = vunpack.c.h.b16 %v3759
    %v3946 = vunpack.c.l.b16 %v3760
    %v3947 = vunpack.c.h.b16 %v3760
    %v3948 = vunpack.c.l.b16 %v3761
    %v3949 = vunpack.c.h.b16 %v3761
    %v3950 = vunpack.c.l.b16 %v3762
    %v3951 = vunpack.c.h.b16 %v3762
    %v3952 = vunpack.c.l.b16 %v3763
    %v3953 = vunpack.c.h.b16 %v3763
    %v3954 = vunpack.c.l.b16 %v3764
    %v3955 = vunpack.c.h.b16 %v3764
    %v3956 = vunpack.c.l.b16 %v3765
    %v3957 = vunpack.c.h.b16 %v3765
    %v3958 = vunpack.c.l.b16 %v3766
    %v3959 = vunpack.c.h.b16 %v3766
    %v3960 = vunpack.c.l.b16 %v3767
    %v3961 = vunpack.c.h.b16 %v3767
    %v3962 = vunpack.c.l.b16 %v3768
    %v3963 = vunpack.c.h.b16 %v3768
    %v3964 = vunpack.c.l.b16 %v3769
    %v3965 = vunpack.c.h.b16 %v3769
    %v3966 = vunpack.c.l.b16 %v3770
    %v3967 = vunpack.c.h.b16 %v3770
    %v3968 = vunpack.c.l.b16 %v3771
    %v3969 = vunpack.c.h.b16 %v3771
    %v3970 = vunpack.c.l.b16 %v3772
    %v3971 = vunpack.c.h.b16 %v3772
    %v3972 = vunpack.c.l.b16 %v3773
    %v3973 = vunpack.c.h.b16 %v3773
    %v3974 = vunpack.c.l.b16 %v3774
    %v3975 = vunpack.c.h.b16 %v3774
    %v3976 = vunpack.c.l.b16 %v3775
    %v3977 = vunpack.c.h.b16 %v3775
    %v3978 = vunpack.c.l.b16 %v3776
    %v3979 = vunpack.c.h.b16 %v3776
    %v3980 = vunpack.c.l.b16 %v3777
    %v3981 = vunpack.c.h.b16 %v3777
    %v3982 = vpack.c.b16 %v3856, %v3854
    %v3983 = vpack.c.b16 %v3857, %v3855
    %v3984 = vpack.c.b16 %v3860, %v3858
    %v3985 = vpack.c.b16 %v3861, %v3859
    %v3986 = vpack.c.b16 %v3864, %v3862
    %v3987 = vpack.c.b16 %v3865, %v3863
    %v3988 = vpack.c.b16 %v3868, %v3866
    %v3989 = vpack.c.b16 %v3869, %v3867
    %v3990 = vpack.c.b16 %v3872, %v3870
    %v3991 = vpack.c.b16 %v3873, %v3871
    %v3992 = vpack.c.b16 %v3876, %v3874
    %v3993 = vpack.c.b16 %v3877, %v3875
    %v3994 = vpack.c.b16 %v3880, %v3878
    %v3995 = vpack.c.b16 %v3881, %v3879
    %v3996 = vpack.c.b16 %v3884, %v3882
    %v3997 = vpack.c.b16 %v3885, %v3883
    %v3998 = vpack.c.b16 %v3888, %v3886
    %v3999 = vpack.c.b16 %v3889, %v3887
    %v4000 = vpack.c.b16 %v3892, %v3890
    %v4001 = vpack.c.b16 %v3893, %v3891
    %v4002 = vpack.c.b16 %v3896, %v3894
    %v4003 = vpack.c.b16 %v3897, %v3895
    %v4004 = vpack.c.b16 %v3900, %v3898
    %v4005 = vpack.c.b16 %v3901, %v3899
    %v4006 = vpack.c.b16 %v3904, %v3902
    %v4007 = vpack.c.b16 %v3905, %v3903
    %v4008 = vpack.c.b16 %v3908, %v3906
    %v4009 = vpack.c.b16 %v3909, %v3907
    %v4010 = vpack.c.b16 %v3912, %v3910
    %v4011 = vpack.c.b16 %v3913, %v3911
    %v4012 = vpack.c.b16 %v3916, %v3914
    %v4013 = vpack.c.b16 %v3917, %v3915
    %v4014 = vpack.c.b16 %v3920, %v3918
    %v4015 = vpack.c.b16 %v3921, %v3919
    %v4016 = vpack.c.b16 %v3924, %v3922
    %v4017 = vpack.c.b16 %v3925, %v3923
    %v4018 = vpack.c.b16 %v3928, %v3926
    %v4019 = vpack.c.b16 %v3929, %v3927
    %v4020 = vpack.c.b16 %v3932, %v3930
    %v4021 = vpack.c.b16 %v3933, %v3931
    %v4022 = vpack.c.b16 %v3936, %v3934
    %v4023 = vpack.c.b16 %v3937, %v3935
    %v4024 = vpack.c.b16 %v3940, %v3938
    %v4025 = vpack.c.b16 %v3941, %v3939
    %v4026 = vpack.c.b16 %v3944, %v3942
    %v4027 = vpack.c.b16 %v3945, %v3943
    %v4028 = vpack.c.b16 %v3948, %v3946
    %v4029 = vpack.c.b16 %v3949, %v3947
    %v4030 = vpack.c.b16 %v3952, %v3950
    %v4031 = vpack.c.b16 %v3953, %v3951
    %v4032 = vpack.c.b16 %v3956, %v3954
    %v4033 = vpack.c.b16 %v3957, %v3955
    %v4034 = vpack.c.b16 %v3960, %v3958
    %v4035 = vpack.c.b16 %v3961, %v3959
    %v4036 = vpack.c.b16 %v3964, %v3962
    %v4037 = vpack.c.b16 %v3965, %v3963
    %v4038 = vpack.c.b16 %v3968, %v3966
    %v4039 = vpack.c.b16 %v3969, %v3967
    %v4040 = vpack.c.b16 %v3972, %v3970
    %v4041 = vpack.c.b16 %v3973, %v3971
    %v4042 = vpack.c.b16 %v3976, %v3974
    %v4043 = vpack.c.b16 %v3977, %v3975
    %v4044 = vpack.c.b16 %v3980, %v3978
    %v4045 = vpack.c.b16 %v3981, %v3979
    %4110 = vmatprep.subr.bf16.mxu0 %v3983
    %4111 = vmatpush1.bf16.msra.mxu0 %v3982
    %4112 = vmatprep.subr.bf16.mxu0 %v3985
    %4113 = vmatpush1.bf16.msra.mxu0 %v3984
    %4114 = vmatprep.subr.bf16.mxu0 %v3987
    %4115 = vmatpush1.bf16.msra.mxu0 %v3986
    %4116 = vmatprep.subr.bf16.mxu0 %v3989
    %4117 = vmatpush1.bf16.msra.mxu0 %v3988
    %4118 = vmatprep.subr.bf16.mxu0 %v3991
    %4119 = vmatpush1.bf16.msra.mxu0 %v3990
    %4120 = vmatprep.subr.bf16.mxu0 %v3993
    %4121 = vmatpush1.bf16.msra.mxu0 %v3992
    %4122 = vmatprep.subr.bf16.mxu0 %v3995
    %4123 = vmatpush1.bf16.msra.mxu0 %v3994
    %4124 = vmatprep.subr.bf16.mxu0 %v3997
    %4125 = vmatpush1.bf16.msra.mxu0 %v3996
    %4126 = vmatprep.subr.bf16.mxu0 %v3999
    %4127 = vmatpush1.bf16.msra.mxu0 %v3998
    %4128 = vmatprep.subr.bf16.mxu0 %v4001
    %4129 = vmatpush1.bf16.msra.mxu0 %v4000
    %4130 = vmatprep.subr.bf16.mxu0 %v4003
    %4131 = vmatpush1.bf16.msra.mxu0 %v4002
    %4132 = vmatprep.subr.bf16.mxu0 %v4005
    %4133 = vmatpush1.bf16.msra.mxu0 %v4004
    %4134 = vmatprep.subr.bf16.mxu0 %v4007
    %4135 = vmatpush1.bf16.msra.mxu0 %v4006
    %4136 = vmatprep.subr.bf16.mxu0 %v4009
    %4137 = vmatpush1.bf16.msra.mxu0 %v4008
    %4138 = vmatprep.subr.bf16.mxu0 %v4011
    %4139 = vmatpush1.bf16.msra.mxu0 %v4010
    %4140 = vmatprep.subr.bf16.mxu0 %v4013
    %4141 = vmatpush1.bf16.msra.mxu0 %v4012
    %4142 = vmatprep.mubr.bf16.mxu0 %v3711
    %4143 = vmatmul.mubr.bf16.gmra.mrb[0].mxu0 %v3710
    %v4144 = vpop.f32.mrb[0].mxu0
    %v4145 = vadd.f32 %v3783, %v4144
    %v4146 = vpop.f32.mrb[0].mxu0
    %v4147 = vadd.f32 %v3787, %v4146
    %v4148 = vpop.f32.mrb[0].mxu0
    %v4149 = vpop.f32.mrb[0].mxu0
    %4150 = vdwg.mxu0
    %4151 = vmatprep.subr.bf16.mxu0 %v4015
    %4152 = vmatpush1.bf16.msra.mxu0 %v4014
    %4153 = vmatprep.subr.bf16.mxu0 %v4017
    %4154 = vmatpush1.bf16.msra.mxu0 %v4016
    %4155 = vmatprep.subr.bf16.mxu0 %v4019
    %4156 = vmatpush1.bf16.msra.mxu0 %v4018
    %4157 = vmatprep.subr.bf16.mxu0 %v4021
    %4158 = vmatpush1.bf16.msra.mxu0 %v4020
    %4159 = vmatprep.subr.bf16.mxu0 %v4023
    %4160 = vmatpush1.bf16.msra.mxu0 %v4022
    %4161 = vmatprep.subr.bf16.mxu0 %v4025
    %4162 = vmatpush1.bf16.msra.mxu0 %v4024
    %4163 = vmatprep.subr.bf16.mxu0 %v4027
    %4164 = vmatpush1.bf16.msra.mxu0 %v4026
    %4165 = vmatprep.subr.bf16.mxu0 %v4029
    %4166 = vmatpush1.bf16.msra.mxu0 %v4028
    %4167 = vmatprep.subr.bf16.mxu0 %v4031
    %4168 = vmatpush1.bf16.msra.mxu0 %v4030
    %4169 = vmatprep.subr.bf16.mxu0 %v4033
    %4170 = vmatpush1.bf16.msra.mxu0 %v4032
    %4171 = vmatprep.subr.bf16.mxu0 %v4035
    %4172 = vmatpush1.bf16.msra.mxu0 %v4034
    %4173 = vmatprep.subr.bf16.mxu0 %v4037
    %4174 = vmatpush1.bf16.msra.mxu0 %v4036
    %4175 = vmatprep.subr.bf16.mxu0 %v4039
    %4176 = vmatpush1.bf16.msra.mxu0 %v4038
    %4177 = vmatprep.subr.bf16.mxu0 %v4041
    %4178 = vmatpush1.bf16.msra.mxu0 %v4040
    %4179 = vmatprep.subr.bf16.mxu0 %v4043
    %4180 = vmatpush1.bf16.msra.mxu0 %v4042
    %4181 = vmatprep.subr.bf16.mxu0 %v4045
    %4182 = vmatpush1.bf16.msra.mxu0 %v4044
    %4183 = vmatprep.mubr.bf16.mxu0 %v3713
    %4184 = vmatmul.mubr.bf16.gmra.mrb[0].mxu0 %v3712
    %v4185 = vpop.f32.mrb[0].mxu0
    %v4186 = vadd.f32 %v4145, %v4185
    %v4187 = vpop.f32.mrb[0].mxu0
    %v4188 = vadd.f32 %v4147, %v4187
    %v4189 = vpop.f32.mrb[0].mxu0
    %v4190 = vpop.f32.mrb[0].mxu0
    %4191 = vdwg.mxu0
    %v4192 = vsub.f32 0.0, %v4186
    %v4193 = vsub.f32 0.0, %v4188
    %v4194 = vmul.f32 %v4192, 1.442695
    %v4195 = vpow.pop %v4194
    %v4196 = vmul.f32 %v4193, 1.442695
    %v4197 = vpow.pop %v4196
    %v4198 = vadd.f32 %v4195, 1.0
    %v4199 = vadd.f32 %v4197, 1.0
    %v4200 = vrcp.pop %v4198
    %v4201 = vrcp.pop %v4199
    %4202 = vst [vmem:[%s67] sm:$0xff] %v4200
    %4203 = vst [vmem:[%s67 + $0x8] sm:$0xff] %v4201
    %v4204 = vld [vmem:[#allocation33] sm:$0xf]
    %v4205 = vld [vmem:[#allocation33 + $0x4] sm:$0xf]
    %v4206 = vld [vmem:[#allocation33 + $0x8] sm:$0xf]
    %v4207 = vld [vmem:[#allocation33 + $0xc] sm:$0xf]
    %v4208 = vld [vmem:[#allocation33 + $0x10] sm:$0xf]
    %v4209 = vld [vmem:[#allocation33 + $0x14] sm:$0xf]
    %v4210 = vld [vmem:[#allocation33 + $0x18] sm:$0xf]
    %v4211 = vld [vmem:[#allocation33 + $0x1c] sm:$0xf]
    %v4212 = vld [vmem:[#allocation33 + $0x20] sm:$0xf]
    %v4213 = vld [vmem:[#allocation33 + $0x24] sm:$0xf]
    %v4214 = vld [vmem:[#allocation33 + $0x28] sm:$0xf]
    %v4215 = vld [vmem:[#allocation33 + $0x2c] sm:$0xf]
    %v4216 = vld [vmem:[#allocation33 + $0x30] sm:$0xf]
    %v4217 = vld [vmem:[#allocation33 + $0x34] sm:$0xf]
    %v4218 = vld [vmem:[#allocation33 + $0x38] sm:$0xf]
    %v4219 = vld [vmem:[#allocation33 + $0x3c] sm:$0xf]
    %v4220 = vld [vmem:[#allocation34] sm:$0x1]
    %v4222 = vlaneseq
    %v4223 = vshrl.u32 %v4222, 7
    %v4224 = vsub.s32 0, %v4223
    %v4225 = vrot.slane %v4220, %v4224
    %v4243 = vunpack.c.l.b16 %v4204
    %v4244 = vunpack.c.l.b16 %v4205
    %v4245 = vunpack.c.l.b16 %v4206
    %v4246 = vunpack.c.l.b16 %v4207
    %v4247 = vunpack.c.l.b16 %v4208
    %v4248 = vunpack.c.l.b16 %v4209
    %v4249 = vunpack.c.l.b16 %v4210
    %v4250 = vunpack.c.l.b16 %v4211
    %v4251 = vunpack.c.l.b16 %v4212
    %v4252 = vunpack.c.l.b16 %v4213
    %v4253 = vunpack.c.l.b16 %v4214
    %v4254 = vunpack.c.l.b16 %v4215
    %v4255 = vunpack.c.l.b16 %v4216
    %v4256 = vunpack.c.l.b16 %v4217
    %v4257 = vunpack.c.l.b16 %v4218
    %v4258 = vunpack.c.l.b16 %v4219
    %v4259 = vpack.c.b16 %v4244, %v4243
    %v4260 = vpack.c.b16 %v4246, %v4245
    %v4261 = vpack.c.b16 %v4248, %v4247
    %v4262 = vpack.c.b16 %v4250, %v4249
    %v4263 = vpack.c.b16 %v4252, %v4251
    %v4264 = vpack.c.b16 %v4254, %v4253
    %v4265 = vpack.c.b16 %v4256, %v4255
    %v4266 = vpack.c.b16 %v4258, %v4257
    %4275 = vmatprep.subr.bf16.mxu0 0
    %4276 = vmatpush1.bf16.msra.mxu0 %v4259
    %4277 = vmatprep.subr.bf16.mxu0 0
    %4278 = vmatpush1.bf16.msra.mxu0 %v4260
    %4279 = vmatprep.subr.bf16.mxu0 0
    %4280 = vmatpush1.bf16.msra.mxu0 %v4261
    %4281 = vmatprep.subr.bf16.mxu0 0
    %4282 = vmatpush1.bf16.msra.mxu0 %v4262
    %4283 = vmatprep.subr.bf16.mxu0 0
    %4284 = vmatpush1.bf16.msra.mxu0 %v4263
    %4285 = vmatprep.subr.bf16.mxu0 0
    %4286 = vmatpush1.bf16.msra.mxu0 %v4264
    %4287 = vmatprep.subr.bf16.mxu0 0
    %4288 = vmatpush1.bf16.msra.mxu0 %v4265
    %4289 = vmatprep.subr.bf16.mxu0 0
    %4290 = vmatpush1.bf16.msra.mxu0 %v4266
    %4291 = vmatprep.subr.bf16.mxu0 0
    %4292 = vmatpush1.bf16.msra.mxu0 0
    %4293 = vmatprep.subr.bf16.mxu0 0
    %4294 = vmatpush1.bf16.msra.mxu0 0
    %4295 = vmatprep.subr.bf16.mxu0 0
    %4296 = vmatpush1.bf16.msra.mxu0 0
    %4297 = vmatprep.subr.bf16.mxu0 0
    %4298 = vmatpush1.bf16.msra.mxu0 0
    %4299 = vmatprep.subr.bf16.mxu0 0
    %4300 = vmatpush1.bf16.msra.mxu0 0
    %4301 = vmatprep.subr.bf16.mxu0 0
    %4302 = vmatpush1.bf16.msra.mxu0 0
    %4303 = vmatprep.subr.bf16.mxu0 0
    %4304 = vmatpush1.bf16.msra.mxu0 0
    %4305 = vmatprep.subr.bf16.mxu0 0
    %4306 = vmatpush1.bf16.msra.mxu0 0
    %4307 = vmatprep.mubr.bf16.mxu0 0
    %4308 = vmatmul.mubr.bf16.gmra.mrb[0].mxu0 %v1599
    %v4309 = vpop.f32.mrb[0].mxu0
    %v4310 = vadd.f32 %v4225, %v4309
    %v4311 = vpop.f32.mrb[0].mxu0
    %v4312 = vpop.f32.mrb[0].mxu0
    %v4313 = vpop.f32.mrb[0].mxu0
    %4314 = vdwg.mxu0
    %v4315 = vmul.f32 %v4310, 0.2
    %v4316 = vmax.f32 %v4310, %v4315
    %v4317 = vpack.c.bf16 %v4316, %v4316
    %v4318 = vld [vmem:[#allocation36] sm:$0xf]
    %v4319 = vld [vmem:[#allocation36 + $0x4] sm:$0xf]
    %v4320 = vld [vmem:[#allocation36 + $0x8] sm:$0xf]
    %v4321 = vld [vmem:[#allocation36 + $0xc] sm:$0xf]
    %v4322 = vld [vmem:[#allocation36 + $0x10] sm:$0xf]
    %v4323 = vld [vmem:[#allocation36 + $0x14] sm:$0xf]
    %v4324 = vld [vmem:[#allocation36 + $0x18] sm:$0xf]
    %v4325 = vld [vmem:[#allocation36 + $0x1c] sm:$0xf]
    %v4326 = vld [vmem:[#allocation36 + $0x20] sm:$0xf]
    %v4327 = vld [vmem:[#allocation36 + $0x24] sm:$0xf]
    %v4328 = vld [vmem:[#allocation36 + $0x28] sm:$0xf]
    %v4329 = vld [vmem:[#allocation36 + $0x2c] sm:$0xf]
    %v4330 = vld [vmem:[#allocation36 + $0x30] sm:$0xf]
    %v4331 = vld [vmem:[#allocation36 + $0x34] sm:$0xf]
    %v4332 = vld [vmem:[#allocation36 + $0x38] sm:$0xf]
    %v4333 = vld [vmem:[#allocation36 + $0x3c] sm:$0xf]
    %v4334 = vld [vmem:[#allocation37] sm:$0x1]
    %v4336 = vlaneseq
    %v4337 = vshrl.u32 %v4336, 7
    %v4338 = vsub.s32 0, %v4337
    %v4339 = vrot.slane %v4334, %v4338
    %v4357 = vunpack.c.l.b16 %v4318
    %v4358 = vunpack.c.l.b16 %v4319
    %v4359 = vunpack.c.l.b16 %v4320
    %v4360 = vunpack.c.l.b16 %v4321
    %v4361 = vunpack.c.l.b16 %v4322
    %v4362 = vunpack.c.l.b16 %v4323
    %v4363 = vunpack.c.l.b16 %v4324
    %v4364 = vunpack.c.l.b16 %v4325
    %v4365 = vunpack.c.l.b16 %v4326
    %v4366 = vunpack.c.l.b16 %v4327
    %v4367 = vunpack.c.l.b16 %v4328
    %v4368 = vunpack.c.l.b16 %v4329
    %v4369 = vunpack.c.l.b16 %v4330
    %v4370 = vunpack.c.l.b16 %v4331
    %v4371 = vunpack.c.l.b16 %v4332
    %v4372 = vunpack.c.l.b16 %v4333
    %v4373 = vpack.c.b16 %v4358, %v4357
    %v4374 = vpack.c.b16 %v4360, %v4359
    %v4375 = vpack.c.b16 %v4362, %v4361
    %v4376 = vpack.c.b16 %v4364, %v4363
    %v4377 = vpack.c.b16 %v4366, %v4365
    %v4378 = vpack.c.b16 %v4368, %v4367
    %v4379 = vpack.c.b16 %v4370, %v4369
    %v4380 = vpack.c.b16 %v4372, %v4371
    %4389 = vmatprep.subr.bf16.mxu0 0
    %4390 = vmatpush1.bf16.msra.mxu0 %v4373
    %4391 = vmatprep.subr.bf16.mxu0 0
    %4392 = vmatpush1.bf16.msra.mxu0 %v4374
    %4393 = vmatprep.subr.bf16.mxu0 0
    %4394 = vmatpush1.bf16.msra.mxu0 %v4375
    %4395 = vmatprep.subr.bf16.mxu0 0
    %4396 = vmatpush1.bf16.msra.mxu0 %v4376
    %4397 = vmatprep.subr.bf16.mxu0 0
    %4398 = vmatpush1.bf16.msra.mxu0 %v4377
    %4399 = vmatprep.subr.bf16.mxu0 0
    %4400 = vmatpush1.bf16.msra.mxu0 %v4378
    %4401 = vmatprep.subr.bf16.mxu0 0
    %4402 = vmatpush1.bf16.msra.mxu0 %v4379
    %4403 = vmatprep.subr.bf16.mxu0 0
    %4404 = vmatpush1.bf16.msra.mxu0 %v4380
    %4405 = vmatprep.subr.bf16.mxu0 0
    %4406 = vmatpush1.bf16.msra.mxu0 0
    %4407 = vmatprep.subr.bf16.mxu0 0
    %4408 = vmatpush1.bf16.msra.mxu0 0
    %4409 = vmatprep.subr.bf16.mxu0 0
    %4410 = vmatpush1.bf16.msra.mxu0 0
    %4411 = vmatprep.subr.bf16.mxu0 0
    %4412 = vmatpush1.bf16.msra.mxu0 0
    %4413 = vmatprep.subr.bf16.mxu0 0
    %4414 = vmatpush1.bf16.msra.mxu0 0
    %4415 = vmatprep.subr.bf16.mxu0 0
    %4416 = vmatpush1.bf16.msra.mxu0 0
    %4417 = vmatprep.subr.bf16.mxu0 0
    %4418 = vmatpush1.bf16.msra.mxu0 0
    %4419 = vmatprep.subr.bf16.mxu0 0
    %4420 = vmatpush1.bf16.msra.mxu0 0
    %4421 = vmatprep.mubr.bf16.mxu0 0
    %4422 = vmatmul.mubr.bf16.gmra.mrb[0].mxu0 %v4317
    %v4423 = vpop.f32.mrb[0].mxu0
    %v4424 = vadd.f32 %v4339, %v4423
    %v4425 = vpop.f32.mrb[0].mxu0
    %v4426 = vpop.f32.mrb[0].mxu0
    %v4427 = vpop.f32.mrb[0].mxu0
    %4428 = vdwg.mxu0
    %v4429 = vsub.f32 0.0, %v4424
    %v4430 = vmul.f32 %v4429, 1.442695
    %v4431 = vpow.pop %v4430
    %v4432 = vadd.f32 %v4431, 1.0
    %v4433 = vrcp.pop %v4432
    %4434 = vst [vmem:[%s69] sm:$0xff] %v4433
    // Predicated region
    $region210: #{teacher_forward.1} parent=1 // pred_check
      _
    $region211: #{teacher_forward.1} parent=1 // pred_check_branch
      %4436 = sbr.rel (0) target = $region213
    $region212: #{teacher_forward.1} parent=1 // pred_region
      _
    $region213: #{teacher_forward.1} parent=1 // pred_fallthru
      _
    // Predicated region
    $region214: #{teacher_forward.1} parent=1 // pred_check
      _
    $region215: #{teacher_forward.1} parent=1 // pred_check_branch
      %4438 = sbr.rel (0) target = $region217
    $region216: #{teacher_forward.1} parent=1 // pred_region
      _
    $region217: #{teacher_forward.1} parent=1 // pred_fallthru
      _
    // Predicated region
    $region218: #{teacher_forward.1} parent=1 // pred_check
      _
    $region219: #{teacher_forward.1} parent=1 // pred_check_branch
      %4440 = sbr.rel (0) target = $region221
    $region220: #{teacher_forward.1} parent=1 // pred_region
      _
    $region221: #{teacher_forward.1} parent=1 // pred_fallthru
      _
    // Predicated region
    $region222: #{teacher_forward.1} parent=1 // pred_check
      _
    $region223: #{teacher_forward.1} parent=1 // pred_check_branch
      %4442 = sbr.rel (0) target = $region225
    $region224: #{teacher_forward.1} parent=1 // pred_region
      _
    $region225: #{teacher_forward.1} parent=1 // pred_fallthru
      _
    // Predicated region
    $region226: #{teacher_forward.1} parent=1 // pred_check
      _
    $region227: #{teacher_forward.1} parent=1 // pred_check_branch
      %4444 = sbr.rel (0) target = $region229
    $region228: #{teacher_forward.1} parent=1 // pred_region
      _
    $region229: #{teacher_forward.1} parent=1 // pred_fallthru
      _
    // Predicated region
    $region230: #{teacher_forward.1} parent=1 // pred_check
      _
    $region231: #{teacher_forward.1} parent=1 // pred_check_branch
      %4446 = sbr.rel (0) target = $region233
    $region232: #{teacher_forward.1} parent=1 // pred_region
      _
    $region233: #{teacher_forward.1} parent=1 // pred_fallthru
      _
    // Predicated region
    $region234: #{teacher_forward.1} parent=1 // pred_check
      _
    $region235: #{teacher_forward.1} parent=1 // pred_check_branch
      %4448 = sbr.rel (0) target = $region237
    $region236: #{teacher_forward.1} parent=1 // pred_region
      _
    $region237: #{teacher_forward.1} parent=1 // pred_fallthru
      _
    // Predicated region
    $region238: #{teacher_forward.1} parent=1 // pred_check
      _
    $region239: #{teacher_forward.1} parent=1 // pred_check_branch
      %4450 = sbr.rel (0) target = $region241
    $region240: #{teacher_forward.1} parent=1 // pred_region
      _
    $region241: #{teacher_forward.1} parent=1 // pred_fallthru
      _
    // Predicated region
    $region242: #{teacher_forward.1} parent=1 // pred_check
      _
    $region243: #{teacher_forward.1} parent=1 // pred_check_branch
      %4452 = sbr.rel (0) target = $region245
    $region244: #{teacher_forward.1} parent=1 // pred_region
      _
    $region245: #{teacher_forward.1} parent=1 // pred_fallthru
      _
    // Predicated region
    $region246: #{teacher_forward.1} parent=1 // pred_check
      _
    $region247: #{teacher_forward.1} parent=1 // pred_check_branch
      %4454 = sbr.rel (0) target = $region249
    $region248: #{teacher_forward.1} parent=1 // pred_region
      _
    $region249: #{teacher_forward.1} parent=1 // pred_fallthru
      _
    // Predicated region
    $region250: #{teacher_forward.1} parent=1 // pred_check
      _
    $region251: #{teacher_forward.1} parent=1 // pred_check_branch
      %4456 = sbr.rel (0) target = $region253
    $region252: #{teacher_forward.1} parent=1 // pred_region
      _
    $region253: #{teacher_forward.1} parent=1 // pred_fallthru
      _
    // Predicated region
    $region254: #{teacher_forward.1} parent=1 // pred_check
      _
    $region255: #{teacher_forward.1} parent=1 // pred_check_branch
      %4458 = sbr.rel (0) target = $region257
    $region256: #{teacher_forward.1} parent=1 // pred_region
      _
    $region257: #{teacher_forward.1} parent=1 // pred_fallthru
      _
    // Predicated region
    $region258: #{teacher_forward.1} parent=1 // pred_check
      _
    $region259: #{teacher_forward.1} parent=1 // pred_check_branch
      %4460 = sbr.rel (0) target = $region261
    $region260: #{teacher_forward.1} parent=1 // pred_region
      _
    $region261: #{teacher_forward.1} parent=1 // pred_fallthru
      _
    // Predicated region
    $region262: #{teacher_forward.1} parent=1 // pred_check
      _
    $region263: #{teacher_forward.1} parent=1 // pred_check_branch
      %4462 = sbr.rel (0) target = $region265
    $region264: #{teacher_forward.1} parent=1 // pred_region
      _
    $region265: #{teacher_forward.1} parent=1 // pred_fallthru
      _
    %4463 = vsyncpa [#allocation3], 1
    %4464 = vsyncpa [#allocation5], 1
    %4465 = vsyncpa [#allocation8], 1
    %4466 = vsyncpa [#allocation11], 1
    %4467 = vsyncpa [#allocation14], 1
    %4468 = vsyncpa [#allocation17], 1
    %4469 = vsyncpa [#allocation20], 1
    %4470 = vsyncpa [#allocation23], 1
    %4471 = vsyncpa [#allocation26], 1
    %4472 = vsyncpa [#allocation29], 1
    %4473 = vsyncpa [#allocation32], 1
    %4474 = vsyncpa [#allocation35], 1
    %4475 = vsyncpa [#allocation38], 1

</llo_original>
